<compile_context>
chip_gen: v7x
topology: tpu7x:2x2x1
jax: 0.10.0
libtpu: 0.0.40
codegen_flags: <defaults>
</compile_context>

<pallas_src>
import jax
import jax.numpy as jnp
from jax import lax
from jax.experimental import pallas as pl


# ----------------------------------------------------------------------------
# Hyper-parameters (small but consistent with the PyTorch module defaults)
# ----------------------------------------------------------------------------
HIDDEN_DIM = 64                 # hd (module default)
INTD = HIDDEN_DIM // 3          # 21
N_LAYERS = 2
N_TESTS, N_QUESTIONS, N_TAGS = 20, 30, 10
LN_EPS = 1e-5                   # torch.nn.LayerNorm default


def _layer_norm(x, gamma, beta, eps):
    mean = jnp.mean(x, axis=-1, keepdims=True)
    var = jnp.mean((x - mean) ** 2, axis=-1, keepdims=True)
    return (x - mean) * lax.rsqrt(var + eps) * gamma + beta


# ----------------------------------------------------------------------------
# Single fused kernel: ModelBase features -> 2-layer GRU -> fc head
#   embed_ref / cont_ref are time-major flattened tokens: row n = t*B + b
# ----------------------------------------------------------------------------
def gru_dkt_kernel(embed_ref, cont_ref,
                   w_comb_ref, b_comb_ref,
                   w_cont_ref, b_cont_ref, g_cont_ref, be_cont_ref,
                   w_cat_a_ref, w_cat_b_ref, b_cat_ref, g_cat_ref, be_cat_ref,
                   wih0_ref, whh0_ref, bih0_ref, bhh0_ref,
                   wih1_ref, whh1_ref, bih1_ref, bhh1_ref,
                   wfc_ref, bfc_ref,
                   out_ref):
    batch, seq_len = out_ref.shape
    hidden = w_comb_ref.shape[1]

    # ---- ModelBase feature pipeline (all B*S tokens at once) ----------------
    embed = embed_ref[...]                                            # (S*B, 4*intd)
    comb = jnp.dot(embed, w_comb_ref[...],
                   preferred_element_type=jnp.float32) + b_comb_ref[...]     # (S*B, H)
    cont = jnp.dot(cont_ref[...], w_cont_ref[...],
                   preferred_element_type=jnp.float32) + b_cont_ref[...]     # (S*B, intd)
    cont = _layer_norm(cont, g_cont_ref[...], be_cont_ref[...], LN_EPS)

    # concat = ReLU -> Linear(intd+hd, hd) -> LayerNorm(hd)
    # cat([comb, cont]) @ W == relu(comb) @ W_a + relu(cont) @ W_b  (W split in glue)
    comb_r = jnp.maximum(comb, 0.0)
    cont_r = jnp.maximum(cont, 0.0)
    x = (jnp.dot(comb_r, w_cat_a_ref[...], preferred_element_type=jnp.float32)
         + jnp.dot(cont_r, w_cat_b_ref[...], preferred_element_type=jnp.float32)
         + b_cat_ref[...])
    x = _layer_norm(x, g_cat_ref[...], be_cat_ref[...], LN_EPS)       # (S*B, H)

    # ---- GRU layer (PyTorch gate order r, z, n) ------------------------------
    def gru_layer(xg, whh, bhh):
        # xg: (S*B, 3H) hoisted, fused input-gate pre-activations (time-major).
        h = jnp.zeros((batch, hidden), jnp.float32)
        hs = []
        for t in range(seq_len):                       # static, fully unrolled
            xg_t = xg[t * batch:(t + 1) * batch, :]    # (B, 3H) contiguous rows
            hg = jnp.dot(h, whh, preferred_element_type=jnp.float32) + bhh
            r = jax.nn.sigmoid(xg_t[:, :hidden] + hg[:, :hidden])
            z = jax.nn.sigmoid(xg_t[:, hidden:2 * hidden] + hg[:, hidden:2 * hidden])
            n = jnp.tanh(xg_t[:, 2 * hidden:] + r * hg[:, 2 * hidden:])
            h = (1.0 - z) * n + z * h
            hs.append(h)
        return hs

    # layer 0: input projection over the whole sequence in one matmul
    xg0 = jnp.dot(x, wih0_ref[...], preferred_element_type=jnp.float32) + bih0_ref[...]
    hs0 = gru_layer(xg0, whh0_ref[...], bhh0_ref[...])

    # layer 1: hoisted input projection over all of layer-0's hidden states
    h0_all = jnp.concatenate(hs0, axis=0)                              # (S*B, H)
    xg1 = jnp.dot(h0_all, wih1_ref[...], preferred_element_type=jnp.float32) + bih1_ref[...]
    hs1 = gru_layer(xg1, whh1_ref[...], bhh1_ref[...])

    # ---- fc head, emitted lane-dense as (B, S) -------------------------------
    w_fc = wfc_ref[...]                                                # (H, 1)
    b_fc = bfc_ref[...]                                                # (1, 1)
    cols = [jnp.dot(h_t, w_fc, preferred_element_type=jnp.float32) + b_fc
            for h_t in hs1]                                            # each (B, 1)
    out_ref[...] = jnp.concatenate(cols, axis=1).astype(out_ref.dtype)  # (B, S)


# ----------------------------------------------------------------------------
# Parameter init (deterministic, synthetic). Weights stored as (in, out);
# GRU gate weights fused column-wise as [r | z | n].
# ----------------------------------------------------------------------------
def init_params(key):
    keys = iter(jax.random.split(key, 40))

    def nrm(shape, scale=0.02):
        return jax.random.normal(next(keys), shape, jnp.float32) * scale

    p = {}
    p["emb_interaction"] = nrm((3, INTD), 0.1)
    p["emb_test"] = nrm((N_TESTS + 1, INTD), 0.1)
    p["emb_question"] = nrm((N_QUESTIONS + 1, INTD), 0.1)
    p["emb_tag"] = nrm((N_TAGS + 1, INTD), 0.1)

    p["w_comb"] = nrm((4 * INTD, HIDDEN_DIM))
    p["b_comb"] = nrm((1, HIDDEN_DIM))
    p["w_cont"] = nrm((2, INTD))
    p["b_cont"] = nrm((1, INTD))
    p["g_cont"] = jnp.ones((1, INTD), jnp.float32)
    p["be_cont"] = jnp.zeros((1, INTD), jnp.float32)
    # concat Linear(hd + intd, hd), input order [comb (hd) | cont (intd)]
    w_cat = nrm((HIDDEN_DIM + INTD, HIDDEN_DIM))
    p["w_cat_a"] = w_cat[:HIDDEN_DIM]
    p["w_cat_b"] = w_cat[HIDDEN_DIM:]
    p["b_cat"] = nrm((1, HIDDEN_DIM))
    p["g_cat"] = jnp.ones((1, HIDDEN_DIM), jnp.float32)
    p["be_cat"] = jnp.zeros((1, HIDDEN_DIM), jnp.float32)

    p["gru"] = []
    for _ in range(N_LAYERS):
        p["gru"].append({
            "wih": nrm((HIDDEN_DIM, 3 * HIDDEN_DIM), 0.05),   # [r | z | n]
            "whh": nrm((HIDDEN_DIM, 3 * HIDDEN_DIM), 0.05),
            "bih": nrm((1, 3 * HIDDEN_DIM), 0.05),
            "bhh": nrm((1, 3 * HIDDEN_DIM), 0.05),            # kept separate: b_hn
        })                                                    # lives inside r * (.)

    p["wfc"] = nrm((HIDDEN_DIM, 1))
    p["bfc"] = nrm((1, 1))
    return p


# ----------------------------------------------------------------------------
# Forward pass: embedding gathers in XLA glue, everything else in one kernel.
# ----------------------------------------------------------------------------
def gru_forward(p, test, question, tag, elapsed, average_user_correct,
                correct, mask, interaction):
    # `correct` and `mask` are unused by the GRU forward (as in the PyTorch module).
    batch, seq_len = interaction.shape
    tm = lambda a: jnp.transpose(a, (1, 0))                   # (B,S) -> (S,B)

    emb_i = jnp.take(p["emb_interaction"], tm(interaction), axis=0)
    emb_t = jnp.take(p["emb_test"], tm(test), axis=0)
    emb_q = jnp.take(p["emb_question"], tm(question), axis=0)
    emb_g = jnp.take(p["emb_tag"], tm(tag), axis=0)
    embed = jnp.concatenate([emb_i, emb_t, emb_q, emb_g], axis=-1)    # (S, B, 4*intd)
    cont = jnp.stack([tm(elapsed).astype(jnp.float32),
                      tm(average_user_correct).astype(jnp.float32)], axis=-1)  # (S, B, 2)

    logits = pl.pallas_call(
        gru_dkt_kernel,
        out_shape=jax.ShapeDtypeStruct((batch, seq_len), jnp.float32),
    )(embed.reshape(seq_len * batch, 4 * INTD),
      cont.reshape(seq_len * batch, 2),
      p["w_comb"], p["b_comb"],
      p["w_cont"], p["b_cont"], p["g_cont"], p["be_cont"],
      p["w_cat_a"], p["w_cat_b"], p["b_cat"], p["g_cat"], p["be_cat"],
      p["gru"][0]["wih"], p["gru"][0]["whh"], p["gru"][0]["bih"], p["gru"][0]["bhh"],
      p["gru"][1]["wih"], p["gru"][1]["whh"], p["gru"][1]["bih"], p["gru"][1]["bhh"],
      p["wfc"], p["bfc"])
    return logits                                                     # (B, S)


# ----------------------------------------------------------------------------
# Pure-JAX reference (batch-major, lax.scan) for a correctness cross-check.
# ----------------------------------------------------------------------------
def _mm(a, b):
    return jnp.matmul(a, b, precision=lax.Precision.HIGHEST)


def reference_forward(p, test, question, tag, elapsed, average_user_correct,
                      correct, mask, interaction):
    emb = jnp.concatenate([
        jnp.take(p["emb_interaction"], interaction, axis=0),
        jnp.take(p["emb_test"], test, axis=0),
        jnp.take(p["emb_question"], question, axis=0),
        jnp.take(p["emb_tag"], tag, axis=0)], axis=-1)
    comb = _mm(emb, p["w_comb"]) + p["b_comb"]
    cont_in = jnp.stack([elapsed.astype(jnp.float32),
                         average_user_correct.astype(jnp.float32)], axis=-1)
    cont = _mm(cont_in, p["w_cont"]) + p["b_cont"]
    cont = _layer_norm(cont, p["g_cont"], p["be_cont"], LN_EPS)
    x = (_mm(jnp.maximum(comb, 0.0), p["w_cat_a"])
         + _mm(jnp.maximum(cont, 0.0), p["w_cat_b"]) + p["b_cat"])
    x = _layer_norm(x, p["g_cat"], p["be_cat"], LN_EPS)               # (B, S, H)

    def run_layer(xs, lp):
        hd = xs.shape[-1]

        def step(h, x_t):
            xg = _mm(x_t, lp["wih"]) + lp["bih"]
            hg = _mm(h, lp["whh"]) + lp["bhh"]
            r = jax.nn.sigmoid(xg[:, :hd] + hg[:, :hd])
            z = jax.nn.sigmoid(xg[:, hd:2 * hd] + hg[:, hd:2 * hd])
            n = jnp.tanh(xg[:, 2 * hd:] + r * hg[:, 2 * hd:])
            h_new = (1.0 - z) * n + z * h
            return h_new, h_new

        h0 = jnp.zeros((xs.shape[0], hd), jnp.float32)
        _, ys = lax.scan(step, h0, jnp.transpose(xs, (1, 0, 2)))
        return jnp.transpose(ys, (1, 0, 2))

    out = x
    for lp in p["gru"]:
        out = run_layer(out, lp)
    return (_mm(out, p["wfc"]) + p["bfc"])[..., 0]                    # (B, S)


# ----------------------------------------------------------------------------
if __name__ == "__main__":
    key = jax.random.PRNGKey(0)
    k_param, k1, k2, k3, k4, k5, k6, k7 = jax.random.split(key, 8)

    B, S = 2, 8
    params = init_params(k_param)

    test = jax.random.randint(k1, (B, S), 0, N_TESTS + 1, dtype=jnp.int32)
    question = jax.random.randint(k2, (B, S), 0, N_QUESTIONS + 1, dtype=jnp.int32)
    tag = jax.random.randint(k3, (B, S), 0, N_TAGS + 1, dtype=jnp.int32)
    elapsed = jax.random.uniform(k4, (B, S), jnp.float32) * 100.0
    average_user_correct = jax.random.uniform(k5, (B, S), jnp.float32)
    correct = jax.random.randint(k6, (B, S), 0, 2, dtype=jnp.int32)   # unused in forward
    interaction = jax.random.randint(k7, (B, S), 0, 3, dtype=jnp.int32)
    mask = (jnp.arange(S)[None, :] < jnp.array([S, S - 3])[:, None]).astype(jnp.float32)

    out = gru_forward(params, test, question, tag, elapsed,
                      average_user_correct, correct, mask, interaction)
    out = jax.block_until_ready(out)

    assert out.shape == (B, S), out.shape
    assert bool(jnp.all(jnp.isfinite(out)))

    ref = reference_forward(params, test, question, tag, elapsed,
                            average_user_correct, correct, mask, interaction)
    ref = jax.block_until_ready(ref)
    assert bool(jnp.allclose(out, ref, atol=5e-3, rtol=5e-2)), \
        (jnp.max(jnp.abs(out - ref)))

    print("KERNEL_OK")
</pallas_src>

<mosaic_0001>
module attributes {stable_mosaic.version = 11 : i64} {
  func.func @gru_dkt_kernel(%arg0: memref<16x84xf32, #tpu.memory_space<vmem>>, %arg1: memref<16x2xf32, #tpu.memory_space<vmem>>, %arg2: memref<84x64xf32, #tpu.memory_space<vmem>>, %arg3: memref<1x64xf32, #tpu.memory_space<vmem>>, %arg4: memref<2x21xf32, #tpu.memory_space<vmem>>, %arg5: memref<1x21xf32, #tpu.memory_space<vmem>>, %arg6: memref<1x21xf32, #tpu.memory_space<vmem>>, %arg7: memref<1x21xf32, #tpu.memory_space<vmem>>, %arg8: memref<64x64xf32, #tpu.memory_space<vmem>>, %arg9: memref<21x64xf32, #tpu.memory_space<vmem>>, %arg10: memref<1x64xf32, #tpu.memory_space<vmem>>, %arg11: memref<1x64xf32, #tpu.memory_space<vmem>>, %arg12: memref<1x64xf32, #tpu.memory_space<vmem>>, %arg13: memref<64x192xf32, #tpu.memory_space<vmem>>, %arg14: memref<64x192xf32, #tpu.memory_space<vmem>>, %arg15: memref<1x192xf32, #tpu.memory_space<vmem>>, %arg16: memref<1x192xf32, #tpu.memory_space<vmem>>, %arg17: memref<64x192xf32, #tpu.memory_space<vmem>>, %arg18: memref<64x192xf32, #tpu.memory_space<vmem>>, %arg19: memref<1x192xf32, #tpu.memory_space<vmem>>, %arg20: memref<1x192xf32, #tpu.memory_space<vmem>>, %arg21: memref<64x1xf32, #tpu.memory_space<vmem>>, %arg22: memref<1x1xf32, #tpu.memory_space<vmem>>, %arg23: memref<2x8xf32, #tpu.memory_space<vmem>>) attributes {dimension_semantics = [], scalar_prefetch = 0 : i64, scratch_operands = 0 : i64, tpu.core_type = #tpu.core_type<tc>} {
    %c0 = arith.constant 0 : index
    %c0_0 = arith.constant 0 : index
    %0 = vector.load %arg0[%c0, %c0_0] : memref<16x84xf32, #tpu.memory_space<vmem>>, vector<16x84xf32>
    %c0_1 = arith.constant 0 : index
    %c0_2 = arith.constant 0 : index
    %1 = vector.load %arg2[%c0_1, %c0_2] : memref<84x64xf32, #tpu.memory_space<vmem>>, vector<84x64xf32>
    %cst = arith.constant dense<0.000000e+00> : vector<16x64xf32>
    %2 = tpu.matmul %0, %1, %cst {dimension_numbers = #tpu.dot_dimension_numbers<[1], [0], [0], [1], [0, 0, 1, 1], [], []>} : vector<16x84xf32>, vector<84x64xf32>, vector<16x64xf32> -> vector<16x64xf32>
    %c0_3 = arith.constant 0 : index
    %c0_4 = arith.constant 0 : index
    %3 = vector.load %arg3[%c0_3, %c0_4] : memref<1x64xf32, #tpu.memory_space<vmem>>, vector<1x64xf32>
    %4 = vector.broadcast %3 : vector<1x64xf32> to vector<16x64xf32>
    %5 = arith.addf %2, %4 : vector<16x64xf32>
    %c0_5 = arith.constant 0 : index
    %c0_6 = arith.constant 0 : index
    %6 = vector.load %arg1[%c0_5, %c0_6] : memref<16x2xf32, #tpu.memory_space<vmem>>, vector<16x2xf32>
    %c0_7 = arith.constant 0 : index
    %c0_8 = arith.constant 0 : index
    %7 = vector.load %arg4[%c0_7, %c0_8] : memref<2x21xf32, #tpu.memory_space<vmem>>, vector<2x21xf32>
    %cst_9 = arith.constant dense<0.000000e+00> : vector<16x21xf32>
    %8 = tpu.matmul %6, %7, %cst_9 {dimension_numbers = #tpu.dot_dimension_numbers<[1], [0], [0], [1], [0, 0, 1, 1], [], []>} : vector<16x2xf32>, vector<2x21xf32>, vector<16x21xf32> -> vector<16x21xf32>
    %c0_10 = arith.constant 0 : index
    %c0_11 = arith.constant 0 : index
    %9 = vector.load %arg5[%c0_10, %c0_11] : memref<1x21xf32, #tpu.memory_space<vmem>>, vector<1x21xf32>
    %10 = vector.broadcast %9 : vector<1x21xf32> to vector<16x21xf32>
    %11 = arith.addf %8, %10 : vector<16x21xf32>
    %c0_12 = arith.constant 0 : index
    %c0_13 = arith.constant 0 : index
    %12 = vector.load %arg6[%c0_12, %c0_13] : memref<1x21xf32, #tpu.memory_space<vmem>>, vector<1x21xf32>
    %c0_14 = arith.constant 0 : index
    %c0_15 = arith.constant 0 : index
    %13 = vector.load %arg7[%c0_14, %c0_15] : memref<1x21xf32, #tpu.memory_space<vmem>>, vector<1x21xf32>
    %cst_16 = arith.constant dense<0.000000e+00> : vector<16xf32>
    %14 = vector.multi_reduction <add>, %11, %cst_16 [1] : vector<16x21xf32> to vector<16xf32>
    %15 = vector.shape_cast %14 : vector<16xf32> to vector<16x1xf32>
    %cst_17 = arith.constant 2.100000e+01 : f32
    %16 = vector.broadcast %cst_17 : f32 to vector<16x1xf32>
    %17 = arith.divf %15, %16 : vector<16x1xf32>
    %18 = vector.broadcast %17 : vector<16x1xf32> to vector<16x21xf32>
    %19 = arith.subf %11, %18 : vector<16x21xf32>
    %20 = arith.mulf %19, %19 : vector<16x21xf32>
    %cst_18 = arith.constant dense<0.000000e+00> : vector<16xf32>
    %21 = vector.multi_reduction <add>, %20, %cst_18 [1] : vector<16x21xf32> to vector<16xf32>
    %22 = vector.shape_cast %21 : vector<16xf32> to vector<16x1xf32>
    %cst_19 = arith.constant 2.100000e+01 : f32
    %23 = vector.broadcast %cst_19 : f32 to vector<16x1xf32>
    %24 = arith.divf %22, %23 : vector<16x1xf32>
    %25 = vector.broadcast %17 : vector<16x1xf32> to vector<16x21xf32>
    %26 = arith.subf %11, %25 : vector<16x21xf32>
    %cst_20 = arith.constant 9.99999974E-6 : f32
    %27 = vector.broadcast %cst_20 : f32 to vector<16x1xf32>
    %28 = arith.addf %24, %27 : vector<16x1xf32>
    %29 = math.rsqrt %28 : vector<16x1xf32>
    %30 = vector.broadcast %29 : vector<16x1xf32> to vector<16x21xf32>
    %31 = arith.mulf %26, %30 : vector<16x21xf32>
    %32 = vector.broadcast %12 : vector<1x21xf32> to vector<16x21xf32>
    %33 = arith.mulf %31, %32 : vector<16x21xf32>
    %34 = vector.broadcast %13 : vector<1x21xf32> to vector<16x21xf32>
    %35 = arith.addf %33, %34 : vector<16x21xf32>
    %cst_21 = arith.constant 0.000000e+00 : f32
    %36 = vector.broadcast %cst_21 : f32 to vector<16x64xf32>
    %37 = arith.maximumf %5, %36 : vector<16x64xf32>
    %cst_22 = arith.constant 0.000000e+00 : f32
    %38 = vector.broadcast %cst_22 : f32 to vector<16x21xf32>
    %39 = arith.maximumf %35, %38 : vector<16x21xf32>
    %c0_23 = arith.constant 0 : index
    %c0_24 = arith.constant 0 : index
    %40 = vector.load %arg8[%c0_23, %c0_24] : memref<64x64xf32, #tpu.memory_space<vmem>>, vector<64x64xf32>
    %cst_25 = arith.constant dense<0.000000e+00> : vector<16x64xf32>
    %41 = tpu.matmul %37, %40, %cst_25 {dimension_numbers = #tpu.dot_dimension_numbers<[1], [0], [0], [1], [0, 0, 1, 1], [], []>} : vector<16x64xf32>, vector<64x64xf32>, vector<16x64xf32> -> vector<16x64xf32>
    %c0_26 = arith.constant 0 : index
    %c0_27 = arith.constant 0 : index
    %42 = vector.load %arg9[%c0_26, %c0_27] : memref<21x64xf32, #tpu.memory_space<vmem>>, vector<21x64xf32>
    %cst_28 = arith.constant dense<0.000000e+00> : vector<16x64xf32>
    %43 = tpu.matmul %39, %42, %cst_28 {dimension_numbers = #tpu.dot_dimension_numbers<[1], [0], [0], [1], [0, 0, 1, 1], [], []>} : vector<16x21xf32>, vector<21x64xf32>, vector<16x64xf32> -> vector<16x64xf32>
    %44 = arith.addf %41, %43 : vector<16x64xf32>
    %c0_29 = arith.constant 0 : index
    %c0_30 = arith.constant 0 : index
    %45 = vector.load %arg10[%c0_29, %c0_30] : memref<1x64xf32, #tpu.memory_space<vmem>>, vector<1x64xf32>
    %46 = vector.broadcast %45 : vector<1x64xf32> to vector<16x64xf32>
    %47 = arith.addf %44, %46 : vector<16x64xf32>
    %c0_31 = arith.constant 0 : index
    %c0_32 = arith.constant 0 : index
    %48 = vector.load %arg11[%c0_31, %c0_32] : memref<1x64xf32, #tpu.memory_space<vmem>>, vector<1x64xf32>
    %c0_33 = arith.constant 0 : index
    %c0_34 = arith.constant 0 : index
    %49 = vector.load %arg12[%c0_33, %c0_34] : memref<1x64xf32, #tpu.memory_space<vmem>>, vector<1x64xf32>
    %cst_35 = arith.constant dense<0.000000e+00> : vector<16xf32>
    %50 = vector.multi_reduction <add>, %47, %cst_35 [1] : vector<16x64xf32> to vector<16xf32>
    %51 = vector.shape_cast %50 : vector<16xf32> to vector<16x1xf32>
    %cst_36 = arith.constant 6.400000e+01 : f32
    %52 = vector.broadcast %cst_36 : f32 to vector<16x1xf32>
    %53 = arith.divf %51, %52 : vector<16x1xf32>
    %54 = vector.broadcast %53 : vector<16x1xf32> to vector<16x64xf32>
    %55 = arith.subf %47, %54 : vector<16x64xf32>
    %56 = arith.mulf %55, %55 : vector<16x64xf32>
    %cst_37 = arith.constant dense<0.000000e+00> : vector<16xf32>
    %57 = vector.multi_reduction <add>, %56, %cst_37 [1] : vector<16x64xf32> to vector<16xf32>
    %58 = vector.shape_cast %57 : vector<16xf32> to vector<16x1xf32>
    %cst_38 = arith.constant 6.400000e+01 : f32
    %59 = vector.broadcast %cst_38 : f32 to vector<16x1xf32>
    %60 = arith.divf %58, %59 : vector<16x1xf32>
    %61 = vector.broadcast %53 : vector<16x1xf32> to vector<16x64xf32>
    %62 = arith.subf %47, %61 : vector<16x64xf32>
    %cst_39 = arith.constant 9.99999974E-6 : f32
    %63 = vector.broadcast %cst_39 : f32 to vector<16x1xf32>
    %64 = arith.addf %60, %63 : vector<16x1xf32>
    %65 = math.rsqrt %64 : vector<16x1xf32>
    %66 = vector.broadcast %65 : vector<16x1xf32> to vector<16x64xf32>
    %67 = arith.mulf %62, %66 : vector<16x64xf32>
    %68 = vector.broadcast %48 : vector<1x64xf32> to vector<16x64xf32>
    %69 = arith.mulf %67, %68 : vector<16x64xf32>
    %70 = vector.broadcast %49 : vector<1x64xf32> to vector<16x64xf32>
    %71 = arith.addf %69, %70 : vector<16x64xf32>
    %c0_40 = arith.constant 0 : index
    %c0_41 = arith.constant 0 : index
    %72 = vector.load %arg13[%c0_40, %c0_41] : memref<64x192xf32, #tpu.memory_space<vmem>>, vector<64x192xf32>
    %cst_42 = arith.constant dense<0.000000e+00> : vector<16x192xf32>
    %73 = tpu.matmul %71, %72, %cst_42 {dimension_numbers = #tpu.dot_dimension_numbers<[1], [0], [0], [1], [0, 0, 1, 1], [], []>} : vector<16x64xf32>, vector<64x192xf32>, vector<16x192xf32> -> vector<16x192xf32>
    %c0_43 = arith.constant 0 : index
    %c0_44 = arith.constant 0 : index
    %74 = vector.load %arg15[%c0_43, %c0_44] : memref<1x192xf32, #tpu.memory_space<vmem>>, vector<1x192xf32>
    %75 = vector.broadcast %74 : vector<1x192xf32> to vector<16x192xf32>
    %76 = arith.addf %73, %75 : vector<16x192xf32>
    %c0_45 = arith.constant 0 : index
    %c0_46 = arith.constant 0 : index
    %77 = vector.load %arg14[%c0_45, %c0_46] : memref<64x192xf32, #tpu.memory_space<vmem>>, vector<64x192xf32>
    %c0_47 = arith.constant 0 : index
    %c0_48 = arith.constant 0 : index
    %78 = vector.load %arg16[%c0_47, %c0_48] : memref<1x192xf32, #tpu.memory_space<vmem>>, vector<1x192xf32>
    %cst_49 = arith.constant 0.000000e+00 : f32
    %79 = vector.broadcast %cst_49 : f32 to vector<2x64xf32>
    %80 = vector.extract_strided_slice %76 {offsets = [0, 0], sizes = [2, 192], strides = [1, 1]} : vector<16x192xf32> to vector<2x192xf32>
    %cst_50 = arith.constant dense<0.000000e+00> : vector<2x192xf32>
    %81 = tpu.matmul %79, %77, %cst_50 {dimension_numbers = #tpu.dot_dimension_numbers<[1], [0], [0], [1], [0, 0, 1, 1], [], []>} : vector<2x64xf32>, vector<64x192xf32>, vector<2x192xf32> -> vector<2x192xf32>
    %82 = vector.broadcast %78 : vector<1x192xf32> to vector<2x192xf32>
    %83 = arith.addf %81, %82 : vector<2x192xf32>
    %84 = vector.extract_strided_slice %80 {offsets = [0, 0], sizes = [2, 64], strides = [1, 1]} : vector<2x192xf32> to vector<2x64xf32>
    %85 = vector.extract_strided_slice %83 {offsets = [0, 0], sizes = [2, 64], strides = [1, 1]} : vector<2x192xf32> to vector<2x64xf32>
    %86 = arith.addf %84, %85 : vector<2x64xf32>
    %87 = arith.negf %86 : vector<2x64xf32>
    %88 = math.exp %87 : vector<2x64xf32>
    %cst_51 = arith.constant 1.000000e+00 : f32
    %89 = vector.broadcast %cst_51 : f32 to vector<2x64xf32>
    %90 = arith.addf %89, %88 : vector<2x64xf32>
    %91 = arith.divf %89, %90 : vector<2x64xf32>
    %92 = vector.extract_strided_slice %80 {offsets = [0, 64], sizes = [2, 64], strides = [1, 1]} : vector<2x192xf32> to vector<2x64xf32>
    %93 = vector.extract_strided_slice %83 {offsets = [0, 64], sizes = [2, 64], strides = [1, 1]} : vector<2x192xf32> to vector<2x64xf32>
    %94 = arith.addf %92, %93 : vector<2x64xf32>
    %95 = arith.negf %94 : vector<2x64xf32>
    %96 = math.exp %95 : vector<2x64xf32>
    %cst_52 = arith.constant 1.000000e+00 : f32
    %97 = vector.broadcast %cst_52 : f32 to vector<2x64xf32>
    %98 = arith.addf %97, %96 : vector<2x64xf32>
    %99 = arith.divf %97, %98 : vector<2x64xf32>
    %100 = vector.extract_strided_slice %80 {offsets = [0, 128], sizes = [2, 64], strides = [1, 1]} : vector<2x192xf32> to vector<2x64xf32>
    %101 = vector.extract_strided_slice %83 {offsets = [0, 128], sizes = [2, 64], strides = [1, 1]} : vector<2x192xf32> to vector<2x64xf32>
    %102 = arith.mulf %91, %101 : vector<2x64xf32>
    %103 = arith.addf %100, %102 : vector<2x64xf32>
    %104 = math.tanh %103 : vector<2x64xf32>
    %cst_53 = arith.constant 1.000000e+00 : f32
    %105 = vector.broadcast %cst_53 : f32 to vector<2x64xf32>
    %106 = arith.subf %105, %99 : vector<2x64xf32>
    %107 = arith.mulf %106, %104 : vector<2x64xf32>
    %108 = arith.mulf %99, %79 : vector<2x64xf32>
    %109 = arith.addf %107, %108 : vector<2x64xf32>
    %110 = vector.extract_strided_slice %76 {offsets = [2, 0], sizes = [2, 192], strides = [1, 1]} : vector<16x192xf32> to vector<2x192xf32>
    %cst_54 = arith.constant dense<0.000000e+00> : vector<2x192xf32>
    %111 = tpu.matmul %109, %77, %cst_54 {dimension_numbers = #tpu.dot_dimension_numbers<[1], [0], [0], [1], [0, 0, 1, 1], [], []>} : vector<2x64xf32>, vector<64x192xf32>, vector<2x192xf32> -> vector<2x192xf32>
    %112 = vector.broadcast %78 : vector<1x192xf32> to vector<2x192xf32>
    %113 = arith.addf %111, %112 : vector<2x192xf32>
    %114 = vector.extract_strided_slice %110 {offsets = [0, 0], sizes = [2, 64], strides = [1, 1]} : vector<2x192xf32> to vector<2x64xf32>
    %115 = vector.extract_strided_slice %113 {offsets = [0, 0], sizes = [2, 64], strides = [1, 1]} : vector<2x192xf32> to vector<2x64xf32>
    %116 = arith.addf %114, %115 : vector<2x64xf32>
    %117 = arith.negf %116 : vector<2x64xf32>
    %118 = math.exp %117 : vector<2x64xf32>
    %cst_55 = arith.constant 1.000000e+00 : f32
    %119 = vector.broadcast %cst_55 : f32 to vector<2x64xf32>
    %120 = arith.addf %119, %118 : vector<2x64xf32>
    %121 = arith.divf %119, %120 : vector<2x64xf32>
    %122 = vector.extract_strided_slice %110 {offsets = [0, 64], sizes = [2, 64], strides = [1, 1]} : vector<2x192xf32> to vector<2x64xf32>
    %123 = vector.extract_strided_slice %113 {offsets = [0, 64], sizes = [2, 64], strides = [1, 1]} : vector<2x192xf32> to vector<2x64xf32>
    %124 = arith.addf %122, %123 : vector<2x64xf32>
    %125 = arith.negf %124 : vector<2x64xf32>
    %126 = math.exp %125 : vector<2x64xf32>
    %cst_56 = arith.constant 1.000000e+00 : f32
    %127 = vector.broadcast %cst_56 : f32 to vector<2x64xf32>
    %128 = arith.addf %127, %126 : vector<2x64xf32>
    %129 = arith.divf %127, %128 : vector<2x64xf32>
    %130 = vector.extract_strided_slice %110 {offsets = [0, 128], sizes = [2, 64], strides = [1, 1]} : vector<2x192xf32> to vector<2x64xf32>
    %131 = vector.extract_strided_slice %113 {offsets = [0, 128], sizes = [2, 64], strides = [1, 1]} : vector<2x192xf32> to vector<2x64xf32>
    %132 = arith.mulf %121, %131 : vector<2x64xf32>
    %133 = arith.addf %130, %132 : vector<2x64xf32>
    %134 = math.tanh %133 : vector<2x64xf32>
    %cst_57 = arith.constant 1.000000e+00 : f32
    %135 = vector.broadcast %cst_57 : f32 to vector<2x64xf32>
    %136 = arith.subf %135, %129 : vector<2x64xf32>
    %137 = arith.mulf %136, %134 : vector<2x64xf32>
    %138 = arith.mulf %129, %109 : vector<2x64xf32>
    %139 = arith.addf %137, %138 : vector<2x64xf32>
    %140 = vector.extract_strided_slice %76 {offsets = [4, 0], sizes = [2, 192], strides = [1, 1]} : vector<16x192xf32> to vector<2x192xf32>
    %cst_58 = arith.constant dense<0.000000e+00> : vector<2x192xf32>
    %141 = tpu.matmul %139, %77, %cst_58 {dimension_numbers = #tpu.dot_dimension_numbers<[1], [0], [0], [1], [0, 0, 1, 1], [], []>} : vector<2x64xf32>, vector<64x192xf32>, vector<2x192xf32> -> vector<2x192xf32>
    %142 = vector.broadcast %78 : vector<1x192xf32> to vector<2x192xf32>
    %143 = arith.addf %141, %142 : vector<2x192xf32>
    %144 = vector.extract_strided_slice %140 {offsets = [0, 0], sizes = [2, 64], strides = [1, 1]} : vector<2x192xf32> to vector<2x64xf32>
    %145 = vector.extract_strided_slice %143 {offsets = [0, 0], sizes = [2, 64], strides = [1, 1]} : vector<2x192xf32> to vector<2x64xf32>
    %146 = arith.addf %144, %145 : vector<2x64xf32>
    %147 = arith.negf %146 : vector<2x64xf32>
    %148 = math.exp %147 : vector<2x64xf32>
    %cst_59 = arith.constant 1.000000e+00 : f32
    %149 = vector.broadcast %cst_59 : f32 to vector<2x64xf32>
    %150 = arith.addf %149, %148 : vector<2x64xf32>
    %151 = arith.divf %149, %150 : vector<2x64xf32>
    %152 = vector.extract_strided_slice %140 {offsets = [0, 64], sizes = [2, 64], strides = [1, 1]} : vector<2x192xf32> to vector<2x64xf32>
    %153 = vector.extract_strided_slice %143 {offsets = [0, 64], sizes = [2, 64], strides = [1, 1]} : vector<2x192xf32> to vector<2x64xf32>
    %154 = arith.addf %152, %153 : vector<2x64xf32>
    %155 = arith.negf %154 : vector<2x64xf32>
    %156 = math.exp %155 : vector<2x64xf32>
    %cst_60 = arith.constant 1.000000e+00 : f32
    %157 = vector.broadcast %cst_60 : f32 to vector<2x64xf32>
    %158 = arith.addf %157, %156 : vector<2x64xf32>
    %159 = arith.divf %157, %158 : vector<2x64xf32>
    %160 = vector.extract_strided_slice %140 {offsets = [0, 128], sizes = [2, 64], strides = [1, 1]} : vector<2x192xf32> to vector<2x64xf32>
    %161 = vector.extract_strided_slice %143 {offsets = [0, 128], sizes = [2, 64], strides = [1, 1]} : vector<2x192xf32> to vector<2x64xf32>
    %162 = arith.mulf %151, %161 : vector<2x64xf32>
    %163 = arith.addf %160, %162 : vector<2x64xf32>
    %164 = math.tanh %163 : vector<2x64xf32>
    %cst_61 = arith.constant 1.000000e+00 : f32
    %165 = vector.broadcast %cst_61 : f32 to vector<2x64xf32>
    %166 = arith.subf %165, %159 : vector<2x64xf32>
    %167 = arith.mulf %166, %164 : vector<2x64xf32>
    %168 = arith.mulf %159, %139 : vector<2x64xf32>
    %169 = arith.addf %167, %168 : vector<2x64xf32>
    %170 = vector.extract_strided_slice %76 {offsets = [6, 0], sizes = [2, 192], strides = [1, 1]} : vector<16x192xf32> to vector<2x192xf32>
    %cst_62 = arith.constant dense<0.000000e+00> : vector<2x192xf32>
    %171 = tpu.matmul %169, %77, %cst_62 {dimension_numbers = #tpu.dot_dimension_numbers<[1], [0], [0], [1], [0, 0, 1, 1], [], []>} : vector<2x64xf32>, vector<64x192xf32>, vector<2x192xf32> -> vector<2x192xf32>
    %172 = vector.broadcast %78 : vector<1x192xf32> to vector<2x192xf32>
    %173 = arith.addf %171, %172 : vector<2x192xf32>
    %174 = vector.extract_strided_slice %170 {offsets = [0, 0], sizes = [2, 64], strides = [1, 1]} : vector<2x192xf32> to vector<2x64xf32>
    %175 = vector.extract_strided_slice %173 {offsets = [0, 0], sizes = [2, 64], strides = [1, 1]} : vector<2x192xf32> to vector<2x64xf32>
    %176 = arith.addf %174, %175 : vector<2x64xf32>
    %177 = arith.negf %176 : vector<2x64xf32>
    %178 = math.exp %177 : vector<2x64xf32>
    %cst_63 = arith.constant 1.000000e+00 : f32
    %179 = vector.broadcast %cst_63 : f32 to vector<2x64xf32>
    %180 = arith.addf %179, %178 : vector<2x64xf32>
    %181 = arith.divf %179, %180 : vector<2x64xf32>
    %182 = vector.extract_strided_slice %170 {offsets = [0, 64], sizes = [2, 64], strides = [1, 1]} : vector<2x192xf32> to vector<2x64xf32>
    %183 = vector.extract_strided_slice %173 {offsets = [0, 64], sizes = [2, 64], strides = [1, 1]} : vector<2x192xf32> to vector<2x64xf32>
    %184 = arith.addf %182, %183 : vector<2x64xf32>
    %185 = arith.negf %184 : vector<2x64xf32>
    %186 = math.exp %185 : vector<2x64xf32>
    %cst_64 = arith.constant 1.000000e+00 : f32
    %187 = vector.broadcast %cst_64 : f32 to vector<2x64xf32>
    %188 = arith.addf %187, %186 : vector<2x64xf32>
    %189 = arith.divf %187, %188 : vector<2x64xf32>
    %190 = vector.extract_strided_slice %170 {offsets = [0, 128], sizes = [2, 64], strides = [1, 1]} : vector<2x192xf32> to vector<2x64xf32>
    %191 = vector.extract_strided_slice %173 {offsets = [0, 128], sizes = [2, 64], strides = [1, 1]} : vector<2x192xf32> to vector<2x64xf32>
    %192 = arith.mulf %181, %191 : vector<2x64xf32>
    %193 = arith.addf %190, %192 : vector<2x64xf32>
    %194 = math.tanh %193 : vector<2x64xf32>
    %cst_65 = arith.constant 1.000000e+00 : f32
    %195 = vector.broadcast %cst_65 : f32 to vector<2x64xf32>
    %196 = arith.subf %195, %189 : vector<2x64xf32>
    %197 = arith.mulf %196, %194 : vector<2x64xf32>
    %198 = arith.mulf %189, %169 : vector<2x64xf32>
    %199 = arith.addf %197, %198 : vector<2x64xf32>
    %200 = vector.extract_strided_slice %76 {offsets = [8, 0], sizes = [2, 192], strides = [1, 1]} : vector<16x192xf32> to vector<2x192xf32>
    %cst_66 = arith.constant dense<0.000000e+00> : vector<2x192xf32>
    %201 = tpu.matmul %199, %77, %cst_66 {dimension_numbers = #tpu.dot_dimension_numbers<[1], [0], [0], [1], [0, 0, 1, 1], [], []>} : vector<2x64xf32>, vector<64x192xf32>, vector<2x192xf32> -> vector<2x192xf32>
    %202 = vector.broadcast %78 : vector<1x192xf32> to vector<2x192xf32>
    %203 = arith.addf %201, %202 : vector<2x192xf32>
    %204 = vector.extract_strided_slice %200 {offsets = [0, 0], sizes = [2, 64], strides = [1, 1]} : vector<2x192xf32> to vector<2x64xf32>
    %205 = vector.extract_strided_slice %203 {offsets = [0, 0], sizes = [2, 64], strides = [1, 1]} : vector<2x192xf32> to vector<2x64xf32>
    %206 = arith.addf %204, %205 : vector<2x64xf32>
    %207 = arith.negf %206 : vector<2x64xf32>
    %208 = math.exp %207 : vector<2x64xf32>
    %cst_67 = arith.constant 1.000000e+00 : f32
    %209 = vector.broadcast %cst_67 : f32 to vector<2x64xf32>
    %210 = arith.addf %209, %208 : vector<2x64xf32>
    %211 = arith.divf %209, %210 : vector<2x64xf32>
    %212 = vector.extract_strided_slice %200 {offsets = [0, 64], sizes = [2, 64], strides = [1, 1]} : vector<2x192xf32> to vector<2x64xf32>
    %213 = vector.extract_strided_slice %203 {offsets = [0, 64], sizes = [2, 64], strides = [1, 1]} : vector<2x192xf32> to vector<2x64xf32>
    %214 = arith.addf %212, %213 : vector<2x64xf32>
    %215 = arith.negf %214 : vector<2x64xf32>
    %216 = math.exp %215 : vector<2x64xf32>
    %cst_68 = arith.constant 1.000000e+00 : f32
    %217 = vector.broadcast %cst_68 : f32 to vector<2x64xf32>
    %218 = arith.addf %217, %216 : vector<2x64xf32>
    %219 = arith.divf %217, %218 : vector<2x64xf32>
    %220 = vector.extract_strided_slice %200 {offsets = [0, 128], sizes = [2, 64], strides = [1, 1]} : vector<2x192xf32> to vector<2x64xf32>
    %221 = vector.extract_strided_slice %203 {offsets = [0, 128], sizes = [2, 64], strides = [1, 1]} : vector<2x192xf32> to vector<2x64xf32>
    %222 = arith.mulf %211, %221 : vector<2x64xf32>
    %223 = arith.addf %220, %222 : vector<2x64xf32>
    %224 = math.tanh %223 : vector<2x64xf32>
    %cst_69 = arith.constant 1.000000e+00 : f32
    %225 = vector.broadcast %cst_69 : f32 to vector<2x64xf32>
    %226 = arith.subf %225, %219 : vector<2x64xf32>
    %227 = arith.mulf %226, %224 : vector<2x64xf32>
    %228 = arith.mulf %219, %199 : vector<2x64xf32>
    %229 = arith.addf %227, %228 : vector<2x64xf32>
    %230 = vector.extract_strided_slice %76 {offsets = [10, 0], sizes = [2, 192], strides = [1, 1]} : vector<16x192xf32> to vector<2x192xf32>
    %cst_70 = arith.constant dense<0.000000e+00> : vector<2x192xf32>
    %231 = tpu.matmul %229, %77, %cst_70 {dimension_numbers = #tpu.dot_dimension_numbers<[1], [0], [0], [1], [0, 0, 1, 1], [], []>} : vector<2x64xf32>, vector<64x192xf32>, vector<2x192xf32> -> vector<2x192xf32>
    %232 = vector.broadcast %78 : vector<1x192xf32> to vector<2x192xf32>
    %233 = arith.addf %231, %232 : vector<2x192xf32>
    %234 = vector.extract_strided_slice %230 {offsets = [0, 0], sizes = [2, 64], strides = [1, 1]} : vector<2x192xf32> to vector<2x64xf32>
    %235 = vector.extract_strided_slice %233 {offsets = [0, 0], sizes = [2, 64], strides = [1, 1]} : vector<2x192xf32> to vector<2x64xf32>
    %236 = arith.addf %234, %235 : vector<2x64xf32>
    %237 = arith.negf %236 : vector<2x64xf32>
    %238 = math.exp %237 : vector<2x64xf32>
    %cst_71 = arith.constant 1.000000e+00 : f32
    %239 = vector.broadcast %cst_71 : f32 to vector<2x64xf32>
    %240 = arith.addf %239, %238 : vector<2x64xf32>
    %241 = arith.divf %239, %240 : vector<2x64xf32>
    %242 = vector.extract_strided_slice %230 {offsets = [0, 64], sizes = [2, 64], strides = [1, 1]} : vector<2x192xf32> to vector<2x64xf32>
    %243 = vector.extract_strided_slice %233 {offsets = [0, 64], sizes = [2, 64], strides = [1, 1]} : vector<2x192xf32> to vector<2x64xf32>
    %244 = arith.addf %242, %243 : vector<2x64xf32>
    %245 = arith.negf %244 : vector<2x64xf32>
    %246 = math.exp %245 : vector<2x64xf32>
    %cst_72 = arith.constant 1.000000e+00 : f32
    %247 = vector.broadcast %cst_72 : f32 to vector<2x64xf32>
    %248 = arith.addf %247, %246 : vector<2x64xf32>
    %249 = arith.divf %247, %248 : vector<2x64xf32>
    %250 = vector.extract_strided_slice %230 {offsets = [0, 128], sizes = [2, 64], strides = [1, 1]} : vector<2x192xf32> to vector<2x64xf32>
    %251 = vector.extract_strided_slice %233 {offsets = [0, 128], sizes = [2, 64], strides = [1, 1]} : vector<2x192xf32> to vector<2x64xf32>
    %252 = arith.mulf %241, %251 : vector<2x64xf32>
    %253 = arith.addf %250, %252 : vector<2x64xf32>
    %254 = math.tanh %253 : vector<2x64xf32>
    %cst_73 = arith.constant 1.000000e+00 : f32
    %255 = vector.broadcast %cst_73 : f32 to vector<2x64xf32>
    %256 = arith.subf %255, %249 : vector<2x64xf32>
    %257 = arith.mulf %256, %254 : vector<2x64xf32>
    %258 = arith.mulf %249, %229 : vector<2x64xf32>
    %259 = arith.addf %257, %258 : vector<2x64xf32>
    %260 = vector.extract_strided_slice %76 {offsets = [12, 0], sizes = [2, 192], strides = [1, 1]} : vector<16x192xf32> to vector<2x192xf32>
    %cst_74 = arith.constant dense<0.000000e+00> : vector<2x192xf32>
    %261 = tpu.matmul %259, %77, %cst_74 {dimension_numbers = #tpu.dot_dimension_numbers<[1], [0], [0], [1], [0, 0, 1, 1], [], []>} : vector<2x64xf32>, vector<64x192xf32>, vector<2x192xf32> -> vector<2x192xf32>
    %262 = vector.broadcast %78 : vector<1x192xf32> to vector<2x192xf32>
    %263 = arith.addf %261, %262 : vector<2x192xf32>
    %264 = vector.extract_strided_slice %260 {offsets = [0, 0], sizes = [2, 64], strides = [1, 1]} : vector<2x192xf32> to vector<2x64xf32>
    %265 = vector.extract_strided_slice %263 {offsets = [0, 0], sizes = [2, 64], strides = [1, 1]} : vector<2x192xf32> to vector<2x64xf32>
    %266 = arith.addf %264, %265 : vector<2x64xf32>
    %267 = arith.negf %266 : vector<2x64xf32>
    %268 = math.exp %267 : vector<2x64xf32>
    %cst_75 = arith.constant 1.000000e+00 : f32
    %269 = vector.broadcast %cst_75 : f32 to vector<2x64xf32>
    %270 = arith.addf %269, %268 : vector<2x64xf32>
    %271 = arith.divf %269, %270 : vector<2x64xf32>
    %272 = vector.extract_strided_slice %260 {offsets = [0, 64], sizes = [2, 64], strides = [1, 1]} : vector<2x192xf32> to vector<2x64xf32>
    %273 = vector.extract_strided_slice %263 {offsets = [0, 64], sizes = [2, 64], strides = [1, 1]} : vector<2x192xf32> to vector<2x64xf32>
    %274 = arith.addf %272, %273 : vector<2x64xf32>
    %275 = arith.negf %274 : vector<2x64xf32>
    %276 = math.exp %275 : vector<2x64xf32>
    %cst_76 = arith.constant 1.000000e+00 : f32
    %277 = vector.broadcast %cst_76 : f32 to vector<2x64xf32>
    %278 = arith.addf %277, %276 : vector<2x64xf32>
    %279 = arith.divf %277, %278 : vector<2x64xf32>
    %280 = vector.extract_strided_slice %260 {offsets = [0, 128], sizes = [2, 64], strides = [1, 1]} : vector<2x192xf32> to vector<2x64xf32>
    %281 = vector.extract_strided_slice %263 {offsets = [0, 128], sizes = [2, 64], strides = [1, 1]} : vector<2x192xf32> to vector<2x64xf32>
    %282 = arith.mulf %271, %281 : vector<2x64xf32>
    %283 = arith.addf %280, %282 : vector<2x64xf32>
    %284 = math.tanh %283 : vector<2x64xf32>
    %cst_77 = arith.constant 1.000000e+00 : f32
    %285 = vector.broadcast %cst_77 : f32 to vector<2x64xf32>
    %286 = arith.subf %285, %279 : vector<2x64xf32>
    %287 = arith.mulf %286, %284 : vector<2x64xf32>
    %288 = arith.mulf %279, %259 : vector<2x64xf32>
    %289 = arith.addf %287, %288 : vector<2x64xf32>
    %290 = vector.extract_strided_slice %76 {offsets = [14, 0], sizes = [2, 192], strides = [1, 1]} : vector<16x192xf32> to vector<2x192xf32>
    %cst_78 = arith.constant dense<0.000000e+00> : vector<2x192xf32>
    %291 = tpu.matmul %289, %77, %cst_78 {dimension_numbers = #tpu.dot_dimension_numbers<[1], [0], [0], [1], [0, 0, 1, 1], [], []>} : vector<2x64xf32>, vector<64x192xf32>, vector<2x192xf32> -> vector<2x192xf32>
    %292 = vector.broadcast %78 : vector<1x192xf32> to vector<2x192xf32>
    %293 = arith.addf %291, %292 : vector<2x192xf32>
    %294 = vector.extract_strided_slice %290 {offsets = [0, 0], sizes = [2, 64], strides = [1, 1]} : vector<2x192xf32> to vector<2x64xf32>
    %295 = vector.extract_strided_slice %293 {offsets = [0, 0], sizes = [2, 64], strides = [1, 1]} : vector<2x192xf32> to vector<2x64xf32>
    %296 = arith.addf %294, %295 : vector<2x64xf32>
    %297 = arith.negf %296 : vector<2x64xf32>
    %298 = math.exp %297 : vector<2x64xf32>
    %cst_79 = arith.constant 1.000000e+00 : f32
    %299 = vector.broadcast %cst_79 : f32 to vector<2x64xf32>
    %300 = arith.addf %299, %298 : vector<2x64xf32>
    %301 = arith.divf %299, %300 : vector<2x64xf32>
    %302 = vector.extract_strided_slice %290 {offsets = [0, 64], sizes = [2, 64], strides = [1, 1]} : vector<2x192xf32> to vector<2x64xf32>
    %303 = vector.extract_strided_slice %293 {offsets = [0, 64], sizes = [2, 64], strides = [1, 1]} : vector<2x192xf32> to vector<2x64xf32>
    %304 = arith.addf %302, %303 : vector<2x64xf32>
    %305 = arith.negf %304 : vector<2x64xf32>
    %306 = math.exp %305 : vector<2x64xf32>
    %cst_80 = arith.constant 1.000000e+00 : f32
    %307 = vector.broadcast %cst_80 : f32 to vector<2x64xf32>
    %308 = arith.addf %307, %306 : vector<2x64xf32>
    %309 = arith.divf %307, %308 : vector<2x64xf32>
    %310 = vector.extract_strided_slice %290 {offsets = [0, 128], sizes = [2, 64], strides = [1, 1]} : vector<2x192xf32> to vector<2x64xf32>
    %311 = vector.extract_strided_slice %293 {offsets = [0, 128], sizes = [2, 64], strides = [1, 1]} : vector<2x192xf32> to vector<2x64xf32>
    %312 = arith.mulf %301, %311 : vector<2x64xf32>
    %313 = arith.addf %310, %312 : vector<2x64xf32>
    %314 = math.tanh %313 : vector<2x64xf32>
    %cst_81 = arith.constant 1.000000e+00 : f32
    %315 = vector.broadcast %cst_81 : f32 to vector<2x64xf32>
    %316 = arith.subf %315, %309 : vector<2x64xf32>
    %317 = arith.mulf %316, %314 : vector<2x64xf32>
    %318 = arith.mulf %309, %289 : vector<2x64xf32>
    %319 = arith.addf %317, %318 : vector<2x64xf32>
    %320 = tpu.concatenate %109, %139, %169, %199, %229, %259, %289, %319 in 0 : vector<2x64xf32>, vector<2x64xf32>, vector<2x64xf32>, vector<2x64xf32>, vector<2x64xf32>, vector<2x64xf32>, vector<2x64xf32>, vector<2x64xf32> -> vector<16x64xf32>
    %c0_82 = arith.constant 0 : index
    %c0_83 = arith.constant 0 : index
    %321 = vector.load %arg17[%c0_82, %c0_83] : memref<64x192xf32, #tpu.memory_space<vmem>>, vector<64x192xf32>
    %cst_84 = arith.constant dense<0.000000e+00> : vector<16x192xf32>
    %322 = tpu.matmul %320, %321, %cst_84 {dimension_numbers = #tpu.dot_dimension_numbers<[1], [0], [0], [1], [0, 0, 1, 1], [], []>} : vector<16x64xf32>, vector<64x192xf32>, vector<16x192xf32> -> vector<16x192xf32>
    %c0_85 = arith.constant 0 : index
    %c0_86 = arith.constant 0 : index
    %323 = vector.load %arg19[%c0_85, %c0_86] : memref<1x192xf32, #tpu.memory_space<vmem>>, vector<1x192xf32>
    %324 = vector.broadcast %323 : vector<1x192xf32> to vector<16x192xf32>
    %325 = arith.addf %322, %324 : vector<16x192xf32>
    %c0_87 = arith.constant 0 : index
    %c0_88 = arith.constant 0 : index
    %326 = vector.load %arg18[%c0_87, %c0_88] : memref<64x192xf32, #tpu.memory_space<vmem>>, vector<64x192xf32>
    %c0_89 = arith.constant 0 : index
    %c0_90 = arith.constant 0 : index
    %327 = vector.load %arg20[%c0_89, %c0_90] : memref<1x192xf32, #tpu.memory_space<vmem>>, vector<1x192xf32>
    %cst_91 = arith.constant 0.000000e+00 : f32
    %328 = vector.broadcast %cst_91 : f32 to vector<2x64xf32>
    %329 = vector.extract_strided_slice %325 {offsets = [0, 0], sizes = [2, 192], strides = [1, 1]} : vector<16x192xf32> to vector<2x192xf32>
    %cst_92 = arith.constant dense<0.000000e+00> : vector<2x192xf32>
    %330 = tpu.matmul %328, %326, %cst_92 {dimension_numbers = #tpu.dot_dimension_numbers<[1], [0], [0], [1], [0, 0, 1, 1], [], []>} : vector<2x64xf32>, vector<64x192xf32>, vector<2x192xf32> -> vector<2x192xf32>
    %331 = vector.broadcast %327 : vector<1x192xf32> to vector<2x192xf32>
    %332 = arith.addf %330, %331 : vector<2x192xf32>
    %333 = vector.extract_strided_slice %329 {offsets = [0, 0], sizes = [2, 64], strides = [1, 1]} : vector<2x192xf32> to vector<2x64xf32>
    %334 = vector.extract_strided_slice %332 {offsets = [0, 0], sizes = [2, 64], strides = [1, 1]} : vector<2x192xf32> to vector<2x64xf32>
    %335 = arith.addf %333, %334 : vector<2x64xf32>
    %336 = arith.negf %335 : vector<2x64xf32>
    %337 = math.exp %336 : vector<2x64xf32>
    %cst_93 = arith.constant 1.000000e+00 : f32
    %338 = vector.broadcast %cst_93 : f32 to vector<2x64xf32>
    %339 = arith.addf %338, %337 : vector<2x64xf32>
    %340 = arith.divf %338, %339 : vector<2x64xf32>
    %341 = vector.extract_strided_slice %329 {offsets = [0, 64], sizes = [2, 64], strides = [1, 1]} : vector<2x192xf32> to vector<2x64xf32>
    %342 = vector.extract_strided_slice %332 {offsets = [0, 64], sizes = [2, 64], strides = [1, 1]} : vector<2x192xf32> to vector<2x64xf32>
    %343 = arith.addf %341, %342 : vector<2x64xf32>
    %344 = arith.negf %343 : vector<2x64xf32>
    %345 = math.exp %344 : vector<2x64xf32>
    %cst_94 = arith.constant 1.000000e+00 : f32
    %346 = vector.broadcast %cst_94 : f32 to vector<2x64xf32>
    %347 = arith.addf %346, %345 : vector<2x64xf32>
    %348 = arith.divf %346, %347 : vector<2x64xf32>
    %349 = vector.extract_strided_slice %329 {offsets = [0, 128], sizes = [2, 64], strides = [1, 1]} : vector<2x192xf32> to vector<2x64xf32>
    %350 = vector.extract_strided_slice %332 {offsets = [0, 128], sizes = [2, 64], strides = [1, 1]} : vector<2x192xf32> to vector<2x64xf32>
    %351 = arith.mulf %340, %350 : vector<2x64xf32>
    %352 = arith.addf %349, %351 : vector<2x64xf32>
    %353 = math.tanh %352 : vector<2x64xf32>
    %cst_95 = arith.constant 1.000000e+00 : f32
    %354 = vector.broadcast %cst_95 : f32 to vector<2x64xf32>
    %355 = arith.subf %354, %348 : vector<2x64xf32>
    %356 = arith.mulf %355, %353 : vector<2x64xf32>
    %357 = arith.mulf %348, %328 : vector<2x64xf32>
    %358 = arith.addf %356, %357 : vector<2x64xf32>
    %359 = vector.extract_strided_slice %325 {offsets = [2, 0], sizes = [2, 192], strides = [1, 1]} : vector<16x192xf32> to vector<2x192xf32>
    %cst_96 = arith.constant dense<0.000000e+00> : vector<2x192xf32>
    %360 = tpu.matmul %358, %326, %cst_96 {dimension_numbers = #tpu.dot_dimension_numbers<[1], [0], [0], [1], [0, 0, 1, 1], [], []>} : vector<2x64xf32>, vector<64x192xf32>, vector<2x192xf32> -> vector<2x192xf32>
    %361 = vector.broadcast %327 : vector<1x192xf32> to vector<2x192xf32>
    %362 = arith.addf %360, %361 : vector<2x192xf32>
    %363 = vector.extract_strided_slice %359 {offsets = [0, 0], sizes = [2, 64], strides = [1, 1]} : vector<2x192xf32> to vector<2x64xf32>
    %364 = vector.extract_strided_slice %362 {offsets = [0, 0], sizes = [2, 64], strides = [1, 1]} : vector<2x192xf32> to vector<2x64xf32>
    %365 = arith.addf %363, %364 : vector<2x64xf32>
    %366 = arith.negf %365 : vector<2x64xf32>
    %367 = math.exp %366 : vector<2x64xf32>
    %cst_97 = arith.constant 1.000000e+00 : f32
    %368 = vector.broadcast %cst_97 : f32 to vector<2x64xf32>
    %369 = arith.addf %368, %367 : vector<2x64xf32>
    %370 = arith.divf %368, %369 : vector<2x64xf32>
    %371 = vector.extract_strided_slice %359 {offsets = [0, 64], sizes = [2, 64], strides = [1, 1]} : vector<2x192xf32> to vector<2x64xf32>
    %372 = vector.extract_strided_slice %362 {offsets = [0, 64], sizes = [2, 64], strides = [1, 1]} : vector<2x192xf32> to vector<2x64xf32>
    %373 = arith.addf %371, %372 : vector<2x64xf32>
    %374 = arith.negf %373 : vector<2x64xf32>
    %375 = math.exp %374 : vector<2x64xf32>
    %cst_98 = arith.constant 1.000000e+00 : f32
    %376 = vector.broadcast %cst_98 : f32 to vector<2x64xf32>
    %377 = arith.addf %376, %375 : vector<2x64xf32>
    %378 = arith.divf %376, %377 : vector<2x64xf32>
    %379 = vector.extract_strided_slice %359 {offsets = [0, 128], sizes = [2, 64], strides = [1, 1]} : vector<2x192xf32> to vector<2x64xf32>
    %380 = vector.extract_strided_slice %362 {offsets = [0, 128], sizes = [2, 64], strides = [1, 1]} : vector<2x192xf32> to vector<2x64xf32>
    %381 = arith.mulf %370, %380 : vector<2x64xf32>
    %382 = arith.addf %379, %381 : vector<2x64xf32>
    %383 = math.tanh %382 : vector<2x64xf32>
    %cst_99 = arith.constant 1.000000e+00 : f32
    %384 = vector.broadcast %cst_99 : f32 to vector<2x64xf32>
    %385 = arith.subf %384, %378 : vector<2x64xf32>
    %386 = arith.mulf %385, %383 : vector<2x64xf32>
    %387 = arith.mulf %378, %358 : vector<2x64xf32>
    %388 = arith.addf %386, %387 : vector<2x64xf32>
    %389 = vector.extract_strided_slice %325 {offsets = [4, 0], sizes = [2, 192], strides = [1, 1]} : vector<16x192xf32> to vector<2x192xf32>
    %cst_100 = arith.constant dense<0.000000e+00> : vector<2x192xf32>
    %390 = tpu.matmul %388, %326, %cst_100 {dimension_numbers = #tpu.dot_dimension_numbers<[1], [0], [0], [1], [0, 0, 1, 1], [], []>} : vector<2x64xf32>, vector<64x192xf32>, vector<2x192xf32> -> vector<2x192xf32>
    %391 = vector.broadcast %327 : vector<1x192xf32> to vector<2x192xf32>
    %392 = arith.addf %390, %391 : vector<2x192xf32>
    %393 = vector.extract_strided_slice %389 {offsets = [0, 0], sizes = [2, 64], strides = [1, 1]} : vector<2x192xf32> to vector<2x64xf32>
    %394 = vector.extract_strided_slice %392 {offsets = [0, 0], sizes = [2, 64], strides = [1, 1]} : vector<2x192xf32> to vector<2x64xf32>
    %395 = arith.addf %393, %394 : vector<2x64xf32>
    %396 = arith.negf %395 : vector<2x64xf32>
    %397 = math.exp %396 : vector<2x64xf32>
    %cst_101 = arith.constant 1.000000e+00 : f32
    %398 = vector.broadcast %cst_101 : f32 to vector<2x64xf32>
    %399 = arith.addf %398, %397 : vector<2x64xf32>
    %400 = arith.divf %398, %399 : vector<2x64xf32>
    %401 = vector.extract_strided_slice %389 {offsets = [0, 64], sizes = [2, 64], strides = [1, 1]} : vector<2x192xf32> to vector<2x64xf32>
    %402 = vector.extract_strided_slice %392 {offsets = [0, 64], sizes = [2, 64], strides = [1, 1]} : vector<2x192xf32> to vector<2x64xf32>
    %403 = arith.addf %401, %402 : vector<2x64xf32>
    %404 = arith.negf %403 : vector<2x64xf32>
    %405 = math.exp %404 : vector<2x64xf32>
    %cst_102 = arith.constant 1.000000e+00 : f32
    %406 = vector.broadcast %cst_102 : f32 to vector<2x64xf32>
    %407 = arith.addf %406, %405 : vector<2x64xf32>
    %408 = arith.divf %406, %407 : vector<2x64xf32>
    %409 = vector.extract_strided_slice %389 {offsets = [0, 128], sizes = [2, 64], strides = [1, 1]} : vector<2x192xf32> to vector<2x64xf32>
    %410 = vector.extract_strided_slice %392 {offsets = [0, 128], sizes = [2, 64], strides = [1, 1]} : vector<2x192xf32> to vector<2x64xf32>
    %411 = arith.mulf %400, %410 : vector<2x64xf32>
    %412 = arith.addf %409, %411 : vector<2x64xf32>
    %413 = math.tanh %412 : vector<2x64xf32>
    %cst_103 = arith.constant 1.000000e+00 : f32
    %414 = vector.broadcast %cst_103 : f32 to vector<2x64xf32>
    %415 = arith.subf %414, %408 : vector<2x64xf32>
    %416 = arith.mulf %415, %413 : vector<2x64xf32>
    %417 = arith.mulf %408, %388 : vector<2x64xf32>
    %418 = arith.addf %416, %417 : vector<2x64xf32>
    %419 = vector.extract_strided_slice %325 {offsets = [6, 0], sizes = [2, 192], strides = [1, 1]} : vector<16x192xf32> to vector<2x192xf32>
    %cst_104 = arith.constant dense<0.000000e+00> : vector<2x192xf32>
    %420 = tpu.matmul %418, %326, %cst_104 {dimension_numbers = #tpu.dot_dimension_numbers<[1], [0], [0], [1], [0, 0, 1, 1], [], []>} : vector<2x64xf32>, vector<64x192xf32>, vector<2x192xf32> -> vector<2x192xf32>
    %421 = vector.broadcast %327 : vector<1x192xf32> to vector<2x192xf32>
    %422 = arith.addf %420, %421 : vector<2x192xf32>
    %423 = vector.extract_strided_slice %419 {offsets = [0, 0], sizes = [2, 64], strides = [1, 1]} : vector<2x192xf32> to vector<2x64xf32>
    %424 = vector.extract_strided_slice %422 {offsets = [0, 0], sizes = [2, 64], strides = [1, 1]} : vector<2x192xf32> to vector<2x64xf32>
    %425 = arith.addf %423, %424 : vector<2x64xf32>
    %426 = arith.negf %425 : vector<2x64xf32>
    %427 = math.exp %426 : vector<2x64xf32>
    %cst_105 = arith.constant 1.000000e+00 : f32
    %428 = vector.broadcast %cst_105 : f32 to vector<2x64xf32>
    %429 = arith.addf %428, %427 : vector<2x64xf32>
    %430 = arith.divf %428, %429 : vector<2x64xf32>
    %431 = vector.extract_strided_slice %419 {offsets = [0, 64], sizes = [2, 64], strides = [1, 1]} : vector<2x192xf32> to vector<2x64xf32>
    %432 = vector.extract_strided_slice %422 {offsets = [0, 64], sizes = [2, 64], strides = [1, 1]} : vector<2x192xf32> to vector<2x64xf32>
    %433 = arith.addf %431, %432 : vector<2x64xf32>
    %434 = arith.negf %433 : vector<2x64xf32>
    %435 = math.exp %434 : vector<2x64xf32>
    %cst_106 = arith.constant 1.000000e+00 : f32
    %436 = vector.broadcast %cst_106 : f32 to vector<2x64xf32>
    %437 = arith.addf %436, %435 : vector<2x64xf32>
    %438 = arith.divf %436, %437 : vector<2x64xf32>
    %439 = vector.extract_strided_slice %419 {offsets = [0, 128], sizes = [2, 64], strides = [1, 1]} : vector<2x192xf32> to vector<2x64xf32>
    %440 = vector.extract_strided_slice %422 {offsets = [0, 128], sizes = [2, 64], strides = [1, 1]} : vector<2x192xf32> to vector<2x64xf32>
    %441 = arith.mulf %430, %440 : vector<2x64xf32>
    %442 = arith.addf %439, %441 : vector<2x64xf32>
    %443 = math.tanh %442 : vector<2x64xf32>
    %cst_107 = arith.constant 1.000000e+00 : f32
    %444 = vector.broadcast %cst_107 : f32 to vector<2x64xf32>
    %445 = arith.subf %444, %438 : vector<2x64xf32>
    %446 = arith.mulf %445, %443 : vector<2x64xf32>
    %447 = arith.mulf %438, %418 : vector<2x64xf32>
    %448 = arith.addf %446, %447 : vector<2x64xf32>
    %449 = vector.extract_strided_slice %325 {offsets = [8, 0], sizes = [2, 192], strides = [1, 1]} : vector<16x192xf32> to vector<2x192xf32>
    %cst_108 = arith.constant dense<0.000000e+00> : vector<2x192xf32>
    %450 = tpu.matmul %448, %326, %cst_108 {dimension_numbers = #tpu.dot_dimension_numbers<[1], [0], [0], [1], [0, 0, 1, 1], [], []>} : vector<2x64xf32>, vector<64x192xf32>, vector<2x192xf32> -> vector<2x192xf32>
    %451 = vector.broadcast %327 : vector<1x192xf32> to vector<2x192xf32>
    %452 = arith.addf %450, %451 : vector<2x192xf32>
    %453 = vector.extract_strided_slice %449 {offsets = [0, 0], sizes = [2, 64], strides = [1, 1]} : vector<2x192xf32> to vector<2x64xf32>
    %454 = vector.extract_strided_slice %452 {offsets = [0, 0], sizes = [2, 64], strides = [1, 1]} : vector<2x192xf32> to vector<2x64xf32>
    %455 = arith.addf %453, %454 : vector<2x64xf32>
    %456 = arith.negf %455 : vector<2x64xf32>
    %457 = math.exp %456 : vector<2x64xf32>
    %cst_109 = arith.constant 1.000000e+00 : f32
    %458 = vector.broadcast %cst_109 : f32 to vector<2x64xf32>
    %459 = arith.addf %458, %457 : vector<2x64xf32>
    %460 = arith.divf %458, %459 : vector<2x64xf32>
    %461 = vector.extract_strided_slice %449 {offsets = [0, 64], sizes = [2, 64], strides = [1, 1]} : vector<2x192xf32> to vector<2x64xf32>
    %462 = vector.extract_strided_slice %452 {offsets = [0, 64], sizes = [2, 64], strides = [1, 1]} : vector<2x192xf32> to vector<2x64xf32>
    %463 = arith.addf %461, %462 : vector<2x64xf32>
    %464 = arith.negf %463 : vector<2x64xf32>
    %465 = math.exp %464 : vector<2x64xf32>
    %cst_110 = arith.constant 1.000000e+00 : f32
    %466 = vector.broadcast %cst_110 : f32 to vector<2x64xf32>
    %467 = arith.addf %466, %465 : vector<2x64xf32>
    %468 = arith.divf %466, %467 : vector<2x64xf32>
    %469 = vector.extract_strided_slice %449 {offsets = [0, 128], sizes = [2, 64], strides = [1, 1]} : vector<2x192xf32> to vector<2x64xf32>
    %470 = vector.extract_strided_slice %452 {offsets = [0, 128], sizes = [2, 64], strides = [1, 1]} : vector<2x192xf32> to vector<2x64xf32>
    %471 = arith.mulf %460, %470 : vector<2x64xf32>
    %472 = arith.addf %469, %471 : vector<2x64xf32>
    %473 = math.tanh %472 : vector<2x64xf32>
    %cst_111 = arith.constant 1.000000e+00 : f32
    %474 = vector.broadcast %cst_111 : f32 to vector<2x64xf32>
    %475 = arith.subf %474, %468 : vector<2x64xf32>
    %476 = arith.mulf %475, %473 : vector<2x64xf32>
    %477 = arith.mulf %468, %448 : vector<2x64xf32>
    %478 = arith.addf %476, %477 : vector<2x64xf32>
    %479 = vector.extract_strided_slice %325 {offsets = [10, 0], sizes = [2, 192], strides = [1, 1]} : vector<16x192xf32> to vector<2x192xf32>
    %cst_112 = arith.constant dense<0.000000e+00> : vector<2x192xf32>
    %480 = tpu.matmul %478, %326, %cst_112 {dimension_numbers = #tpu.dot_dimension_numbers<[1], [0], [0], [1], [0, 0, 1, 1], [], []>} : vector<2x64xf32>, vector<64x192xf32>, vector<2x192xf32> -> vector<2x192xf32>
    %481 = vector.broadcast %327 : vector<1x192xf32> to vector<2x192xf32>
    %482 = arith.addf %480, %481 : vector<2x192xf32>
    %483 = vector.extract_strided_slice %479 {offsets = [0, 0], sizes = [2, 64], strides = [1, 1]} : vector<2x192xf32> to vector<2x64xf32>
    %484 = vector.extract_strided_slice %482 {offsets = [0, 0], sizes = [2, 64], strides = [1, 1]} : vector<2x192xf32> to vector<2x64xf32>
    %485 = arith.addf %483, %484 : vector<2x64xf32>
    %486 = arith.negf %485 : vector<2x64xf32>
    %487 = math.exp %486 : vector<2x64xf32>
    %cst_113 = arith.constant 1.000000e+00 : f32
    %488 = vector.broadcast %cst_113 : f32 to vector<2x64xf32>
    %489 = arith.addf %488, %487 : vector<2x64xf32>
    %490 = arith.divf %488, %489 : vector<2x64xf32>
    %491 = vector.extract_strided_slice %479 {offsets = [0, 64], sizes = [2, 64], strides = [1, 1]} : vector<2x192xf32> to vector<2x64xf32>
    %492 = vector.extract_strided_slice %482 {offsets = [0, 64], sizes = [2, 64], strides = [1, 1]} : vector<2x192xf32> to vector<2x64xf32>
    %493 = arith.addf %491, %492 : vector<2x64xf32>
    %494 = arith.negf %493 : vector<2x64xf32>
    %495 = math.exp %494 : vector<2x64xf32>
    %cst_114 = arith.constant 1.000000e+00 : f32
    %496 = vector.broadcast %cst_114 : f32 to vector<2x64xf32>
    %497 = arith.addf %496, %495 : vector<2x64xf32>
    %498 = arith.divf %496, %497 : vector<2x64xf32>
    %499 = vector.extract_strided_slice %479 {offsets = [0, 128], sizes = [2, 64], strides = [1, 1]} : vector<2x192xf32> to vector<2x64xf32>
    %500 = vector.extract_strided_slice %482 {offsets = [0, 128], sizes = [2, 64], strides = [1, 1]} : vector<2x192xf32> to vector<2x64xf32>
    %501 = arith.mulf %490, %500 : vector<2x64xf32>
    %502 = arith.addf %499, %501 : vector<2x64xf32>
    %503 = math.tanh %502 : vector<2x64xf32>
    %cst_115 = arith.constant 1.000000e+00 : f32
    %504 = vector.broadcast %cst_115 : f32 to vector<2x64xf32>
    %505 = arith.subf %504, %498 : vector<2x64xf32>
    %506 = arith.mulf %505, %503 : vector<2x64xf32>
    %507 = arith.mulf %498, %478 : vector<2x64xf32>
    %508 = arith.addf %506, %507 : vector<2x64xf32>
    %509 = vector.extract_strided_slice %325 {offsets = [12, 0], sizes = [2, 192], strides = [1, 1]} : vector<16x192xf32> to vector<2x192xf32>
    %cst_116 = arith.constant dense<0.000000e+00> : vector<2x192xf32>
    %510 = tpu.matmul %508, %326, %cst_116 {dimension_numbers = #tpu.dot_dimension_numbers<[1], [0], [0], [1], [0, 0, 1, 1], [], []>} : vector<2x64xf32>, vector<64x192xf32>, vector<2x192xf32> -> vector<2x192xf32>
    %511 = vector.broadcast %327 : vector<1x192xf32> to vector<2x192xf32>
    %512 = arith.addf %510, %511 : vector<2x192xf32>
    %513 = vector.extract_strided_slice %509 {offsets = [0, 0], sizes = [2, 64], strides = [1, 1]} : vector<2x192xf32> to vector<2x64xf32>
    %514 = vector.extract_strided_slice %512 {offsets = [0, 0], sizes = [2, 64], strides = [1, 1]} : vector<2x192xf32> to vector<2x64xf32>
    %515 = arith.addf %513, %514 : vector<2x64xf32>
    %516 = arith.negf %515 : vector<2x64xf32>
    %517 = math.exp %516 : vector<2x64xf32>
    %cst_117 = arith.constant 1.000000e+00 : f32
    %518 = vector.broadcast %cst_117 : f32 to vector<2x64xf32>
    %519 = arith.addf %518, %517 : vector<2x64xf32>
    %520 = arith.divf %518, %519 : vector<2x64xf32>
    %521 = vector.extract_strided_slice %509 {offsets = [0, 64], sizes = [2, 64], strides = [1, 1]} : vector<2x192xf32> to vector<2x64xf32>
    %522 = vector.extract_strided_slice %512 {offsets = [0, 64], sizes = [2, 64], strides = [1, 1]} : vector<2x192xf32> to vector<2x64xf32>
    %523 = arith.addf %521, %522 : vector<2x64xf32>
    %524 = arith.negf %523 : vector<2x64xf32>
    %525 = math.exp %524 : vector<2x64xf32>
    %cst_118 = arith.constant 1.000000e+00 : f32
    %526 = vector.broadcast %cst_118 : f32 to vector<2x64xf32>
    %527 = arith.addf %526, %525 : vector<2x64xf32>
    %528 = arith.divf %526, %527 : vector<2x64xf32>
    %529 = vector.extract_strided_slice %509 {offsets = [0, 128], sizes = [2, 64], strides = [1, 1]} : vector<2x192xf32> to vector<2x64xf32>
    %530 = vector.extract_strided_slice %512 {offsets = [0, 128], sizes = [2, 64], strides = [1, 1]} : vector<2x192xf32> to vector<2x64xf32>
    %531 = arith.mulf %520, %530 : vector<2x64xf32>
    %532 = arith.addf %529, %531 : vector<2x64xf32>
    %533 = math.tanh %532 : vector<2x64xf32>
    %cst_119 = arith.constant 1.000000e+00 : f32
    %534 = vector.broadcast %cst_119 : f32 to vector<2x64xf32>
    %535 = arith.subf %534, %528 : vector<2x64xf32>
    %536 = arith.mulf %535, %533 : vector<2x64xf32>
    %537 = arith.mulf %528, %508 : vector<2x64xf32>
    %538 = arith.addf %536, %537 : vector<2x64xf32>
    %539 = vector.extract_strided_slice %325 {offsets = [14, 0], sizes = [2, 192], strides = [1, 1]} : vector<16x192xf32> to vector<2x192xf32>
    %cst_120 = arith.constant dense<0.000000e+00> : vector<2x192xf32>
    %540 = tpu.matmul %538, %326, %cst_120 {dimension_numbers = #tpu.dot_dimension_numbers<[1], [0], [0], [1], [0, 0, 1, 1], [], []>} : vector<2x64xf32>, vector<64x192xf32>, vector<2x192xf32> -> vector<2x192xf32>
    %541 = vector.broadcast %327 : vector<1x192xf32> to vector<2x192xf32>
    %542 = arith.addf %540, %541 : vector<2x192xf32>
    %543 = vector.extract_strided_slice %539 {offsets = [0, 0], sizes = [2, 64], strides = [1, 1]} : vector<2x192xf32> to vector<2x64xf32>
    %544 = vector.extract_strided_slice %542 {offsets = [0, 0], sizes = [2, 64], strides = [1, 1]} : vector<2x192xf32> to vector<2x64xf32>
    %545 = arith.addf %543, %544 : vector<2x64xf32>
    %546 = arith.negf %545 : vector<2x64xf32>
    %547 = math.exp %546 : vector<2x64xf32>
    %cst_121 = arith.constant 1.000000e+00 : f32
    %548 = vector.broadcast %cst_121 : f32 to vector<2x64xf32>
    %549 = arith.addf %548, %547 : vector<2x64xf32>
    %550 = arith.divf %548, %549 : vector<2x64xf32>
    %551 = vector.extract_strided_slice %539 {offsets = [0, 64], sizes = [2, 64], strides = [1, 1]} : vector<2x192xf32> to vector<2x64xf32>
    %552 = vector.extract_strided_slice %542 {offsets = [0, 64], sizes = [2, 64], strides = [1, 1]} : vector<2x192xf32> to vector<2x64xf32>
    %553 = arith.addf %551, %552 : vector<2x64xf32>
    %554 = arith.negf %553 : vector<2x64xf32>
    %555 = math.exp %554 : vector<2x64xf32>
    %cst_122 = arith.constant 1.000000e+00 : f32
    %556 = vector.broadcast %cst_122 : f32 to vector<2x64xf32>
    %557 = arith.addf %556, %555 : vector<2x64xf32>
    %558 = arith.divf %556, %557 : vector<2x64xf32>
    %559 = vector.extract_strided_slice %539 {offsets = [0, 128], sizes = [2, 64], strides = [1, 1]} : vector<2x192xf32> to vector<2x64xf32>
    %560 = vector.extract_strided_slice %542 {offsets = [0, 128], sizes = [2, 64], strides = [1, 1]} : vector<2x192xf32> to vector<2x64xf32>
    %561 = arith.mulf %550, %560 : vector<2x64xf32>
    %562 = arith.addf %559, %561 : vector<2x64xf32>
    %563 = math.tanh %562 : vector<2x64xf32>
    %cst_123 = arith.constant 1.000000e+00 : f32
    %564 = vector.broadcast %cst_123 : f32 to vector<2x64xf32>
    %565 = arith.subf %564, %558 : vector<2x64xf32>
    %566 = arith.mulf %565, %563 : vector<2x64xf32>
    %567 = arith.mulf %558, %538 : vector<2x64xf32>
    %568 = arith.addf %566, %567 : vector<2x64xf32>
    %c0_124 = arith.constant 0 : index
    %c0_125 = arith.constant 0 : index
    %569 = vector.load %arg21[%c0_124, %c0_125] : memref<64x1xf32, #tpu.memory_space<vmem>>, vector<64x1xf32>
    %c0_126 = arith.constant 0 : index
    %c0_127 = arith.constant 0 : index
    %570 = vector.load %arg22[%c0_126, %c0_127] : memref<1x1xf32, #tpu.memory_space<vmem>>, vector<1x1xf32>
    %cst_128 = arith.constant dense<0.000000e+00> : vector<2x1xf32>
    %571 = tpu.matmul %358, %569, %cst_128 {dimension_numbers = #tpu.dot_dimension_numbers<[1], [0], [0], [1], [0, 0, 1, 1], [], []>} : vector<2x64xf32>, vector<64x1xf32>, vector<2x1xf32> -> vector<2x1xf32>
    %572 = vector.broadcast %570 : vector<1x1xf32> to vector<2x1xf32>
    %573 = arith.addf %571, %572 : vector<2x1xf32>
    %cst_129 = arith.constant dense<0.000000e+00> : vector<2x1xf32>
    %574 = tpu.matmul %388, %569, %cst_129 {dimension_numbers = #tpu.dot_dimension_numbers<[1], [0], [0], [1], [0, 0, 1, 1], [], []>} : vector<2x64xf32>, vector<64x1xf32>, vector<2x1xf32> -> vector<2x1xf32>
    %575 = vector.broadcast %570 : vector<1x1xf32> to vector<2x1xf32>
    %576 = arith.addf %574, %575 : vector<2x1xf32>
    %cst_130 = arith.constant dense<0.000000e+00> : vector<2x1xf32>
    %577 = tpu.matmul %418, %569, %cst_130 {dimension_numbers = #tpu.dot_dimension_numbers<[1], [0], [0], [1], [0, 0, 1, 1], [], []>} : vector<2x64xf32>, vector<64x1xf32>, vector<2x1xf32> -> vector<2x1xf32>
    %578 = vector.broadcast %570 : vector<1x1xf32> to vector<2x1xf32>
    %579 = arith.addf %577, %578 : vector<2x1xf32>
    %cst_131 = arith.constant dense<0.000000e+00> : vector<2x1xf32>
    %580 = tpu.matmul %448, %569, %cst_131 {dimension_numbers = #tpu.dot_dimension_numbers<[1], [0], [0], [1], [0, 0, 1, 1], [], []>} : vector<2x64xf32>, vector<64x1xf32>, vector<2x1xf32> -> vector<2x1xf32>
    %581 = vector.broadcast %570 : vector<1x1xf32> to vector<2x1xf32>
    %582 = arith.addf %580, %581 : vector<2x1xf32>
    %cst_132 = arith.constant dense<0.000000e+00> : vector<2x1xf32>
    %583 = tpu.matmul %478, %569, %cst_132 {dimension_numbers = #tpu.dot_dimension_numbers<[1], [0], [0], [1], [0, 0, 1, 1], [], []>} : vector<2x64xf32>, vector<64x1xf32>, vector<2x1xf32> -> vector<2x1xf32>
    %584 = vector.broadcast %570 : vector<1x1xf32> to vector<2x1xf32>
    %585 = arith.addf %583, %584 : vector<2x1xf32>
    %cst_133 = arith.constant dense<0.000000e+00> : vector<2x1xf32>
    %586 = tpu.matmul %508, %569, %cst_133 {dimension_numbers = #tpu.dot_dimension_numbers<[1], [0], [0], [1], [0, 0, 1, 1], [], []>} : vector<2x64xf32>, vector<64x1xf32>, vector<2x1xf32> -> vector<2x1xf32>
    %587 = vector.broadcast %570 : vector<1x1xf32> to vector<2x1xf32>
    %588 = arith.addf %586, %587 : vector<2x1xf32>
    %cst_134 = arith.constant dense<0.000000e+00> : vector<2x1xf32>
    %589 = tpu.matmul %538, %569, %cst_134 {dimension_numbers = #tpu.dot_dimension_numbers<[1], [0], [0], [1], [0, 0, 1, 1], [], []>} : vector<2x64xf32>, vector<64x1xf32>, vector<2x1xf32> -> vector<2x1xf32>
    %590 = vector.broadcast %570 : vector<1x1xf32> to vector<2x1xf32>
    %591 = arith.addf %589, %590 : vector<2x1xf32>
    %cst_135 = arith.constant dense<0.000000e+00> : vector<2x1xf32>
    %592 = tpu.matmul %568, %569, %cst_135 {dimension_numbers = #tpu.dot_dimension_numbers<[1], [0], [0], [1], [0, 0, 1, 1], [], []>} : vector<2x64xf32>, vector<64x1xf32>, vector<2x1xf32> -> vector<2x1xf32>
    %593 = vector.broadcast %570 : vector<1x1xf32> to vector<2x1xf32>
    %594 = arith.addf %592, %593 : vector<2x1xf32>
    %595 = tpu.concatenate %573, %576, %579, %582, %585, %588, %591, %594 in 1 : vector<2x1xf32>, vector<2x1xf32>, vector<2x1xf32>, vector<2x1xf32>, vector<2x1xf32>, vector<2x1xf32>, vector<2x1xf32>, vector<2x1xf32> -> vector<2x8xf32>
    %c0_136 = arith.constant 0 : index
    %c0_137 = arith.constant 0 : index
    %596 = vector.load %arg23[%c0_136, %c0_137] : memref<2x8xf32, #tpu.memory_space<vmem>>, vector<2x8xf32>
    tpu.vector_store %arg23[%c0_136, %c0_137], %595 {strides = array<i32>} : memref<2x8xf32, #tpu.memory_space<vmem>>, vector<2x8xf32>,
    return
  }
}

</mosaic_0001>

<llo_original>
// kernel: tpu_custom_call.1
$region0: #{tpu_custom_call.1}
  #allocation0 [shape = 'u32[]', space=smem, size = 0x4, offset = 0x4, fixed_abs, tag = 'smem constant byte address 0x4 - core index']
  #allocation1 [shape = 'u32[144,128]{1,0:T(1,128)}', space=vmem, size = 0x12000, scoped, tag = 'internal scratch']
  #allocation2 [shape = 'f32[1,1]{1,0:T(1,128)S(1)}', space=vmem, size = 0x200, scoped, tag = 'scoped memory for tpu_custom_call.1']
  %s0 = inlined_call_operand.hbm [shape: f32[16,84], index: 0, kind: input, shape index: {}]
  %s1 = inlined_call_operand.vmem [shape: f32[16,2], index: 1, kind: input, shape index: {}]
  %s2 = inlined_call_operand.vmem [shape: f32[84,64], index: 2, kind: input, shape index: {}]
  %s3 = inlined_call_operand.hbm [shape: f32[1,64], index: 3, kind: input, shape index: {}]
  %s4 = inlined_call_operand.hbm [shape: f32[2,21], index: 4, kind: input, shape index: {}]
  %s5 = inlined_call_operand.hbm [shape: f32[1,21], index: 5, kind: input, shape index: {}]
  %s6 = inlined_call_operand.hbm [shape: f32[1,21], index: 6, kind: input, shape index: {}]
  %s7 = inlined_call_operand.hbm [shape: f32[1,21], index: 7, kind: input, shape index: {}]
  %s8 = inlined_call_operand.hbm [shape: f32[64,64], index: 8, kind: input, shape index: {}]
  %s9 = inlined_call_operand.hbm [shape: f32[21,64], index: 9, kind: input, shape index: {}]
  %s10 = inlined_call_operand.vmem [shape: f32[1,64], index: 10, kind: input, shape index: {}]
  %s11 = inlined_call_operand.vmem [shape: f32[1,64], index: 11, kind: input, shape index: {}]
  %s12 = inlined_call_operand.vmem [shape: f32[1,64], index: 12, kind: input, shape index: {}]
  %s13 = inlined_call_operand.vmem [shape: f32[64,192], index: 13, kind: input, shape index: {}]
  %s14 = inlined_call_operand.vmem [shape: f32[64,192], index: 14, kind: input, shape index: {}]
  %s15 = inlined_call_operand.vmem [shape: f32[1,192], index: 15, kind: input, shape index: {}]
  %s16 = inlined_call_operand.vmem [shape: f32[1,192], index: 16, kind: input, shape index: {}]
  %s17 = inlined_call_operand.hbm [shape: f32[64,192], index: 17, kind: input, shape index: {}]
  %s18 = inlined_call_operand.hbm [shape: f32[64,192], index: 18, kind: input, shape index: {}]
  %s19 = inlined_call_operand.vmem [shape: f32[1,192], index: 19, kind: input, shape index: {}]
  %s20 = inlined_call_operand.vmem [shape: f32[1,192], index: 20, kind: input, shape index: {}]
  %s21 = inlined_call_operand.vmem [shape: f32[64,1], index: 21, kind: input, shape index: {}]
  %s22 = inlined_call_operand.<no memory space> [shape: f32[1,1], index: 22, kind: input, shape index: {}]
  %s23 = inlined_call_operand.hbm [shape: f32[2,8], index: 23, kind: output, shape index: {}]
  %s24 = sld [smem:[#allocation0]]
  $region142: #{tpu_custom_call.1} parent=0
    _
  %s26 = ssub.s32 1, %s24
  %s27 = scalar_select 0, %s26, %s24
  %v28 = vstv %s22
  %29 = vst [vmem:[#allocation2] sm:$0x1] %v28
  $region1: #{tpu_custom_call.1} parent=0
    #allocation3 [shape = 'u8[8192]{0}', space=vmem, size = 0x2000, scoped, tag = 'input window, operand 0, single buffered']
    #allocation4 [shape = 's32[1]{0}', space=sflag, size = 0x4, scoped, tag = 'scoped memory for tpu_custom_call.1']
    #allocation5 [shape = 's32[1]{0}', space=sflag, size = 0x4, scoped, tag = 'scoped memory for tpu_custom_call.1']
    #allocation6 [shape = 'u8[512]{0}', space=vmem, size = 0x400, scoped, tag = 'input window, operand 3, single buffered']
    #allocation7 [shape = 's32[1]{0}', space=sflag, size = 0x4, scoped, tag = 'scoped memory for tpu_custom_call.1']
    #allocation8 [shape = 'u8[1024]{0}', space=vmem, size = 0x400, scoped, tag = 'input window, operand 4, single buffered']
    #allocation9 [shape = 'u8[512]{0}', space=vmem, size = 0x400, scoped, tag = 'input window, operand 5, single buffered']
    #allocation10 [shape = 's32[1]{0}', space=sflag, size = 0x4, scoped, tag = 'scoped memory for tpu_custom_call.1']
    #allocation11 [shape = 'u8[512]{0}', space=vmem, size = 0x400, scoped, tag = 'input window, operand 6, single buffered']
    #allocation12 [shape = 'u8[512]{0}', space=vmem, size = 0x400, scoped, tag = 'input window, operand 7, single buffered']
    #allocation13 [shape = 's32[1]{0}', space=sflag, size = 0x4, scoped, tag = 'scoped memory for tpu_custom_call.1']
    #allocation14 [shape = 'u8[32768]{0}', space=vmem, size = 0x8000, scoped, tag = 'input window, operand 8, single buffered']
    #allocation15 [shape = 'u8[12288]{0}', space=vmem, size = 0x3000, scoped, tag = 'input window, operand 9, single buffered']
    #allocation16 [shape = 's32[1]{0}', space=sflag, size = 0x4, scoped, tag = 'scoped memory for tpu_custom_call.1']
    #allocation17 [shape = 'u8[65536]{0}', space=vmem, size = 0x10000, scoped, tag = 'input window, operand 17, single buffered']
    #allocation18 [shape = 'u8[65536]{0}', space=vmem, size = 0x10000, scoped, tag = 'input window, operand 18, single buffered']
    #allocation19 [shape = 's32[1]{0}', space=sflag, size = 0x4, scoped, tag = 'scoped memory for tpu_custom_call.1']
    #allocation20 [shape = 'u8[1024]{0}', space=vmem, size = 0x400, scoped, tag = 'output window, operand 0, single buffered']
    %30 = vsyncpa [#allocation4], 0
    %31 = vsyncpa [#allocation7], 0
    %32 = vsyncpa [#allocation10], 0
    %33 = vsyncpa [#allocation13], 0
    %34 = vsyncpa [#allocation16], 0
    %35 = vsyncpa [#allocation19], 0
    %36 = vsyncpa [#allocation5], 0
    // Predicated region
    $region2: #{tpu_custom_call.1} parent=1 // pred_check
      _
    $region3: #{tpu_custom_call.1} parent=1 // pred_check_branch
      %38 = sbr.rel (0) target = $region5
    $region4: #{tpu_custom_call.1} parent=1 // pred_region
      %s40 = ssub.s32 256, 256
      %41 = vsyncadd [#allocation4], %s40
      %s42 = sshll.u32 [#allocation3], 4
      %s43 = int_to_ptr.vmem [resolvable:$true] %s42
      %48 = dma.hbm_to_vmem [thread:$0]  %s0, 256, %s43, [#allocation4], 128, 128, 8
    $region5: #{tpu_custom_call.1} parent=1 // pred_fallthru
      _
    // Predicated region
    $region6: #{tpu_custom_call.1} parent=1 // pred_check
      _
    $region7: #{tpu_custom_call.1} parent=1 // pred_check_branch
      %50 = sbr.rel (0) target = $region9
    $region8: #{tpu_custom_call.1} parent=1 // pred_region
      _
    $region9: #{tpu_custom_call.1} parent=1 // pred_fallthru
      _
    // Predicated region
    $region10: #{tpu_custom_call.1} parent=1 // pred_check
      _
    $region11: #{tpu_custom_call.1} parent=1 // pred_check_branch
      %52 = sbr.rel (0) target = $region13
    $region12: #{tpu_custom_call.1} parent=1 // pred_region
      _
    $region13: #{tpu_custom_call.1} parent=1 // pred_fallthru
      _
    // Predicated region
    $region14: #{tpu_custom_call.1} parent=1 // pred_check
      _
    $region15: #{tpu_custom_call.1} parent=1 // pred_check_branch
      %54 = sbr.rel (0) target = $region17
    $region16: #{tpu_custom_call.1} parent=1 // pred_region
      %s56 = ssub.s32 16, 16
      %57 = vsyncadd [#allocation7], %s56
      %s59 = sshll.u32 [#allocation6], 4
      %s60 = int_to_ptr.vmem [resolvable:$true] %s59
      %62 = dma.hbm_to_vmem [thread:$0]  %s3, 16, %s60, [#allocation7]
    $region17: #{tpu_custom_call.1} parent=1 // pred_fallthru
      _
    // Predicated region
    $region18: #{tpu_custom_call.1} parent=1 // pred_check
      _
    $region19: #{tpu_custom_call.1} parent=1 // pred_check_branch
      %64 = sbr.rel (0) target = $region21
    $region20: #{tpu_custom_call.1} parent=1 // pred_region
      %s66 = ssub.s32 32, 32
      %67 = vsyncadd [#allocation7], %s66
      %s69 = sshll.u32 [#allocation8], 4
      %s70 = int_to_ptr.vmem [resolvable:$true] %s69
      %72 = dma.hbm_to_vmem [thread:$0]  %s4, 32, %s70, [#allocation7]
    $region21: #{tpu_custom_call.1} parent=1 // pred_fallthru
      _
    // Predicated region
    $region22: #{tpu_custom_call.1} parent=1 // pred_check
      _
    $region23: #{tpu_custom_call.1} parent=1 // pred_check_branch
      %74 = sbr.rel (0) target = $region25
    $region24: #{tpu_custom_call.1} parent=1 // pred_region
      %s76 = ssub.s32 16, 16
      %77 = vsyncadd [#allocation10], %s76
      %s79 = sshll.u32 [#allocation9], 4
      %s80 = int_to_ptr.vmem [resolvable:$true] %s79
      %82 = dma.hbm_to_vmem [thread:$0]  %s5, 16, %s80, [#allocation10]
    $region25: #{tpu_custom_call.1} parent=1 // pred_fallthru
      _
    // Predicated region
    $region26: #{tpu_custom_call.1} parent=1 // pred_check
      _
    $region27: #{tpu_custom_call.1} parent=1 // pred_check_branch
      %84 = sbr.rel (0) target = $region29
    $region28: #{tpu_custom_call.1} parent=1 // pred_region
      %s86 = ssub.s32 16, 16
      %87 = vsyncadd [#allocation10], %s86
      %s89 = sshll.u32 [#allocation11], 4
      %s90 = int_to_ptr.vmem [resolvable:$true] %s89
      %92 = dma.hbm_to_vmem [thread:$0]  %s6, 16, %s90, [#allocation10]
    $region29: #{tpu_custom_call.1} parent=1 // pred_fallthru
      _
    // Predicated region
    $region30: #{tpu_custom_call.1} parent=1 // pred_check
      _
    $region31: #{tpu_custom_call.1} parent=1 // pred_check_branch
      %94 = sbr.rel (0) target = $region33
    $region32: #{tpu_custom_call.1} parent=1 // pred_region
      %s96 = ssub.s32 16, 16
      %97 = vsyncadd [#allocation13], %s96
      %s99 = sshll.u32 [#allocation12], 4
      %s100 = int_to_ptr.vmem [resolvable:$true] %s99
      %102 = dma.hbm_to_vmem [thread:$0]  %s7, 16, %s100, [#allocation13]
    $region33: #{tpu_custom_call.1} parent=1 // pred_fallthru
      _
    // Predicated region
    $region34: #{tpu_custom_call.1} parent=1 // pred_check
      _
    $region35: #{tpu_custom_call.1} parent=1 // pred_check_branch
      %104 = sbr.rel (0) target = $region37
    $region36: #{tpu_custom_call.1} parent=1 // pred_region
      %s106 = ssub.s32 1024, 1024
      %107 = vsyncadd [#allocation13], %s106
      %s108 = sshll.u32 [#allocation14], 4
      %s109 = int_to_ptr.vmem [resolvable:$true] %s108
      %114 = dma.hbm_to_vmem [thread:$0]  %s8, 1024, %s109, [#allocation13], 128, 128, 8
    $region37: #{tpu_custom_call.1} parent=1 // pred_fallthru
      _
    // Predicated region
    $region38: #{tpu_custom_call.1} parent=1 // pred_check
      _
    $region39: #{tpu_custom_call.1} parent=1 // pred_check_branch
      %116 = sbr.rel (0) target = $region41
    $region40: #{tpu_custom_call.1} parent=1 // pred_region
      %s118 = ssub.s32 384, 384
      %119 = vsyncadd [#allocation16], %s118
      %s120 = sshll.u32 [#allocation15], 4
      %s121 = int_to_ptr.vmem [resolvable:$true] %s120
      %126 = dma.hbm_to_vmem [thread:$0]  %s9, 384, %s121, [#allocation16], 128, 128, 8
    $region41: #{tpu_custom_call.1} parent=1 // pred_fallthru
      _
    // Predicated region
    $region42: #{tpu_custom_call.1} parent=1 // pred_check
      _
    $region43: #{tpu_custom_call.1} parent=1 // pred_check_branch
      %128 = sbr.rel (0) target = $region45
    $region44: #{tpu_custom_call.1} parent=1 // pred_region
      _
    $region45: #{tpu_custom_call.1} parent=1 // pred_fallthru
      _
    // Predicated region
    $region46: #{tpu_custom_call.1} parent=1 // pred_check
      _
    $region47: #{tpu_custom_call.1} parent=1 // pred_check_branch
      %130 = sbr.rel (0) target = $region49
    $region48: #{tpu_custom_call.1} parent=1 // pred_region
      _
    $region49: #{tpu_custom_call.1} parent=1 // pred_fallthru
      _
    // Predicated region
    $region50: #{tpu_custom_call.1} parent=1 // pred_check
      _
    $region51: #{tpu_custom_call.1} parent=1 // pred_check_branch
      %132 = sbr.rel (0) target = $region53
    $region52: #{tpu_custom_call.1} parent=1 // pred_region
      _
    $region53: #{tpu_custom_call.1} parent=1 // pred_fallthru
      _
    // Predicated region
    $region54: #{tpu_custom_call.1} parent=1 // pred_check
      _
    $region55: #{tpu_custom_call.1} parent=1 // pred_check_branch
      %134 = sbr.rel (0) target = $region57
    $region56: #{tpu_custom_call.1} parent=1 // pred_region
      _
    $region57: #{tpu_custom_call.1} parent=1 // pred_fallthru
      _
    // Predicated region
    $region58: #{tpu_custom_call.1} parent=1 // pred_check
      _
    $region59: #{tpu_custom_call.1} parent=1 // pred_check_branch
      %136 = sbr.rel (0) target = $region61
    $region60: #{tpu_custom_call.1} parent=1 // pred_region
      _
    $region61: #{tpu_custom_call.1} parent=1 // pred_fallthru
      _
    // Predicated region
    $region62: #{tpu_custom_call.1} parent=1 // pred_check
      _
    $region63: #{tpu_custom_call.1} parent=1 // pred_check_branch
      %138 = sbr.rel (0) target = $region65
    $region64: #{tpu_custom_call.1} parent=1 // pred_region
      _
    $region65: #{tpu_custom_call.1} parent=1 // pred_fallthru
      _
    // Predicated region
    $region66: #{tpu_custom_call.1} parent=1 // pred_check
      _
    $region67: #{tpu_custom_call.1} parent=1 // pred_check_branch
      %140 = sbr.rel (0) target = $region69
    $region68: #{tpu_custom_call.1} parent=1 // pred_region
      _
    $region69: #{tpu_custom_call.1} parent=1 // pred_fallthru
      _
    // Predicated region
    $region70: #{tpu_custom_call.1} parent=1 // pred_check
      _
    $region71: #{tpu_custom_call.1} parent=1 // pred_check_branch
      %142 = sbr.rel (0) target = $region73
    $region72: #{tpu_custom_call.1} parent=1 // pred_region
      %s144 = ssub.s32 2048, 2048
      %145 = vsyncadd [#allocation16], %s144
      %s146 = sshll.u32 [#allocation17], 4
      %s147 = int_to_ptr.vmem [resolvable:$true] %s146
      %152 = dma.hbm_to_vmem [thread:$0]  %s17, 2048, %s147, [#allocation16], 256, 256, 16
    $region73: #{tpu_custom_call.1} parent=1 // pred_fallthru
      _
    // Predicated region
    $region74: #{tpu_custom_call.1} parent=1 // pred_check
      _
    $region75: #{tpu_custom_call.1} parent=1 // pred_check_branch
      %154 = sbr.rel (0) target = $region77
    $region76: #{tpu_custom_call.1} parent=1 // pred_region
      %s156 = ssub.s32 2048, 2048
      %157 = vsyncadd [#allocation19], %s156
      %s158 = sshll.u32 [#allocation18], 4
      %s159 = int_to_ptr.vmem [resolvable:$true] %s158
      %164 = dma.hbm_to_vmem [thread:$0]  %s18, 2048, %s159, [#allocation19], 256, 256, 16
    $region77: #{tpu_custom_call.1} parent=1 // pred_fallthru
      _
    // Predicated region
    $region78: #{tpu_custom_call.1} parent=1 // pred_check
      _
    $region79: #{tpu_custom_call.1} parent=1 // pred_check_branch
      %166 = sbr.rel (0) target = $region81
    $region80: #{tpu_custom_call.1} parent=1 // pred_region
      _
    $region81: #{tpu_custom_call.1} parent=1 // pred_fallthru
      _
    // Predicated region
    $region82: #{tpu_custom_call.1} parent=1 // pred_check
      _
    $region83: #{tpu_custom_call.1} parent=1 // pred_check_branch
      %168 = sbr.rel (0) target = $region85
    $region84: #{tpu_custom_call.1} parent=1 // pred_region
      _
    $region85: #{tpu_custom_call.1} parent=1 // pred_fallthru
      _
    // Predicated region
    $region86: #{tpu_custom_call.1} parent=1 // pred_check
      _
    $region87: #{tpu_custom_call.1} parent=1 // pred_check_branch
      %170 = sbr.rel (0) target = $region89
    $region88: #{tpu_custom_call.1} parent=1 // pred_region
      _
    $region89: #{tpu_custom_call.1} parent=1 // pred_fallthru
      _
    // Predicated region
    $region90: #{tpu_custom_call.1} parent=1 // pred_check
      _
    $region91: #{tpu_custom_call.1} parent=1 // pred_check_branch
      %172 = sbr.rel (0) target = $region93
    $region92: #{tpu_custom_call.1} parent=1 // pred_region
      _
    $region93: #{tpu_custom_call.1} parent=1 // pred_fallthru
      _
    // Predicated region
    $region94: #{tpu_custom_call.1} parent=1 // pred_check
      _
    $region95: #{tpu_custom_call.1} parent=1 // pred_check_branch
      %174 = sbr.rel (0) target = $region97
    $region96: #{tpu_custom_call.1} parent=1 // pred_region
      %175 = dma.done [#allocation4], 256
    $region97: #{tpu_custom_call.1} parent=1 // pred_fallthru
      _
    // Predicated region
    $region98: #{tpu_custom_call.1} parent=1 // pred_check
      _
    $region99: #{tpu_custom_call.1} parent=1 // pred_check_branch
      %177 = sbr.rel (0) target = $region101
    $region100: #{tpu_custom_call.1} parent=1 // pred_region
      %178 = dma.done [#allocation7], 16
    $region101: #{tpu_custom_call.1} parent=1 // pred_fallthru
      _
    // Predicated region
    $region102: #{tpu_custom_call.1} parent=1 // pred_check
      _
    $region103: #{tpu_custom_call.1} parent=1 // pred_check_branch
      %180 = sbr.rel (0) target = $region105
    $region104: #{tpu_custom_call.1} parent=1 // pred_region
      %181 = dma.done [#allocation7], 32
    $region105: #{tpu_custom_call.1} parent=1 // pred_fallthru
      _
    // Predicated region
    $region106: #{tpu_custom_call.1} parent=1 // pred_check
      _
    $region107: #{tpu_custom_call.1} parent=1 // pred_check_branch
      %183 = sbr.rel (0) target = $region109
    $region108: #{tpu_custom_call.1} parent=1 // pred_region
      %184 = dma.done [#allocation10], 16
    $region109: #{tpu_custom_call.1} parent=1 // pred_fallthru
      _
    // Predicated region
    $region110: #{tpu_custom_call.1} parent=1 // pred_check
      _
    $region111: #{tpu_custom_call.1} parent=1 // pred_check_branch
      %186 = sbr.rel (0) target = $region113
    $region112: #{tpu_custom_call.1} parent=1 // pred_region
      %187 = dma.done [#allocation10], 16
    $region113: #{tpu_custom_call.1} parent=1 // pred_fallthru
      _
    // Predicated region
    $region114: #{tpu_custom_call.1} parent=1 // pred_check
      _
    $region115: #{tpu_custom_call.1} parent=1 // pred_check_branch
      %189 = sbr.rel (0) target = $region117
    $region116: #{tpu_custom_call.1} parent=1 // pred_region
      %190 = dma.done [#allocation13], 16
    $region117: #{tpu_custom_call.1} parent=1 // pred_fallthru
      _
    // Predicated region
    $region118: #{tpu_custom_call.1} parent=1 // pred_check
      _
    $region119: #{tpu_custom_call.1} parent=1 // pred_check_branch
      %192 = sbr.rel (0) target = $region121
    $region120: #{tpu_custom_call.1} parent=1 // pred_region
      %193 = dma.done [#allocation13], 1024
    $region121: #{tpu_custom_call.1} parent=1 // pred_fallthru
      _
    // Predicated region
    $region122: #{tpu_custom_call.1} parent=1 // pred_check
      _
    $region123: #{tpu_custom_call.1} parent=1 // pred_check_branch
      %195 = sbr.rel (0) target = $region125
    $region124: #{tpu_custom_call.1} parent=1 // pred_region
      %196 = dma.done [#allocation16], 384
    $region125: #{tpu_custom_call.1} parent=1 // pred_fallthru
      _
    // Predicated region
    $region126: #{tpu_custom_call.1} parent=1 // pred_check
      _
    $region127: #{tpu_custom_call.1} parent=1 // pred_check_branch
      %198 = sbr.rel (0) target = $region129
    $region128: #{tpu_custom_call.1} parent=1 // pred_region
      %199 = dma.done [#allocation16], 2048
    $region129: #{tpu_custom_call.1} parent=1 // pred_fallthru
      _
    // Predicated region
    $region130: #{tpu_custom_call.1} parent=1 // pred_check
      _
    $region131: #{tpu_custom_call.1} parent=1 // pred_check_branch
      %201 = sbr.rel (0) target = $region133
    $region132: #{tpu_custom_call.1} parent=1 // pred_region
      %202 = dma.done [#allocation19], 2048
    $region133: #{tpu_custom_call.1} parent=1 // pred_fallthru
      _
    %v203 = vld [vmem:[#allocation3] sm:$0xff]
    %v204 = vld [vmem:[#allocation3 + $0x8] sm:$0xff]
    %v205 = vld [vmem:[%s2] sm:$0xff]
    %v206 = vld [vmem:[%s2 + $0x8] sm:$0xff]
    %v207 = vld [vmem:[%s2 + $0x10] sm:$0xff]
    %v208 = vld [vmem:[%s2 + $0x18] sm:$0xff]
    %v209 = vld [vmem:[%s2 + $0x20] sm:$0xff]
    %v210 = vld [vmem:[%s2 + $0x28] sm:$0xff]
    %v211 = vld [vmem:[%s2 + $0x30] sm:$0xff]
    %v212 = vld [vmem:[%s2 + $0x38] sm:$0xff]
    %v213 = vld [vmem:[%s2 + $0x40] sm:$0xff]
    %v214 = vld [vmem:[%s2 + $0x48] sm:$0xff]
    %v215 = vld [vmem:[%s2 + $0x50] sm:$0xf]
    %v216 = vld [vmem:[#allocation6] sm:$0x1]
    %v218 = vlaneseq
    %v219 = vshrl.u32 %v218, 7
    %v220 = vsub.s32 0, %v219
    %v221 = vrot.slane %v216, %v220
    %vm223 = vcmask 687104
    %v225 = vsel %vm223, %v203, 0
    %v228 = vsel %vm223, %v204, 0
    %vm230 = vcmask 1043456
    %v232 = vsel %vm230, %v215, 0
    %234 = vmatprep.subr.mxu0 0.0
    %235 = vmatpush1.msra.mxu0 %v205
    %236 = vmatprep.subr.mxu0 0.0
    %237 = vmatpush1.msra.mxu0 %v206
    %238 = vmatprep.subr.mxu0 0.0
    %239 = vmatpush1.msra.mxu0 %v207
    %240 = vmatprep.subr.mxu0 0.0
    %241 = vmatpush1.msra.mxu0 %v208
    %242 = vmatprep.subr.mxu0 0.0
    %243 = vmatpush1.msra.mxu0 %v209
    %244 = vmatprep.subr.mxu0 0.0
    %245 = vmatpush1.msra.mxu0 %v210
    %246 = vmatprep.subr.mxu0 0.0
    %247 = vmatpush1.msra.mxu0 %v211
    %248 = vmatprep.subr.mxu0 0.0
    %249 = vmatpush1.msra.mxu0 %v212
    %250 = vmatprep.subr.mxu0 0.0
    %251 = vmatpush1.msra.mxu0 %v213
    %252 = vmatprep.subr.mxu0 0.0
    %253 = vmatpush1.msra.mxu0 %v214
    %254 = vmatprep.subr.mxu0 0.0
    %255 = vmatpush1.msra.mxu0 %v232
    %256 = vmatprep.subr.mxu0 0.0
    %257 = vmatpush1.msra.mxu0 0.0
    %258 = vmatprep.subr.mxu0 0.0
    %259 = vmatpush1.msra.mxu0 0.0
    %260 = vmatprep.subr.mxu0 0.0
    %261 = vmatpush1.msra.mxu0 0.0
    %262 = vmatprep.subr.mxu0 0.0
    %263 = vmatpush1.msra.mxu0 0.0
    %264 = vmatprep.subr.mxu0 0.0
    %265 = vmatpush1.msra.mxu0 0.0
    %266 = vmatprep.subr.mxu0 0.0
    %267 = vmatpush1.msra.mxu0 0.0
    %268 = vmatprep.subr.mxu0 0.0
    %269 = vmatpush1.msra.mxu0 0.0
    %270 = vmatprep.subr.mxu0 0.0
    %271 = vmatpush1.msra.mxu0 0.0
    %272 = vmatprep.subr.mxu0 0.0
    %273 = vmatpush1.msra.mxu0 0.0
    %274 = vmatprep.subr.mxu0 0.0
    %275 = vmatpush1.msra.mxu0 0.0
    %276 = vmatprep.subr.mxu0 0.0
    %277 = vmatpush1.msra.mxu0 0.0
    %278 = vmatprep.subr.mxu0 0.0
    %279 = vmatpush1.msra.mxu0 0.0
    %280 = vmatprep.subr.mxu0 0.0
    %281 = vmatpush1.msra.mxu0 0.0
    %282 = vmatprep.subr.mxu0 0.0
    %283 = vmatpush1.msra.mxu0 0.0
    %284 = vmatprep.subr.mxu0 0.0
    %285 = vmatpush1.msra.mxu0 0.0
    %286 = vmatprep.subr.mxu0 0.0
    %287 = vmatpush1.msra.mxu0 0.0
    %288 = vmatprep.subr.mxu0 0.0
    %289 = vmatpush1.msra.mxu0 0.0
    %290 = vmatprep.subr.mxu0 0.0
    %291 = vmatpush1.msra.mxu0 0.0
    %292 = vmatprep.subr.mxu0 0.0
    %293 = vmatpush1.msra.mxu0 0.0
    %294 = vmatprep.subr.mxu0 0.0
    %295 = vmatpush1.msra.mxu0 0.0
    %296 = vmatprep.subr.mxu0 0.0
    %297 = vmatpush1.msra.mxu0 0.0
    %298 = vmatprep.mubr.f32.mxu0 0.0
    %299 = vmatmul.mubr.f32.gmra.mrb[0].mxu0 %v225
    %v300 = vpop.f32.mrb[0].mxu0
    %v301 = vadd.f32 %v221, %v300
    %v302 = vpop.f32.mrb[0].mxu0
    %303 = vmatprep.mubr.f32.mxu0 0.0
    %304 = vmatmul.mubr.f32.gmra.mrb[0].mxu0 %v228
    %v305 = vpop.f32.mrb[0].mxu0
    %v306 = vadd.f32 %v221, %v305
    %v307 = vpop.f32.mrb[0].mxu0
    %308 = vdwg.mxu0
    %v309 = vld [vmem:[%s1] sm:$0xff]
    %v310 = vld [vmem:[%s1 + $0x8] sm:$0xff]
    %v311 = vld [vmem:[#allocation8] sm:$0x3]
    %v312 = vld [vmem:[#allocation9] sm:$0x1]
    %v314 = vlaneseq
    %v315 = vshrl.u32 %v314, 7
    %v316 = vsub.s32 0, %v315
    %v317 = vrot.slane %v312, %v316
    %vm319 = vcmask 15360
    %v321 = vsel %vm319, %v309, 0
    %v324 = vsel %vm319, %v310, 0
    %vm326 = vcmask 1041408
    %v328 = vsel %vm326, %v311, 0
    %330 = vmatprep.subr.mxu0 0.0
    %331 = vmatpush1.msra.mxu0 %v328
    %332 = vmatprep.subr.mxu0 0.0
    %333 = vmatpush1.msra.mxu0 0.0
    %334 = vmatprep.subr.mxu0 0.0
    %335 = vmatpush1.msra.mxu0 0.0
    %336 = vmatprep.subr.mxu0 0.0
    %337 = vmatpush1.msra.mxu0 0.0
    %338 = vmatprep.subr.mxu0 0.0
    %339 = vmatpush1.msra.mxu0 0.0
    %340 = vmatprep.subr.mxu0 0.0
    %341 = vmatpush1.msra.mxu0 0.0
    %342 = vmatprep.subr.mxu0 0.0
    %343 = vmatpush1.msra.mxu0 0.0
    %344 = vmatprep.subr.mxu0 0.0
    %345 = vmatpush1.msra.mxu0 0.0
    %346 = vmatprep.subr.mxu0 0.0
    %347 = vmatpush1.msra.mxu0 0.0
    %348 = vmatprep.subr.mxu0 0.0
    %349 = vmatpush1.msra.mxu0 0.0
    %350 = vmatprep.subr.mxu0 0.0
    %351 = vmatpush1.msra.mxu0 0.0
    %352 = vmatprep.subr.mxu0 0.0
    %353 = vmatpush1.msra.mxu0 0.0
    %354 = vmatprep.subr.mxu0 0.0
    %355 = vmatpush1.msra.mxu0 0.0
    %356 = vmatprep.subr.mxu0 0.0
    %357 = vmatpush1.msra.mxu0 0.0
    %358 = vmatprep.subr.mxu0 0.0
    %359 = vmatpush1.msra.mxu0 0.0
    %360 = vmatprep.subr.mxu0 0.0
    %361 = vmatpush1.msra.mxu0 0.0
    %362 = vmatprep.subr.mxu0 0.0
    %363 = vmatpush1.msra.mxu0 0.0
    %364 = vmatprep.subr.mxu0 0.0
    %365 = vmatpush1.msra.mxu0 0.0
    %366 = vmatprep.subr.mxu0 0.0
    %367 = vmatpush1.msra.mxu0 0.0
    %368 = vmatprep.subr.mxu0 0.0
    %369 = vmatpush1.msra.mxu0 0.0
    %370 = vmatprep.subr.mxu0 0.0
    %371 = vmatpush1.msra.mxu0 0.0
    %372 = vmatprep.subr.mxu0 0.0
    %373 = vmatpush1.msra.mxu0 0.0
    %374 = vmatprep.subr.mxu0 0.0
    %375 = vmatpush1.msra.mxu0 0.0
    %376 = vmatprep.subr.mxu0 0.0
    %377 = vmatpush1.msra.mxu0 0.0
    %378 = vmatprep.subr.mxu0 0.0
    %379 = vmatpush1.msra.mxu0 0.0
    %380 = vmatprep.subr.mxu0 0.0
    %381 = vmatpush1.msra.mxu0 0.0
    %382 = vmatprep.subr.mxu0 0.0
    %383 = vmatpush1.msra.mxu0 0.0
    %384 = vmatprep.subr.mxu0 0.0
    %385 = vmatpush1.msra.mxu0 0.0
    %386 = vmatprep.subr.mxu0 0.0
    %387 = vmatpush1.msra.mxu0 0.0
    %388 = vmatprep.subr.mxu0 0.0
    %389 = vmatpush1.msra.mxu0 0.0
    %390 = vmatprep.subr.mxu0 0.0
    %391 = vmatpush1.msra.mxu0 0.0
    %392 = vmatprep.subr.mxu0 0.0
    %393 = vmatpush1.msra.mxu0 0.0
    %394 = vmatprep.mubr.f32.mxu0 0.0
    %395 = vmatmul.mubr.f32.gmra.mrb[0].mxu0 %v321
    %v396 = vpop.f32.mrb[0].mxu0
    %v397 = vadd.f32 %v317, %v396
    %v398 = vpop.f32.mrb[0].mxu0
    %399 = vmatprep.mubr.f32.mxu0 0.0
    %400 = vmatmul.mubr.f32.gmra.mrb[0].mxu0 %v324
    %v401 = vpop.f32.mrb[0].mxu0
    %v402 = vadd.f32 %v317, %v401
    %v403 = vpop.f32.mrb[0].mxu0
    %404 = vdwg.mxu0
    %v405 = vld [vmem:[#allocation11] sm:$0x1]
    %v406 = vld [vmem:[#allocation12] sm:$0x1]
    %vm407 = vcmask 171008
    %v408 = vsel %vm407, %v397, 0.0
    %409 = vadd.xlane.f32.xlu0 %v408
    %v410 = vpop.xlane.xlu0 %409
    %v411 = vsel %vm407, %v402, 0.0
    %412 = vadd.xlane.f32.xlu0 %v411
    %v413 = vpop.xlane.xlu0 %412
    %v414 = vrcp.pop 21.0
    %v415 = vmul.f32 %v410, %v414
    %v416 = vmul.f32 %v413, %v414
    %v417 = vsub.f32 %v397, %v415
    %v418 = vsub.f32 %v402, %v416
    %v419 = vmul.f32 %v417, %v417
    %v420 = vmul.f32 %v418, %v418
    %v421 = vsel %vm407, %v419, 0.0
    %422 = vadd.xlane.f32.xlu0 %v421
    %v423 = vpop.xlane.xlu0 %422
    %v424 = vsel %vm407, %v420, 0.0
    %425 = vadd.xlane.f32.xlu0 %v424
    %v426 = vpop.xlane.xlu0 %425
    %v427 = vmul.f32 %v423, %v414
    %v428 = vmul.f32 %v426, %v414
    %v429 = vadd.f32 %v427, 1e-05
    %v430 = vadd.f32 %v428, 1e-05
    %v431 = vrsqrt.pop %v429
    %v432 = vrsqrt.pop %v430
    %v433 = vmul.f32 %v417, %v431
    %v434 = vmul.f32 %v418, %v432
    %v436 = vlaneseq
    %v437 = vshrl.u32 %v436, 7
    %v438 = vsub.s32 0, %v437
    %v439 = vrot.slane %v405, %v438
    %v441 = vmul.f32 %v433, %v439
    %v442 = vmul.f32 %v434, %v439
    %v444 = vlaneseq
    %v445 = vshrl.u32 %v444, 7
    %v446 = vsub.s32 0, %v445
    %v447 = vrot.slane %v406, %v446
    %v449 = vadd.f32 %v441, %v447
    %v450 = vadd.f32 %v442, %v447
    %v451 = vmax.f32 %v301, 0.0
    %v452 = vmax.f32 %v306, 0.0
    %v453 = vmax.f32 %v449, 0.0
    %v454 = vmax.f32 %v450, 0.0
    %v455 = vld [vmem:[#allocation14] sm:$0xff]
    %v456 = vld [vmem:[#allocation14 + $0x8] sm:$0xff]
    %v457 = vld [vmem:[#allocation14 + $0x10] sm:$0xff]
    %v458 = vld [vmem:[#allocation14 + $0x18] sm:$0xff]
    %v459 = vld [vmem:[#allocation14 + $0x20] sm:$0xff]
    %v460 = vld [vmem:[#allocation14 + $0x28] sm:$0xff]
    %v461 = vld [vmem:[#allocation14 + $0x30] sm:$0xff]
    %v462 = vld [vmem:[#allocation14 + $0x38] sm:$0xff]
    %v463 = vld [vmem:[#allocation15] sm:$0xff]
    %v464 = vld [vmem:[#allocation15 + $0x8] sm:$0xff]
    %v465 = vld [vmem:[#allocation15 + $0x10] sm:$0x1f]
    %v467 = vsel %vm407, %v453, 0
    %v470 = vsel %vm407, %v454, 0
    %vm472 = vcmask 1044480
    %v474 = vsel %vm472, %v465, 0
    %476 = vmatprep.subr.mxu0 0.0
    %477 = vmatpush1.msra.mxu0 %v463
    %478 = vmatprep.subr.mxu0 0.0
    %479 = vmatpush1.msra.mxu0 %v464
    %480 = vmatprep.subr.mxu0 0.0
    %481 = vmatpush1.msra.mxu0 %v474
    %482 = vmatprep.subr.mxu0 0.0
    %483 = vmatpush1.msra.mxu0 0.0
    %484 = vmatprep.subr.mxu0 0.0
    %485 = vmatpush1.msra.mxu0 0.0
    %486 = vmatprep.subr.mxu0 0.0
    %487 = vmatpush1.msra.mxu0 0.0
    %488 = vmatprep.subr.mxu0 0.0
    %489 = vmatpush1.msra.mxu0 0.0
    %490 = vmatprep.subr.mxu0 0.0
    %491 = vmatpush1.msra.mxu0 0.0
    %492 = vmatprep.subr.mxu0 0.0
    %493 = vmatpush1.msra.mxu0 0.0
    %494 = vmatprep.subr.mxu0 0.0
    %495 = vmatpush1.msra.mxu0 0.0
    %496 = vmatprep.subr.mxu0 0.0
    %497 = vmatpush1.msra.mxu0 0.0
    %498 = vmatprep.subr.mxu0 0.0
    %499 = vmatpush1.msra.mxu0 0.0
    %500 = vmatprep.subr.mxu0 0.0
    %501 = vmatpush1.msra.mxu0 0.0
    %502 = vmatprep.subr.mxu0 0.0
    %503 = vmatpush1.msra.mxu0 0.0
    %504 = vmatprep.subr.mxu0 0.0
    %505 = vmatpush1.msra.mxu0 0.0
    %506 = vmatprep.subr.mxu0 0.0
    %507 = vmatpush1.msra.mxu0 0.0
    %508 = vmatprep.subr.mxu0 0.0
    %509 = vmatpush1.msra.mxu0 0.0
    %510 = vmatprep.subr.mxu0 0.0
    %511 = vmatpush1.msra.mxu0 0.0
    %512 = vmatprep.subr.mxu0 0.0
    %513 = vmatpush1.msra.mxu0 0.0
    %514 = vmatprep.subr.mxu0 0.0
    %515 = vmatpush1.msra.mxu0 0.0
    %516 = vmatprep.subr.mxu0 0.0
    %517 = vmatpush1.msra.mxu0 0.0
    %518 = vmatprep.subr.mxu0 0.0
    %519 = vmatpush1.msra.mxu0 0.0
    %520 = vmatprep.subr.mxu0 0.0
    %521 = vmatpush1.msra.mxu0 0.0
    %522 = vmatprep.subr.mxu0 0.0
    %523 = vmatpush1.msra.mxu0 0.0
    %524 = vmatprep.subr.mxu0 0.0
    %525 = vmatpush1.msra.mxu0 0.0
    %526 = vmatprep.subr.mxu0 0.0
    %527 = vmatpush1.msra.mxu0 0.0
    %528 = vmatprep.subr.mxu0 0.0
    %529 = vmatpush1.msra.mxu0 0.0
    %530 = vmatprep.subr.mxu0 0.0
    %531 = vmatpush1.msra.mxu0 0.0
    %532 = vmatprep.subr.mxu0 0.0
    %533 = vmatpush1.msra.mxu0 0.0
    %534 = vmatprep.subr.mxu0 0.0
    %535 = vmatpush1.msra.mxu0 0.0
    %536 = vmatprep.subr.mxu0 0.0
    %537 = vmatpush1.msra.mxu0 0.0
    %538 = vmatprep.subr.mxu0 0.0
    %539 = vmatpush1.msra.mxu0 0.0
    %540 = vmatprep.mubr.f32.mxu0 0.0
    %541 = vmatmul.mubr.f32.gmra.mrb[0].mxu0 %v467
    %v542 = vpop.f32.mrb[0].mxu0
    %v543 = vadd.f32 0.0, %v542
    %v544 = vpop.f32.mrb[0].mxu0
    %545 = vmatprep.mubr.f32.mxu0 0.0
    %546 = vmatmul.mubr.f32.gmra.mrb[0].mxu0 %v470
    %v547 = vpop.f32.mrb[0].mxu0
    %v548 = vadd.f32 0.0, %v547
    %v549 = vpop.f32.mrb[0].mxu0
    %550 = vdwg.mxu0
    %vm551 = vcmask 523264
    %v553 = vsel %vm551, %v451, 0
    %v556 = vsel %vm551, %v452, 0
    %558 = vmatprep.subr.mxu0 0.0
    %559 = vmatpush1.msra.mxu0 %v455
    %560 = vmatprep.subr.mxu0 0.0
    %561 = vmatpush1.msra.mxu0 %v456
    %562 = vmatprep.subr.mxu0 0.0
    %563 = vmatpush1.msra.mxu0 %v457
    %564 = vmatprep.subr.mxu0 0.0
    %565 = vmatpush1.msra.mxu0 %v458
    %566 = vmatprep.subr.mxu0 0.0
    %567 = vmatpush1.msra.mxu0 %v459
    %568 = vmatprep.subr.mxu0 0.0
    %569 = vmatpush1.msra.mxu0 %v460
    %570 = vmatprep.subr.mxu0 0.0
    %571 = vmatpush1.msra.mxu0 %v461
    %572 = vmatprep.subr.mxu0 0.0
    %573 = vmatpush1.msra.mxu0 %v462
    %574 = vmatprep.subr.mxu0 0.0
    %575 = vmatpush1.msra.mxu0 0.0
    %576 = vmatprep.subr.mxu0 0.0
    %577 = vmatpush1.msra.mxu0 0.0
    %578 = vmatprep.subr.mxu0 0.0
    %579 = vmatpush1.msra.mxu0 0.0
    %580 = vmatprep.subr.mxu0 0.0
    %581 = vmatpush1.msra.mxu0 0.0
    %582 = vmatprep.subr.mxu0 0.0
    %583 = vmatpush1.msra.mxu0 0.0
    %584 = vmatprep.subr.mxu0 0.0
    %585 = vmatpush1.msra.mxu0 0.0
    %586 = vmatprep.subr.mxu0 0.0
    %587 = vmatpush1.msra.mxu0 0.0
    %588 = vmatprep.subr.mxu0 0.0
    %589 = vmatpush1.msra.mxu0 0.0
    %590 = vmatprep.subr.mxu0 0.0
    %591 = vmatpush1.msra.mxu0 0.0
    %592 = vmatprep.subr.mxu0 0.0
    %593 = vmatpush1.msra.mxu0 0.0
    %594 = vmatprep.subr.mxu0 0.0
    %595 = vmatpush1.msra.mxu0 0.0
    %596 = vmatprep.subr.mxu0 0.0
    %597 = vmatpush1.msra.mxu0 0.0
    %598 = vmatprep.subr.mxu0 0.0
    %599 = vmatpush1.msra.mxu0 0.0
    %600 = vmatprep.subr.mxu0 0.0
    %601 = vmatpush1.msra.mxu0 0.0
    %602 = vmatprep.subr.mxu0 0.0
    %603 = vmatpush1.msra.mxu0 0.0
    %604 = vmatprep.subr.mxu0 0.0
    %605 = vmatpush1.msra.mxu0 0.0
    %606 = vmatprep.subr.mxu0 0.0
    %607 = vmatpush1.msra.mxu0 0.0
    %608 = vmatprep.subr.mxu0 0.0
    %609 = vmatpush1.msra.mxu0 0.0
    %610 = vmatprep.subr.mxu0 0.0
    %611 = vmatpush1.msra.mxu0 0.0
    %612 = vmatprep.subr.mxu0 0.0
    %613 = vmatpush1.msra.mxu0 0.0
    %614 = vmatprep.subr.mxu0 0.0
    %615 = vmatpush1.msra.mxu0 0.0
    %616 = vmatprep.subr.mxu0 0.0
    %617 = vmatpush1.msra.mxu0 0.0
    %618 = vmatprep.subr.mxu0 0.0
    %619 = vmatpush1.msra.mxu0 0.0
    %620 = vmatprep.subr.mxu0 0.0
    %621 = vmatpush1.msra.mxu0 0.0
    %622 = vmatprep.mubr.f32.mxu0 0.0
    %623 = vmatmul.mubr.f32.gmra.mrb[0].mxu0 %v553
    %v624 = vpop.f32.mrb[0].mxu0
    %v625 = vadd.f32 %v543, %v624
    %v626 = vpop.f32.mrb[0].mxu0
    %627 = vmatprep.mubr.f32.mxu0 0.0
    %628 = vmatmul.mubr.f32.gmra.mrb[0].mxu0 %v556
    %v629 = vpop.f32.mrb[0].mxu0
    %v630 = vadd.f32 %v548, %v629
    %v631 = vpop.f32.mrb[0].mxu0
    %632 = vdwg.mxu0
    %v633 = vld [vmem:[%s10] sm:$0x1]
    %v635 = vlaneseq
    %v636 = vshrl.u32 %v635, 7
    %v637 = vsub.s32 0, %v636
    %v638 = vrot.slane %v633, %v637
    %v640 = vadd.f32 %v625, %v638
    %v641 = vadd.f32 %v630, %v638
    %v642 = vld [vmem:[%s11] sm:$0x1]
    %v643 = vld [vmem:[%s12] sm:$0x1]
    %v644 = vsel %vm551, %v640, 0.0
    %645 = vadd.xlane.f32.xlu0 %v644
    %v646 = vpop.xlane.xlu0 %645
    %v647 = vsel %vm551, %v641, 0.0
    %648 = vadd.xlane.f32.xlu0 %v647
    %v649 = vpop.xlane.xlu0 %648
    %v650 = vrcp.pop 64.0
    %v651 = vmul.f32 %v646, %v650
    %v652 = vmul.f32 %v649, %v650
    %v653 = vsub.f32 %v640, %v651
    %v654 = vsub.f32 %v641, %v652
    %v655 = vmul.f32 %v653, %v653
    %v656 = vmul.f32 %v654, %v654
    %v657 = vsel %vm551, %v655, 0.0
    %658 = vadd.xlane.f32.xlu0 %v657
    %v659 = vpop.xlane.xlu0 %658
    %v660 = vsel %vm551, %v656, 0.0
    %661 = vadd.xlane.f32.xlu0 %v660
    %v662 = vpop.xlane.xlu0 %661
    %v663 = vmul.f32 %v659, %v650
    %v664 = vmul.f32 %v662, %v650
    %v665 = vadd.f32 %v663, 1e-05
    %v666 = vadd.f32 %v664, 1e-05
    %v667 = vrsqrt.pop %v665
    %v668 = vrsqrt.pop %v666
    %v669 = vmul.f32 %v653, %v667
    %v670 = vmul.f32 %v654, %v668
    %v672 = vlaneseq
    %v673 = vshrl.u32 %v672, 7
    %v674 = vsub.s32 0, %v673
    %v675 = vrot.slane %v642, %v674
    %v677 = vmul.f32 %v669, %v675
    %v678 = vmul.f32 %v670, %v675
    %v680 = vlaneseq
    %v681 = vshrl.u32 %v680, 7
    %v682 = vsub.s32 0, %v681
    %v683 = vrot.slane %v643, %v682
    %v685 = vadd.f32 %v677, %v683
    %v686 = vadd.f32 %v678, %v683
    %v687 = vld [vmem:[%s13] sm:$0xff]
    %v688 = vld [vmem:[%s13 + $0x8] sm:$0xff]
    %v689 = vld [vmem:[%s13 + $0x10] sm:$0xff]
    %v690 = vld [vmem:[%s13 + $0x18] sm:$0xff]
    %v691 = vld [vmem:[%s13 + $0x20] sm:$0xff]
    %v692 = vld [vmem:[%s13 + $0x28] sm:$0xff]
    %v693 = vld [vmem:[%s13 + $0x30] sm:$0xff]
    %v694 = vld [vmem:[%s13 + $0x38] sm:$0xff]
    %v695 = vld [vmem:[%s13 + $0x40] sm:$0xff]
    %v696 = vld [vmem:[%s13 + $0x48] sm:$0xff]
    %v697 = vld [vmem:[%s13 + $0x50] sm:$0xff]
    %v698 = vld [vmem:[%s13 + $0x58] sm:$0xff]
    %v699 = vld [vmem:[%s13 + $0x60] sm:$0xff]
    %v700 = vld [vmem:[%s13 + $0x68] sm:$0xff]
    %v701 = vld [vmem:[%s13 + $0x70] sm:$0xff]
    %v702 = vld [vmem:[%s13 + $0x78] sm:$0xff]
    %v703 = vld [vmem:[%s15] sm:$0x3]
    %v705 = vlaneseq
    %v706 = vshrl.u32 %v705, 7
    %v707 = vsub.s32 0, %v706
    %v708 = vrot.slane %v703, %v707
    %v709 = vlaneseq
    %v710 = vshrl.u32 %v709, 7
    %v711 = vsub.s32 1, %v710
    %v712 = vrot.slane %v703, %v711
    %v716 = vsel %vm551, %v685, 0
    %v719 = vsel %vm551, %v686, 0
    %721 = vmatprep.subr.mxu0 %v688
    %722 = vmatpush1.msra.mxu0 %v687
    %723 = vmatprep.subr.mxu0 %v690
    %724 = vmatpush1.msra.mxu0 %v689
    %725 = vmatprep.subr.mxu0 %v692
    %726 = vmatpush1.msra.mxu0 %v691
    %727 = vmatprep.subr.mxu0 %v694
    %728 = vmatpush1.msra.mxu0 %v693
    %729 = vmatprep.subr.mxu0 %v696
    %730 = vmatpush1.msra.mxu0 %v695
    %731 = vmatprep.subr.mxu0 %v698
    %732 = vmatpush1.msra.mxu0 %v697
    %733 = vmatprep.subr.mxu0 %v700
    %734 = vmatpush1.msra.mxu0 %v699
    %735 = vmatprep.subr.mxu0 %v702
    %736 = vmatpush1.msra.mxu0 %v701
    %737 = vmatprep.subr.mxu0 0.0
    %738 = vmatpush1.msra.mxu0 0.0
    %739 = vmatprep.subr.mxu0 0.0
    %740 = vmatpush1.msra.mxu0 0.0
    %741 = vmatprep.subr.mxu0 0.0
    %742 = vmatpush1.msra.mxu0 0.0
    %743 = vmatprep.subr.mxu0 0.0
    %744 = vmatpush1.msra.mxu0 0.0
    %745 = vmatprep.subr.mxu0 0.0
    %746 = vmatpush1.msra.mxu0 0.0
    %747 = vmatprep.subr.mxu0 0.0
    %748 = vmatpush1.msra.mxu0 0.0
    %749 = vmatprep.subr.mxu0 0.0
    %750 = vmatpush1.msra.mxu0 0.0
    %751 = vmatprep.subr.mxu0 0.0
    %752 = vmatpush1.msra.mxu0 0.0
    %753 = vmatprep.subr.mxu0 0.0
    %754 = vmatpush1.msra.mxu0 0.0
    %755 = vmatprep.subr.mxu0 0.0
    %756 = vmatpush1.msra.mxu0 0.0
    %757 = vmatprep.subr.mxu0 0.0
    %758 = vmatpush1.msra.mxu0 0.0
    %759 = vmatprep.subr.mxu0 0.0
    %760 = vmatpush1.msra.mxu0 0.0
    %761 = vmatprep.subr.mxu0 0.0
    %762 = vmatpush1.msra.mxu0 0.0
    %763 = vmatprep.subr.mxu0 0.0
    %764 = vmatpush1.msra.mxu0 0.0
    %765 = vmatprep.subr.mxu0 0.0
    %766 = vmatpush1.msra.mxu0 0.0
    %767 = vmatprep.subr.mxu0 0.0
    %768 = vmatpush1.msra.mxu0 0.0
    %769 = vmatprep.subr.mxu0 0.0
    %770 = vmatpush1.msra.mxu0 0.0
    %771 = vmatprep.subr.mxu0 0.0
    %772 = vmatpush1.msra.mxu0 0.0
    %773 = vmatprep.subr.mxu0 0.0
    %774 = vmatpush1.msra.mxu0 0.0
    %775 = vmatprep.subr.mxu0 0.0
    %776 = vmatpush1.msra.mxu0 0.0
    %777 = vmatprep.subr.mxu0 0.0
    %778 = vmatpush1.msra.mxu0 0.0
    %779 = vmatprep.subr.mxu0 0.0
    %780 = vmatpush1.msra.mxu0 0.0
    %781 = vmatprep.subr.mxu0 0.0
    %782 = vmatpush1.msra.mxu0 0.0
    %783 = vmatprep.subr.mxu0 0.0
    %784 = vmatpush1.msra.mxu0 0.0
    %785 = vmatprep.mubr.f32.mxu0 0.0
    %786 = vmatmul.mubr.f32.gmra.mrb[0].mxu0 %v716
    %v787 = vpop.f32.mrb[0].mxu0
    %v788 = vadd.f32 %v708, %v787
    %v789 = vpop.f32.mrb[0].mxu0
    %v790 = vadd.f32 %v712, %v789
    %791 = vmatprep.mubr.f32.mxu0 0.0
    %792 = vmatmul.mubr.f32.gmra.mrb[0].mxu0 %v719
    %v793 = vpop.f32.mrb[0].mxu0
    %v794 = vadd.f32 %v708, %v793
    %v795 = vpop.f32.mrb[0].mxu0
    %v796 = vadd.f32 %v712, %v795
    %797 = vdwg.mxu0
    %v798 = vld [vmem:[%s14] sm:$0xff]
    %v799 = vld [vmem:[%s14 + $0x8] sm:$0xff]
    %v800 = vld [vmem:[%s14 + $0x10] sm:$0xff]
    %v801 = vld [vmem:[%s14 + $0x18] sm:$0xff]
    %v802 = vld [vmem:[%s14 + $0x20] sm:$0xff]
    %v803 = vld [vmem:[%s14 + $0x28] sm:$0xff]
    %v804 = vld [vmem:[%s14 + $0x30] sm:$0xff]
    %v805 = vld [vmem:[%s14 + $0x38] sm:$0xff]
    %v806 = vld [vmem:[%s14 + $0x40] sm:$0xff]
    %v807 = vld [vmem:[%s14 + $0x48] sm:$0xff]
    %v808 = vld [vmem:[%s14 + $0x50] sm:$0xff]
    %v809 = vld [vmem:[%s14 + $0x58] sm:$0xff]
    %v810 = vld [vmem:[%s14 + $0x60] sm:$0xff]
    %v811 = vld [vmem:[%s14 + $0x68] sm:$0xff]
    %v812 = vld [vmem:[%s14 + $0x70] sm:$0xff]
    %v813 = vld [vmem:[%s14 + $0x78] sm:$0xff]
    %v814 = vld [vmem:[%s16] sm:$0x3]
    %v816 = vlaneseq
    %v817 = vshrl.u32 %v816, 7
    %v818 = vsub.s32 0, %v817
    %v819 = vrot.slane %v814, %v818
    %v820 = vlaneseq
    %v821 = vshrl.u32 %v820, 7
    %v822 = vsub.s32 1, %v821
    %v823 = vrot.slane %v814, %v822
    %v827 = vsel %vm551, 0.0, 0
    %829 = vmatprep.subr.mxu0 %v799
    %830 = vmatpush1.msra.mxu0 %v798
    %831 = vmatprep.subr.mxu0 %v801
    %832 = vmatpush1.msra.mxu0 %v800
    %833 = vmatprep.subr.mxu0 %v803
    %834 = vmatpush1.msra.mxu0 %v802
    %835 = vmatprep.subr.mxu0 %v805
    %836 = vmatpush1.msra.mxu0 %v804
    %837 = vmatprep.subr.mxu0 %v807
    %838 = vmatpush1.msra.mxu0 %v806
    %839 = vmatprep.subr.mxu0 %v809
    %840 = vmatpush1.msra.mxu0 %v808
    %841 = vmatprep.subr.mxu0 %v811
    %842 = vmatpush1.msra.mxu0 %v810
    %843 = vmatprep.subr.mxu0 %v813
    %844 = vmatpush1.msra.mxu0 %v812
    %845 = vmatprep.subr.mxu0 0.0
    %846 = vmatpush1.msra.mxu0 0.0
    %847 = vmatprep.subr.mxu0 0.0
    %848 = vmatpush1.msra.mxu0 0.0
    %849 = vmatprep.subr.mxu0 0.0
    %850 = vmatpush1.msra.mxu0 0.0
    %851 = vmatprep.subr.mxu0 0.0
    %852 = vmatpush1.msra.mxu0 0.0
    %853 = vmatprep.subr.mxu0 0.0
    %854 = vmatpush1.msra.mxu0 0.0
    %855 = vmatprep.subr.mxu0 0.0
    %856 = vmatpush1.msra.mxu0 0.0
    %857 = vmatprep.subr.mxu0 0.0
    %858 = vmatpush1.msra.mxu0 0.0
    %859 = vmatprep.subr.mxu0 0.0
    %860 = vmatpush1.msra.mxu0 0.0
    %861 = vmatprep.subr.mxu0 0.0
    %862 = vmatpush1.msra.mxu0 0.0
    %863 = vmatprep.subr.mxu0 0.0
    %864 = vmatpush1.msra.mxu0 0.0
    %865 = vmatprep.subr.mxu0 0.0
    %866 = vmatpush1.msra.mxu0 0.0
    %867 = vmatprep.subr.mxu0 0.0
    %868 = vmatpush1.msra.mxu0 0.0
    %869 = vmatprep.subr.mxu0 0.0
    %870 = vmatpush1.msra.mxu0 0.0
    %871 = vmatprep.subr.mxu0 0.0
    %872 = vmatpush1.msra.mxu0 0.0
    %873 = vmatprep.subr.mxu0 0.0
    %874 = vmatpush1.msra.mxu0 0.0
    %875 = vmatprep.subr.mxu0 0.0
    %876 = vmatpush1.msra.mxu0 0.0
    %877 = vmatprep.subr.mxu0 0.0
    %878 = vmatpush1.msra.mxu0 0.0
    %879 = vmatprep.subr.mxu0 0.0
    %880 = vmatpush1.msra.mxu0 0.0
    %881 = vmatprep.subr.mxu0 0.0
    %882 = vmatpush1.msra.mxu0 0.0
    %883 = vmatprep.subr.mxu0 0.0
    %884 = vmatpush1.msra.mxu0 0.0
    %885 = vmatprep.subr.mxu0 0.0
    %886 = vmatpush1.msra.mxu0 0.0
    %887 = vmatprep.subr.mxu0 0.0
    %888 = vmatpush1.msra.mxu0 0.0
    %889 = vmatprep.subr.mxu0 0.0
    %890 = vmatpush1.msra.mxu0 0.0
    %891 = vmatprep.subr.mxu0 0.0
    %892 = vmatpush1.msra.mxu0 0.0
    %893 = vmatprep.mubr.f32.mxu0 0.0
    %894 = vmatmul.mubr.f32.gmra.mrb[0].mxu0 %v827
    %v895 = vpop.f32.mrb[0].mxu0
    %v896 = vadd.f32 %v819, %v895
    %v897 = vpop.f32.mrb[0].mxu0
    %v898 = vadd.f32 %v823, %v897
    %899 = vdwg.mxu0
    %v900 = vadd.f32 %v788, %v896
    %v901 = vxor.u32 %v900, 2147483648
    %v902 = vmul.f32 %v901, 1.442695
    %v903 = vpow.pop %v902
    %v904 = vadd.f32 %v903, 1.0
    %v905 = vrcp.pop %v904
    %v906 = vmul.f32 1.0, %v905
    %v907 = vmul.f32 %v906, %v898
    %v908 = vadd.f32 %v790, %v907
    %v909 = vtanh.pop %v908
    %v910 = vsub.f32 1.0, %v906
    %912 = vrot.lane.b32.xlu0 %v909, 64
    %v913 = vpop.permute.xlu0 %912
    %v915 = vmul.f32 %v910, %v913
    %v916 = vmul.f32 %v906, 0.0
    %v917 = vadd.f32 %v915, %v916
    %919 = vrot.lane.b32.xlu0 %v917, 64
    %v920 = vpop.permute.xlu0 %919
    %v921 = vsel %vm551, %v920, 0
    %923 = vmatprep.subr.mxu0 %v799
    %924 = vmatpush1.msra.mxu0 %v798
    %925 = vmatprep.subr.mxu0 %v801
    %926 = vmatpush1.msra.mxu0 %v800
    %927 = vmatprep.subr.mxu0 %v803
    %928 = vmatpush1.msra.mxu0 %v802
    %929 = vmatprep.subr.mxu0 %v805
    %930 = vmatpush1.msra.mxu0 %v804
    %931 = vmatprep.subr.mxu0 %v807
    %932 = vmatpush1.msra.mxu0 %v806
    %933 = vmatprep.subr.mxu0 %v809
    %934 = vmatpush1.msra.mxu0 %v808
    %935 = vmatprep.subr.mxu0 %v811
    %936 = vmatpush1.msra.mxu0 %v810
    %937 = vmatprep.subr.mxu0 %v813
    %938 = vmatpush1.msra.mxu0 %v812
    %939 = vmatprep.subr.mxu0 0.0
    %940 = vmatpush1.msra.mxu0 0.0
    %941 = vmatprep.subr.mxu0 0.0
    %942 = vmatpush1.msra.mxu0 0.0
    %943 = vmatprep.subr.mxu0 0.0
    %944 = vmatpush1.msra.mxu0 0.0
    %945 = vmatprep.subr.mxu0 0.0
    %946 = vmatpush1.msra.mxu0 0.0
    %947 = vmatprep.subr.mxu0 0.0
    %948 = vmatpush1.msra.mxu0 0.0
    %949 = vmatprep.subr.mxu0 0.0
    %950 = vmatpush1.msra.mxu0 0.0
    %951 = vmatprep.subr.mxu0 0.0
    %952 = vmatpush1.msra.mxu0 0.0
    %953 = vmatprep.subr.mxu0 0.0
    %954 = vmatpush1.msra.mxu0 0.0
    %955 = vmatprep.subr.mxu0 0.0
    %956 = vmatpush1.msra.mxu0 0.0
    %957 = vmatprep.subr.mxu0 0.0
    %958 = vmatpush1.msra.mxu0 0.0
    %959 = vmatprep.subr.mxu0 0.0
    %960 = vmatpush1.msra.mxu0 0.0
    %961 = vmatprep.subr.mxu0 0.0
    %962 = vmatpush1.msra.mxu0 0.0
    %963 = vmatprep.subr.mxu0 0.0
    %964 = vmatpush1.msra.mxu0 0.0
    %965 = vmatprep.subr.mxu0 0.0
    %966 = vmatpush1.msra.mxu0 0.0
    %967 = vmatprep.subr.mxu0 0.0
    %968 = vmatpush1.msra.mxu0 0.0
    %969 = vmatprep.subr.mxu0 0.0
    %970 = vmatpush1.msra.mxu0 0.0
    %971 = vmatprep.subr.mxu0 0.0
    %972 = vmatpush1.msra.mxu0 0.0
    %973 = vmatprep.subr.mxu0 0.0
    %974 = vmatpush1.msra.mxu0 0.0
    %975 = vmatprep.subr.mxu0 0.0
    %976 = vmatpush1.msra.mxu0 0.0
    %977 = vmatprep.subr.mxu0 0.0
    %978 = vmatpush1.msra.mxu0 0.0
    %979 = vmatprep.subr.mxu0 0.0
    %980 = vmatpush1.msra.mxu0 0.0
    %981 = vmatprep.subr.mxu0 0.0
    %982 = vmatpush1.msra.mxu0 0.0
    %983 = vmatprep.subr.mxu0 0.0
    %984 = vmatpush1.msra.mxu0 0.0
    %985 = vmatprep.subr.mxu0 0.0
    %986 = vmatpush1.msra.mxu0 0.0
    %987 = vmatprep.mubr.f32.mxu0 0.0
    %988 = vmatmul.mubr.f32.gmra.mrb[0].mxu0 %v921
    %v989 = vpop.f32.mrb[0].mxu0
    %v990 = vadd.f32 %v819, %v989
    %v991 = vpop.f32.mrb[0].mxu0
    %v992 = vadd.f32 %v823, %v991
    %993 = vdwg.mxu0
    %v995 = vrot.slane %v990, 6
    %v997 = vadd.f32 %v788, %v995
    %v998 = vxor.u32 %v997, 2147483648
    %v999 = vmul.f32 %v998, 1.442695
    %v1000 = vpow.pop %v999
    %v1001 = vadd.f32 %v1000, 1.0
    %v1002 = vrcp.pop %v1001
    %v1003 = vmul.f32 1.0, %v1002
    %v1005 = vrot.slane %v992, 6
    %v1007 = vmul.f32 %v1003, %v1005
    %v1008 = vadd.f32 %v790, %v1007
    %v1009 = vtanh.pop %v1008
    %v1010 = vsub.f32 1.0, %v1003
    %1012 = vrot.lane.b32.xlu0 %v1009, 64
    %v1013 = vpop.permute.xlu0 %1012
    %v1015 = vmul.f32 %v1010, %v1013
    %v1016 = vrot.slane %v917, 6
    %v1018 = vmul.f32 %v1003, %v1016
    %v1019 = vadd.f32 %v1015, %v1018
    %v1021 = vrot.slane %v1019, 2
    %1022 = vrot.lane.b32.xlu0 %v1021, 64
    %v1023 = vpop.permute.xlu0 %1022
    %v1024 = vsel %vm551, %v1023, 0
    %1026 = vmatprep.subr.mxu0 %v799
    %1027 = vmatpush1.msra.mxu0 %v798
    %1028 = vmatprep.subr.mxu0 %v801
    %1029 = vmatpush1.msra.mxu0 %v800
    %1030 = vmatprep.subr.mxu0 %v803
    %1031 = vmatpush1.msra.mxu0 %v802
    %1032 = vmatprep.subr.mxu0 %v805
    %1033 = vmatpush1.msra.mxu0 %v804
    %1034 = vmatprep.subr.mxu0 %v807
    %1035 = vmatpush1.msra.mxu0 %v806
    %1036 = vmatprep.subr.mxu0 %v809
    %1037 = vmatpush1.msra.mxu0 %v808
    %1038 = vmatprep.subr.mxu0 %v811
    %1039 = vmatpush1.msra.mxu0 %v810
    %1040 = vmatprep.subr.mxu0 %v813
    %1041 = vmatpush1.msra.mxu0 %v812
    %1042 = vmatprep.subr.mxu0 0.0
    %1043 = vmatpush1.msra.mxu0 0.0
    %1044 = vmatprep.subr.mxu0 0.0
    %1045 = vmatpush1.msra.mxu0 0.0
    %1046 = vmatprep.subr.mxu0 0.0
    %1047 = vmatpush1.msra.mxu0 0.0
    %1048 = vmatprep.subr.mxu0 0.0
    %1049 = vmatpush1.msra.mxu0 0.0
    %1050 = vmatprep.subr.mxu0 0.0
    %1051 = vmatpush1.msra.mxu0 0.0
    %1052 = vmatprep.subr.mxu0 0.0
    %1053 = vmatpush1.msra.mxu0 0.0
    %1054 = vmatprep.subr.mxu0 0.0
    %1055 = vmatpush1.msra.mxu0 0.0
    %1056 = vmatprep.subr.mxu0 0.0
    %1057 = vmatpush1.msra.mxu0 0.0
    %1058 = vmatprep.subr.mxu0 0.0
    %1059 = vmatpush1.msra.mxu0 0.0
    %1060 = vmatprep.subr.mxu0 0.0
    %1061 = vmatpush1.msra.mxu0 0.0
    %1062 = vmatprep.subr.mxu0 0.0
    %1063 = vmatpush1.msra.mxu0 0.0
    %1064 = vmatprep.subr.mxu0 0.0
    %1065 = vmatpush1.msra.mxu0 0.0
    %1066 = vmatprep.subr.mxu0 0.0
    %1067 = vmatpush1.msra.mxu0 0.0
    %1068 = vmatprep.subr.mxu0 0.0
    %1069 = vmatpush1.msra.mxu0 0.0
    %1070 = vmatprep.subr.mxu0 0.0
    %1071 = vmatpush1.msra.mxu0 0.0
    %1072 = vmatprep.subr.mxu0 0.0
    %1073 = vmatpush1.msra.mxu0 0.0
    %1074 = vmatprep.subr.mxu0 0.0
    %1075 = vmatpush1.msra.mxu0 0.0
    %1076 = vmatprep.subr.mxu0 0.0
    %1077 = vmatpush1.msra.mxu0 0.0
    %1078 = vmatprep.subr.mxu0 0.0
    %1079 = vmatpush1.msra.mxu0 0.0
    %1080 = vmatprep.subr.mxu0 0.0
    %1081 = vmatpush1.msra.mxu0 0.0
    %1082 = vmatprep.subr.mxu0 0.0
    %1083 = vmatpush1.msra.mxu0 0.0
    %1084 = vmatprep.subr.mxu0 0.0
    %1085 = vmatpush1.msra.mxu0 0.0
    %1086 = vmatprep.subr.mxu0 0.0
    %1087 = vmatpush1.msra.mxu0 0.0
    %1088 = vmatprep.subr.mxu0 0.0
    %1089 = vmatpush1.msra.mxu0 0.0
    %1090 = vmatprep.mubr.f32.mxu0 0.0
    %1091 = vmatmul.mubr.f32.gmra.mrb[0].mxu0 %v1024
    %v1092 = vpop.f32.mrb[0].mxu0
    %v1093 = vadd.f32 %v819, %v1092
    %v1094 = vpop.f32.mrb[0].mxu0
    %v1095 = vadd.f32 %v823, %v1094
    %1096 = vdwg.mxu0
    %v1098 = vrot.slane %v1093, 4
    %v1100 = vadd.f32 %v788, %v1098
    %v1101 = vxor.u32 %v1100, 2147483648
    %v1102 = vmul.f32 %v1101, 1.442695
    %v1103 = vpow.pop %v1102
    %v1104 = vadd.f32 %v1103, 1.0
    %v1105 = vrcp.pop %v1104
    %v1106 = vmul.f32 1.0, %v1105
    %v1108 = vrot.slane %v1095, 4
    %v1110 = vmul.f32 %v1106, %v1108
    %v1111 = vadd.f32 %v790, %v1110
    %v1112 = vtanh.pop %v1111
    %v1113 = vsub.f32 1.0, %v1106
    %1115 = vrot.lane.b32.xlu0 %v1112, 64
    %v1116 = vpop.permute.xlu0 %1115
    %v1118 = vmul.f32 %v1113, %v1116
    %v1119 = vrot.slane %v1019, 6
    %v1121 = vmul.f32 %v1106, %v1119
    %v1122 = vadd.f32 %v1118, %v1121
    %v1124 = vrot.slane %v1122, 4
    %1125 = vrot.lane.b32.xlu0 %v1124, 64
    %v1126 = vpop.permute.xlu0 %1125
    %v1127 = vsel %vm551, %v1126, 0
    %1129 = vmatprep.subr.mxu0 %v799
    %1130 = vmatpush1.msra.mxu0 %v798
    %1131 = vmatprep.subr.mxu0 %v801
    %1132 = vmatpush1.msra.mxu0 %v800
    %1133 = vmatprep.subr.mxu0 %v803
    %1134 = vmatpush1.msra.mxu0 %v802
    %1135 = vmatprep.subr.mxu0 %v805
    %1136 = vmatpush1.msra.mxu0 %v804
    %1137 = vmatprep.subr.mxu0 %v807
    %1138 = vmatpush1.msra.mxu0 %v806
    %1139 = vmatprep.subr.mxu0 %v809
    %1140 = vmatpush1.msra.mxu0 %v808
    %1141 = vmatprep.subr.mxu0 %v811
    %1142 = vmatpush1.msra.mxu0 %v810
    %1143 = vmatprep.subr.mxu0 %v813
    %1144 = vmatpush1.msra.mxu0 %v812
    %1145 = vmatprep.subr.mxu0 0.0
    %1146 = vmatpush1.msra.mxu0 0.0
    %1147 = vmatprep.subr.mxu0 0.0
    %1148 = vmatpush1.msra.mxu0 0.0
    %1149 = vmatprep.subr.mxu0 0.0
    %1150 = vmatpush1.msra.mxu0 0.0
    %1151 = vmatprep.subr.mxu0 0.0
    %1152 = vmatpush1.msra.mxu0 0.0
    %1153 = vmatprep.subr.mxu0 0.0
    %1154 = vmatpush1.msra.mxu0 0.0
    %1155 = vmatprep.subr.mxu0 0.0
    %1156 = vmatpush1.msra.mxu0 0.0
    %1157 = vmatprep.subr.mxu0 0.0
    %1158 = vmatpush1.msra.mxu0 0.0
    %1159 = vmatprep.subr.mxu0 0.0
    %1160 = vmatpush1.msra.mxu0 0.0
    %1161 = vmatprep.subr.mxu0 0.0
    %1162 = vmatpush1.msra.mxu0 0.0
    %1163 = vmatprep.subr.mxu0 0.0
    %1164 = vmatpush1.msra.mxu0 0.0
    %1165 = vmatprep.subr.mxu0 0.0
    %1166 = vmatpush1.msra.mxu0 0.0
    %1167 = vmatprep.subr.mxu0 0.0
    %1168 = vmatpush1.msra.mxu0 0.0
    %1169 = vmatprep.subr.mxu0 0.0
    %1170 = vmatpush1.msra.mxu0 0.0
    %1171 = vmatprep.subr.mxu0 0.0
    %1172 = vmatpush1.msra.mxu0 0.0
    %1173 = vmatprep.subr.mxu0 0.0
    %1174 = vmatpush1.msra.mxu0 0.0
    %1175 = vmatprep.subr.mxu0 0.0
    %1176 = vmatpush1.msra.mxu0 0.0
    %1177 = vmatprep.subr.mxu0 0.0
    %1178 = vmatpush1.msra.mxu0 0.0
    %1179 = vmatprep.subr.mxu0 0.0
    %1180 = vmatpush1.msra.mxu0 0.0
    %1181 = vmatprep.subr.mxu0 0.0
    %1182 = vmatpush1.msra.mxu0 0.0
    %1183 = vmatprep.subr.mxu0 0.0
    %1184 = vmatpush1.msra.mxu0 0.0
    %1185 = vmatprep.subr.mxu0 0.0
    %1186 = vmatpush1.msra.mxu0 0.0
    %1187 = vmatprep.subr.mxu0 0.0
    %1188 = vmatpush1.msra.mxu0 0.0
    %1189 = vmatprep.subr.mxu0 0.0
    %1190 = vmatpush1.msra.mxu0 0.0
    %1191 = vmatprep.subr.mxu0 0.0
    %1192 = vmatpush1.msra.mxu0 0.0
    %1193 = vmatprep.mubr.f32.mxu0 0.0
    %1194 = vmatmul.mubr.f32.gmra.mrb[0].mxu0 %v1127
    %v1195 = vpop.f32.mrb[0].mxu0
    %v1196 = vadd.f32 %v819, %v1195
    %v1197 = vpop.f32.mrb[0].mxu0
    %v1198 = vadd.f32 %v823, %v1197
    %1199 = vdwg.mxu0
    %v1201 = vrot.slane %v1196, 2
    %v1203 = vadd.f32 %v788, %v1201
    %v1204 = vxor.u32 %v1203, 2147483648
    %v1205 = vmul.f32 %v1204, 1.442695
    %v1206 = vpow.pop %v1205
    %v1207 = vadd.f32 %v1206, 1.0
    %v1208 = vrcp.pop %v1207
    %v1209 = vmul.f32 1.0, %v1208
    %v1211 = vrot.slane %v1198, 2
    %v1213 = vmul.f32 %v1209, %v1211
    %v1214 = vadd.f32 %v790, %v1213
    %v1215 = vtanh.pop %v1214
    %v1216 = vsub.f32 1.0, %v1209
    %1218 = vrot.lane.b32.xlu0 %v1215, 64
    %v1219 = vpop.permute.xlu0 %1218
    %v1221 = vmul.f32 %v1216, %v1219
    %v1222 = vrot.slane %v1122, 6
    %v1224 = vmul.f32 %v1209, %v1222
    %v1225 = vadd.f32 %v1221, %v1224
    %v1227 = vrot.slane %v1225, 6
    %1228 = vrot.lane.b32.xlu0 %v1227, 64
    %v1229 = vpop.permute.xlu0 %1228
    %v1230 = vsel %vm551, %v1229, 0
    %1232 = vmatprep.subr.mxu0 %v799
    %1233 = vmatpush1.msra.mxu0 %v798
    %1234 = vmatprep.subr.mxu0 %v801
    %1235 = vmatpush1.msra.mxu0 %v800
    %1236 = vmatprep.subr.mxu0 %v803
    %1237 = vmatpush1.msra.mxu0 %v802
    %1238 = vmatprep.subr.mxu0 %v805
    %1239 = vmatpush1.msra.mxu0 %v804
    %1240 = vmatprep.subr.mxu0 %v807
    %1241 = vmatpush1.msra.mxu0 %v806
    %1242 = vmatprep.subr.mxu0 %v809
    %1243 = vmatpush1.msra.mxu0 %v808
    %1244 = vmatprep.subr.mxu0 %v811
    %1245 = vmatpush1.msra.mxu0 %v810
    %1246 = vmatprep.subr.mxu0 %v813
    %1247 = vmatpush1.msra.mxu0 %v812
    %1248 = vmatprep.subr.mxu0 0.0
    %1249 = vmatpush1.msra.mxu0 0.0
    %1250 = vmatprep.subr.mxu0 0.0
    %1251 = vmatpush1.msra.mxu0 0.0
    %1252 = vmatprep.subr.mxu0 0.0
    %1253 = vmatpush1.msra.mxu0 0.0
    %1254 = vmatprep.subr.mxu0 0.0
    %1255 = vmatpush1.msra.mxu0 0.0
    %1256 = vmatprep.subr.mxu0 0.0
    %1257 = vmatpush1.msra.mxu0 0.0
    %1258 = vmatprep.subr.mxu0 0.0
    %1259 = vmatpush1.msra.mxu0 0.0
    %1260 = vmatprep.subr.mxu0 0.0
    %1261 = vmatpush1.msra.mxu0 0.0
    %1262 = vmatprep.subr.mxu0 0.0
    %1263 = vmatpush1.msra.mxu0 0.0
    %1264 = vmatprep.subr.mxu0 0.0
    %1265 = vmatpush1.msra.mxu0 0.0
    %1266 = vmatprep.subr.mxu0 0.0
    %1267 = vmatpush1.msra.mxu0 0.0
    %1268 = vmatprep.subr.mxu0 0.0
    %1269 = vmatpush1.msra.mxu0 0.0
    %1270 = vmatprep.subr.mxu0 0.0
    %1271 = vmatpush1.msra.mxu0 0.0
    %1272 = vmatprep.subr.mxu0 0.0
    %1273 = vmatpush1.msra.mxu0 0.0
    %1274 = vmatprep.subr.mxu0 0.0
    %1275 = vmatpush1.msra.mxu0 0.0
    %1276 = vmatprep.subr.mxu0 0.0
    %1277 = vmatpush1.msra.mxu0 0.0
    %1278 = vmatprep.subr.mxu0 0.0
    %1279 = vmatpush1.msra.mxu0 0.0
    %1280 = vmatprep.subr.mxu0 0.0
    %1281 = vmatpush1.msra.mxu0 0.0
    %1282 = vmatprep.subr.mxu0 0.0
    %1283 = vmatpush1.msra.mxu0 0.0
    %1284 = vmatprep.subr.mxu0 0.0
    %1285 = vmatpush1.msra.mxu0 0.0
    %1286 = vmatprep.subr.mxu0 0.0
    %1287 = vmatpush1.msra.mxu0 0.0
    %1288 = vmatprep.subr.mxu0 0.0
    %1289 = vmatpush1.msra.mxu0 0.0
    %1290 = vmatprep.subr.mxu0 0.0
    %1291 = vmatpush1.msra.mxu0 0.0
    %1292 = vmatprep.subr.mxu0 0.0
    %1293 = vmatpush1.msra.mxu0 0.0
    %1294 = vmatprep.subr.mxu0 0.0
    %1295 = vmatpush1.msra.mxu0 0.0
    %1296 = vmatprep.mubr.f32.mxu0 0.0
    %1297 = vmatmul.mubr.f32.gmra.mrb[0].mxu0 %v1230
    %v1298 = vpop.f32.mrb[0].mxu0
    %v1299 = vadd.f32 %v819, %v1298
    %v1300 = vpop.f32.mrb[0].mxu0
    %v1301 = vadd.f32 %v823, %v1300
    %1302 = vdwg.mxu0
    %v1303 = vadd.f32 %v794, %v1299
    %v1304 = vxor.u32 %v1303, 2147483648
    %v1305 = vmul.f32 %v1304, 1.442695
    %v1306 = vpow.pop %v1305
    %v1307 = vadd.f32 %v1306, 1.0
    %v1308 = vrcp.pop %v1307
    %v1309 = vmul.f32 1.0, %v1308
    %v1310 = vmul.f32 %v1309, %v1301
    %v1311 = vadd.f32 %v796, %v1310
    %v1312 = vtanh.pop %v1311
    %v1313 = vsub.f32 1.0, %v1309
    %1315 = vrot.lane.b32.xlu0 %v1312, 64
    %v1316 = vpop.permute.xlu0 %1315
    %v1318 = vmul.f32 %v1313, %v1316
    %v1320 = vmul.f32 %v1309, %v1227
    %v1321 = vadd.f32 %v1318, %v1320
    %1323 = vrot.lane.b32.xlu0 %v1321, 64
    %v1324 = vpop.permute.xlu0 %1323
    %v1325 = vsel %vm551, %v1324, 0
    %1327 = vmatprep.subr.mxu0 %v799
    %1328 = vmatpush1.msra.mxu0 %v798
    %1329 = vmatprep.subr.mxu0 %v801
    %1330 = vmatpush1.msra.mxu0 %v800
    %1331 = vmatprep.subr.mxu0 %v803
    %1332 = vmatpush1.msra.mxu0 %v802
    %1333 = vmatprep.subr.mxu0 %v805
    %1334 = vmatpush1.msra.mxu0 %v804
    %1335 = vmatprep.subr.mxu0 %v807
    %1336 = vmatpush1.msra.mxu0 %v806
    %1337 = vmatprep.subr.mxu0 %v809
    %1338 = vmatpush1.msra.mxu0 %v808
    %1339 = vmatprep.subr.mxu0 %v811
    %1340 = vmatpush1.msra.mxu0 %v810
    %1341 = vmatprep.subr.mxu0 %v813
    %1342 = vmatpush1.msra.mxu0 %v812
    %1343 = vmatprep.subr.mxu0 0.0
    %1344 = vmatpush1.msra.mxu0 0.0
    %1345 = vmatprep.subr.mxu0 0.0
    %1346 = vmatpush1.msra.mxu0 0.0
    %1347 = vmatprep.subr.mxu0 0.0
    %1348 = vmatpush1.msra.mxu0 0.0
    %1349 = vmatprep.subr.mxu0 0.0
    %1350 = vmatpush1.msra.mxu0 0.0
    %1351 = vmatprep.subr.mxu0 0.0
    %1352 = vmatpush1.msra.mxu0 0.0
    %1353 = vmatprep.subr.mxu0 0.0
    %1354 = vmatpush1.msra.mxu0 0.0
    %1355 = vmatprep.subr.mxu0 0.0
    %1356 = vmatpush1.msra.mxu0 0.0
    %1357 = vmatprep.subr.mxu0 0.0
    %1358 = vmatpush1.msra.mxu0 0.0
    %1359 = vmatprep.subr.mxu0 0.0
    %1360 = vmatpush1.msra.mxu0 0.0
    %1361 = vmatprep.subr.mxu0 0.0
    %1362 = vmatpush1.msra.mxu0 0.0
    %1363 = vmatprep.subr.mxu0 0.0
    %1364 = vmatpush1.msra.mxu0 0.0
    %1365 = vmatprep.subr.mxu0 0.0
    %1366 = vmatpush1.msra.mxu0 0.0
    %1367 = vmatprep.subr.mxu0 0.0
    %1368 = vmatpush1.msra.mxu0 0.0
    %1369 = vmatprep.subr.mxu0 0.0
    %1370 = vmatpush1.msra.mxu0 0.0
    %1371 = vmatprep.subr.mxu0 0.0
    %1372 = vmatpush1.msra.mxu0 0.0
    %1373 = vmatprep.subr.mxu0 0.0
    %1374 = vmatpush1.msra.mxu0 0.0
    %1375 = vmatprep.subr.mxu0 0.0
    %1376 = vmatpush1.msra.mxu0 0.0
    %1377 = vmatprep.subr.mxu0 0.0
    %1378 = vmatpush1.msra.mxu0 0.0
    %1379 = vmatprep.subr.mxu0 0.0
    %1380 = vmatpush1.msra.mxu0 0.0
    %1381 = vmatprep.subr.mxu0 0.0
    %1382 = vmatpush1.msra.mxu0 0.0
    %1383 = vmatprep.subr.mxu0 0.0
    %1384 = vmatpush1.msra.mxu0 0.0
    %1385 = vmatprep.subr.mxu0 0.0
    %1386 = vmatpush1.msra.mxu0 0.0
    %1387 = vmatprep.subr.mxu0 0.0
    %1388 = vmatpush1.msra.mxu0 0.0
    %1389 = vmatprep.subr.mxu0 0.0
    %1390 = vmatpush1.msra.mxu0 0.0
    %1391 = vmatprep.mubr.f32.mxu0 0.0
    %1392 = vmatmul.mubr.f32.gmra.mrb[0].mxu0 %v1325
    %v1393 = vpop.f32.mrb[0].mxu0
    %v1394 = vadd.f32 %v819, %v1393
    %v1395 = vpop.f32.mrb[0].mxu0
    %v1396 = vadd.f32 %v823, %v1395
    %1397 = vdwg.mxu0
    %v1399 = vrot.slane %v1394, 6
    %v1401 = vadd.f32 %v794, %v1399
    %v1402 = vxor.u32 %v1401, 2147483648
    %v1403 = vmul.f32 %v1402, 1.442695
    %v1404 = vpow.pop %v1403
    %v1405 = vadd.f32 %v1404, 1.0
    %v1406 = vrcp.pop %v1405
    %v1407 = vmul.f32 1.0, %v1406
    %v1409 = vrot.slane %v1396, 6
    %v1411 = vmul.f32 %v1407, %v1409
    %v1412 = vadd.f32 %v796, %v1411
    %v1413 = vtanh.pop %v1412
    %v1414 = vsub.f32 1.0, %v1407
    %1416 = vrot.lane.b32.xlu0 %v1413, 64
    %v1417 = vpop.permute.xlu0 %1416
    %v1419 = vmul.f32 %v1414, %v1417
    %v1420 = vrot.slane %v1321, 6
    %v1422 = vmul.f32 %v1407, %v1420
    %v1423 = vadd.f32 %v1419, %v1422
    %v1425 = vrot.slane %v1423, 2
    %1426 = vrot.lane.b32.xlu0 %v1425, 64
    %v1427 = vpop.permute.xlu0 %1426
    %v1428 = vsel %vm551, %v1427, 0
    %1430 = vmatprep.subr.mxu0 %v799
    %1431 = vmatpush1.msra.mxu0 %v798
    %1432 = vmatprep.subr.mxu0 %v801
    %1433 = vmatpush1.msra.mxu0 %v800
    %1434 = vmatprep.subr.mxu0 %v803
    %1435 = vmatpush1.msra.mxu0 %v802
    %1436 = vmatprep.subr.mxu0 %v805
    %1437 = vmatpush1.msra.mxu0 %v804
    %1438 = vmatprep.subr.mxu0 %v807
    %1439 = vmatpush1.msra.mxu0 %v806
    %1440 = vmatprep.subr.mxu0 %v809
    %1441 = vmatpush1.msra.mxu0 %v808
    %1442 = vmatprep.subr.mxu0 %v811
    %1443 = vmatpush1.msra.mxu0 %v810
    %1444 = vmatprep.subr.mxu0 %v813
    %1445 = vmatpush1.msra.mxu0 %v812
    %1446 = vmatprep.subr.mxu0 0.0
    %1447 = vmatpush1.msra.mxu0 0.0
    %1448 = vmatprep.subr.mxu0 0.0
    %1449 = vmatpush1.msra.mxu0 0.0
    %1450 = vmatprep.subr.mxu0 0.0
    %1451 = vmatpush1.msra.mxu0 0.0
    %1452 = vmatprep.subr.mxu0 0.0
    %1453 = vmatpush1.msra.mxu0 0.0
    %1454 = vmatprep.subr.mxu0 0.0
    %1455 = vmatpush1.msra.mxu0 0.0
    %1456 = vmatprep.subr.mxu0 0.0
    %1457 = vmatpush1.msra.mxu0 0.0
    %1458 = vmatprep.subr.mxu0 0.0
    %1459 = vmatpush1.msra.mxu0 0.0
    %1460 = vmatprep.subr.mxu0 0.0
    %1461 = vmatpush1.msra.mxu0 0.0
    %1462 = vmatprep.subr.mxu0 0.0
    %1463 = vmatpush1.msra.mxu0 0.0
    %1464 = vmatprep.subr.mxu0 0.0
    %1465 = vmatpush1.msra.mxu0 0.0
    %1466 = vmatprep.subr.mxu0 0.0
    %1467 = vmatpush1.msra.mxu0 0.0
    %1468 = vmatprep.subr.mxu0 0.0
    %1469 = vmatpush1.msra.mxu0 0.0
    %1470 = vmatprep.subr.mxu0 0.0
    %1471 = vmatpush1.msra.mxu0 0.0
    %1472 = vmatprep.subr.mxu0 0.0
    %1473 = vmatpush1.msra.mxu0 0.0
    %1474 = vmatprep.subr.mxu0 0.0
    %1475 = vmatpush1.msra.mxu0 0.0
    %1476 = vmatprep.subr.mxu0 0.0
    %1477 = vmatpush1.msra.mxu0 0.0
    %1478 = vmatprep.subr.mxu0 0.0
    %1479 = vmatpush1.msra.mxu0 0.0
    %1480 = vmatprep.subr.mxu0 0.0
    %1481 = vmatpush1.msra.mxu0 0.0
    %1482 = vmatprep.subr.mxu0 0.0
    %1483 = vmatpush1.msra.mxu0 0.0
    %1484 = vmatprep.subr.mxu0 0.0
    %1485 = vmatpush1.msra.mxu0 0.0
    %1486 = vmatprep.subr.mxu0 0.0
    %1487 = vmatpush1.msra.mxu0 0.0
    %1488 = vmatprep.subr.mxu0 0.0
    %1489 = vmatpush1.msra.mxu0 0.0
    %1490 = vmatprep.subr.mxu0 0.0
    %1491 = vmatpush1.msra.mxu0 0.0
    %1492 = vmatprep.subr.mxu0 0.0
    %1493 = vmatpush1.msra.mxu0 0.0
    %1494 = vmatprep.mubr.f32.mxu0 0.0
    %1495 = vmatmul.mubr.f32.gmra.mrb[0].mxu0 %v1428
    %v1496 = vpop.f32.mrb[0].mxu0
    %v1497 = vadd.f32 %v819, %v1496
    %v1498 = vpop.f32.mrb[0].mxu0
    %v1499 = vadd.f32 %v823, %v1498
    %1500 = vdwg.mxu0
    %v1502 = vrot.slane %v1497, 4
    %v1504 = vadd.f32 %v794, %v1502
    %v1505 = vxor.u32 %v1504, 2147483648
    %v1506 = vmul.f32 %v1505, 1.442695
    %v1507 = vpow.pop %v1506
    %v1508 = vadd.f32 %v1507, 1.0
    %v1509 = vrcp.pop %v1508
    %v1510 = vmul.f32 1.0, %v1509
    %v1512 = vrot.slane %v1499, 4
    %v1514 = vmul.f32 %v1510, %v1512
    %v1515 = vadd.f32 %v796, %v1514
    %v1516 = vtanh.pop %v1515
    %v1517 = vsub.f32 1.0, %v1510
    %1519 = vrot.lane.b32.xlu0 %v1516, 64
    %v1520 = vpop.permute.xlu0 %1519
    %v1522 = vmul.f32 %v1517, %v1520
    %v1523 = vrot.slane %v1423, 6
    %v1525 = vmul.f32 %v1510, %v1523
    %v1526 = vadd.f32 %v1522, %v1525
    %v1528 = vrot.slane %v1526, 4
    %1529 = vrot.lane.b32.xlu0 %v1528, 64
    %v1530 = vpop.permute.xlu0 %1529
    %v1531 = vsel %vm551, %v1530, 0
    %1533 = vmatprep.subr.mxu0 %v799
    %1534 = vmatpush1.msra.mxu0 %v798
    %1535 = vmatprep.subr.mxu0 %v801
    %1536 = vmatpush1.msra.mxu0 %v800
    %1537 = vmatprep.subr.mxu0 %v803
    %1538 = vmatpush1.msra.mxu0 %v802
    %1539 = vmatprep.subr.mxu0 %v805
    %1540 = vmatpush1.msra.mxu0 %v804
    %1541 = vmatprep.subr.mxu0 %v807
    %1542 = vmatpush1.msra.mxu0 %v806
    %1543 = vmatprep.subr.mxu0 %v809
    %1544 = vmatpush1.msra.mxu0 %v808
    %1545 = vmatprep.subr.mxu0 %v811
    %1546 = vmatpush1.msra.mxu0 %v810
    %1547 = vmatprep.subr.mxu0 %v813
    %1548 = vmatpush1.msra.mxu0 %v812
    %1549 = vmatprep.subr.mxu0 0.0
    %1550 = vmatpush1.msra.mxu0 0.0
    %1551 = vmatprep.subr.mxu0 0.0
    %1552 = vmatpush1.msra.mxu0 0.0
    %1553 = vmatprep.subr.mxu0 0.0
    %1554 = vmatpush1.msra.mxu0 0.0
    %1555 = vmatprep.subr.mxu0 0.0
    %1556 = vmatpush1.msra.mxu0 0.0
    %1557 = vmatprep.subr.mxu0 0.0
    %1558 = vmatpush1.msra.mxu0 0.0
    %1559 = vmatprep.subr.mxu0 0.0
    %1560 = vmatpush1.msra.mxu0 0.0
    %1561 = vmatprep.subr.mxu0 0.0
    %1562 = vmatpush1.msra.mxu0 0.0
    %1563 = vmatprep.subr.mxu0 0.0
    %1564 = vmatpush1.msra.mxu0 0.0
    %1565 = vmatprep.subr.mxu0 0.0
    %1566 = vmatpush1.msra.mxu0 0.0
    %1567 = vmatprep.subr.mxu0 0.0
    %1568 = vmatpush1.msra.mxu0 0.0
    %1569 = vmatprep.subr.mxu0 0.0
    %1570 = vmatpush1.msra.mxu0 0.0
    %1571 = vmatprep.subr.mxu0 0.0
    %1572 = vmatpush1.msra.mxu0 0.0
    %1573 = vmatprep.subr.mxu0 0.0
    %1574 = vmatpush1.msra.mxu0 0.0
    %1575 = vmatprep.subr.mxu0 0.0
    %1576 = vmatpush1.msra.mxu0 0.0
    %1577 = vmatprep.subr.mxu0 0.0
    %1578 = vmatpush1.msra.mxu0 0.0
    %1579 = vmatprep.subr.mxu0 0.0
    %1580 = vmatpush1.msra.mxu0 0.0
    %1581 = vmatprep.subr.mxu0 0.0
    %1582 = vmatpush1.msra.mxu0 0.0
    %1583 = vmatprep.subr.mxu0 0.0
    %1584 = vmatpush1.msra.mxu0 0.0
    %1585 = vmatprep.subr.mxu0 0.0
    %1586 = vmatpush1.msra.mxu0 0.0
    %1587 = vmatprep.subr.mxu0 0.0
    %1588 = vmatpush1.msra.mxu0 0.0
    %1589 = vmatprep.subr.mxu0 0.0
    %1590 = vmatpush1.msra.mxu0 0.0
    %1591 = vmatprep.subr.mxu0 0.0
    %1592 = vmatpush1.msra.mxu0 0.0
    %1593 = vmatprep.subr.mxu0 0.0
    %1594 = vmatpush1.msra.mxu0 0.0
    %1595 = vmatprep.subr.mxu0 0.0
    %1596 = vmatpush1.msra.mxu0 0.0
    %1597 = vmatprep.mubr.f32.mxu0 0.0
    %1598 = vmatmul.mubr.f32.gmra.mrb[0].mxu0 %v1531
    %v1599 = vpop.f32.mrb[0].mxu0
    %v1600 = vadd.f32 %v819, %v1599
    %v1601 = vpop.f32.mrb[0].mxu0
    %v1602 = vadd.f32 %v823, %v1601
    %1603 = vdwg.mxu0
    %v1605 = vrot.slane %v1600, 2
    %v1607 = vadd.f32 %v794, %v1605
    %v1608 = vxor.u32 %v1607, 2147483648
    %v1609 = vmul.f32 %v1608, 1.442695
    %v1610 = vpow.pop %v1609
    %v1611 = vadd.f32 %v1610, 1.0
    %v1612 = vrcp.pop %v1611
    %v1613 = vmul.f32 1.0, %v1612
    %v1615 = vrot.slane %v1602, 2
    %v1617 = vmul.f32 %v1613, %v1615
    %v1618 = vadd.f32 %v796, %v1617
    %v1619 = vtanh.pop %v1618
    %v1620 = vsub.f32 1.0, %v1613
    %1622 = vrot.lane.b32.xlu0 %v1619, 64
    %v1623 = vpop.permute.xlu0 %1622
    %v1625 = vmul.f32 %v1620, %v1623
    %v1626 = vrot.slane %v1526, 6
    %v1628 = vmul.f32 %v1613, %v1626
    %v1629 = vadd.f32 %v1625, %v1628
    %v1630 = vsel %vm326, %v917, %v1019
    %v1631 = vsel %vm230, %v1630, %v1122
    %vm1632 = vcmask 1045504
    %v1633 = vsel %vm1632, %v1631, %v1225
    %v1634 = vsel %vm326, %v1321, %v1423
    %v1635 = vsel %vm230, %v1634, %v1526
    %v1636 = vsel %vm1632, %v1635, %v1629
    %v1637 = vld [vmem:[#allocation17] sm:$0xff]
    %v1638 = vld [vmem:[#allocation17 + $0x8] sm:$0xff]
    %v1639 = vld [vmem:[#allocation17 + $0x10] sm:$0xff]
    %v1640 = vld [vmem:[#allocation17 + $0x18] sm:$0xff]
    %v1641 = vld [vmem:[#allocation17 + $0x20] sm:$0xff]
    %v1642 = vld [vmem:[#allocation17 + $0x28] sm:$0xff]
    %v1643 = vld [vmem:[#allocation17 + $0x30] sm:$0xff]
    %v1644 = vld [vmem:[#allocation17 + $0x38] sm:$0xff]
    %v1645 = vld [vmem:[#allocation17 + $0x40] sm:$0xff]
    %v1646 = vld [vmem:[#allocation17 + $0x48] sm:$0xff]
    %v1647 = vld [vmem:[#allocation17 + $0x50] sm:$0xff]
    %v1648 = vld [vmem:[#allocation17 + $0x58] sm:$0xff]
    %v1649 = vld [vmem:[#allocation17 + $0x60] sm:$0xff]
    %v1650 = vld [vmem:[#allocation17 + $0x68] sm:$0xff]
    %v1651 = vld [vmem:[#allocation17 + $0x70] sm:$0xff]
    %v1652 = vld [vmem:[#allocation17 + $0x78] sm:$0xff]
    %v1653 = vld [vmem:[%s19] sm:$0x3]
    %v1655 = vlaneseq
    %v1656 = vshrl.u32 %v1655, 7
    %v1657 = vsub.s32 0, %v1656
    %v1658 = vrot.slane %v1653, %v1657
    %v1659 = vlaneseq
    %v1660 = vshrl.u32 %v1659, 7
    %v1661 = vsub.s32 1, %v1660
    %v1662 = vrot.slane %v1653, %v1661
    %1667 = vrot.lane.b32.xlu0 %v1633, 64
    %v1668 = vpop.permute.xlu0 %1667
    %1669 = vrot.lane.b32.xlu0 %v1636, 64
    %v1670 = vpop.permute.xlu0 %1669
    %v1671 = vsel %vm551, %v1668, 0
    %v1673 = vsel %vm551, %v1670, 0
    %1675 = vmatprep.subr.mxu0 %v1638
    %1676 = vmatpush1.msra.mxu0 %v1637
    %1677 = vmatprep.subr.mxu0 %v1640
    %1678 = vmatpush1.msra.mxu0 %v1639
    %1679 = vmatprep.subr.mxu0 %v1642
    %1680 = vmatpush1.msra.mxu0 %v1641
    %1681 = vmatprep.subr.mxu0 %v1644
    %1682 = vmatpush1.msra.mxu0 %v1643
    %1683 = vmatprep.subr.mxu0 %v1646
    %1684 = vmatpush1.msra.mxu0 %v1645
    %1685 = vmatprep.subr.mxu0 %v1648
    %1686 = vmatpush1.msra.mxu0 %v1647
    %1687 = vmatprep.subr.mxu0 %v1650
    %1688 = vmatpush1.msra.mxu0 %v1649
    %1689 = vmatprep.subr.mxu0 %v1652
    %1690 = vmatpush1.msra.mxu0 %v1651
    %1691 = vmatprep.subr.mxu0 0.0
    %1692 = vmatpush1.msra.mxu0 0.0
    %1693 = vmatprep.subr.mxu0 0.0
    %1694 = vmatpush1.msra.mxu0 0.0
    %1695 = vmatprep.subr.mxu0 0.0
    %1696 = vmatpush1.msra.mxu0 0.0
    %1697 = vmatprep.subr.mxu0 0.0
    %1698 = vmatpush1.msra.mxu0 0.0
    %1699 = vmatprep.subr.mxu0 0.0
    %1700 = vmatpush1.msra.mxu0 0.0
    %1701 = vmatprep.subr.mxu0 0.0
    %1702 = vmatpush1.msra.mxu0 0.0
    %1703 = vmatprep.subr.mxu0 0.0
    %1704 = vmatpush1.msra.mxu0 0.0
    %1705 = vmatprep.subr.mxu0 0.0
    %1706 = vmatpush1.msra.mxu0 0.0
    %1707 = vmatprep.subr.mxu0 0.0
    %1708 = vmatpush1.msra.mxu0 0.0
    %1709 = vmatprep.subr.mxu0 0.0
    %1710 = vmatpush1.msra.mxu0 0.0
    %1711 = vmatprep.subr.mxu0 0.0
    %1712 = vmatpush1.msra.mxu0 0.0
    %1713 = vmatprep.subr.mxu0 0.0
    %1714 = vmatpush1.msra.mxu0 0.0
    %1715 = vmatprep.subr.mxu0 0.0
    %1716 = vmatpush1.msra.mxu0 0.0
    %1717 = vmatprep.subr.mxu0 0.0
    %1718 = vmatpush1.msra.mxu0 0.0
    %1719 = vmatprep.subr.mxu0 0.0
    %1720 = vmatpush1.msra.mxu0 0.0
    %1721 = vmatprep.subr.mxu0 0.0
    %1722 = vmatpush1.msra.mxu0 0.0
    %1723 = vmatprep.subr.mxu0 0.0
    %1724 = vmatpush1.msra.mxu0 0.0
    %1725 = vmatprep.subr.mxu0 0.0
    %1726 = vmatpush1.msra.mxu0 0.0
    %1727 = vmatprep.subr.mxu0 0.0
    %1728 = vmatpush1.msra.mxu0 0.0
    %1729 = vmatprep.subr.mxu0 0.0
    %1730 = vmatpush1.msra.mxu0 0.0
    %1731 = vmatprep.subr.mxu0 0.0
    %1732 = vmatpush1.msra.mxu0 0.0
    %1733 = vmatprep.subr.mxu0 0.0
    %1734 = vmatpush1.msra.mxu0 0.0
    %1735 = vmatprep.subr.mxu0 0.0
    %1736 = vmatpush1.msra.mxu0 0.0
    %1737 = vmatprep.subr.mxu0 0.0
    %1738 = vmatpush1.msra.mxu0 0.0
    %1739 = vmatprep.mubr.f32.mxu0 0.0
    %1740 = vmatmul.mubr.f32.gmra.mrb[0].mxu0 %v1671
    %v1741 = vpop.f32.mrb[0].mxu0
    %v1742 = vadd.f32 %v1658, %v1741
    %v1743 = vpop.f32.mrb[0].mxu0
    %v1744 = vadd.f32 %v1662, %v1743
    %1745 = vmatprep.mubr.f32.mxu0 0.0
    %1746 = vmatmul.mubr.f32.gmra.mrb[0].mxu0 %v1673
    %v1747 = vpop.f32.mrb[0].mxu0
    %v1748 = vadd.f32 %v1658, %v1747
    %v1749 = vpop.f32.mrb[0].mxu0
    %v1750 = vadd.f32 %v1662, %v1749
    %1751 = vdwg.mxu0
    %v1752 = vld [vmem:[#allocation18] sm:$0xff]
    %v1753 = vld [vmem:[#allocation18 + $0x8] sm:$0xff]
    %v1754 = vld [vmem:[#allocation18 + $0x10] sm:$0xff]
    %v1755 = vld [vmem:[#allocation18 + $0x18] sm:$0xff]
    %v1756 = vld [vmem:[#allocation18 + $0x20] sm:$0xff]
    %v1757 = vld [vmem:[#allocation18 + $0x28] sm:$0xff]
    %v1758 = vld [vmem:[#allocation18 + $0x30] sm:$0xff]
    %v1759 = vld [vmem:[#allocation18 + $0x38] sm:$0xff]
    %v1760 = vld [vmem:[#allocation18 + $0x40] sm:$0xff]
    %v1761 = vld [vmem:[#allocation18 + $0x48] sm:$0xff]
    %v1762 = vld [vmem:[#allocation18 + $0x50] sm:$0xff]
    %v1763 = vld [vmem:[#allocation18 + $0x58] sm:$0xff]
    %v1764 = vld [vmem:[#allocation18 + $0x60] sm:$0xff]
    %v1765 = vld [vmem:[#allocation18 + $0x68] sm:$0xff]
    %v1766 = vld [vmem:[#allocation18 + $0x70] sm:$0xff]
    %v1767 = vld [vmem:[#allocation18 + $0x78] sm:$0xff]
    %v1768 = vld [vmem:[%s20] sm:$0x3]
    %v1770 = vlaneseq
    %v1771 = vshrl.u32 %v1770, 7
    %v1772 = vsub.s32 0, %v1771
    %v1773 = vrot.slane %v1768, %v1772
    %v1774 = vlaneseq
    %v1775 = vshrl.u32 %v1774, 7
    %v1776 = vsub.s32 1, %v1775
    %v1777 = vrot.slane %v1768, %v1776
    %1780 = vmatprep.subr.mxu0 %v1753
    %1781 = vmatpush1.msra.mxu0 %v1752
    %1782 = vmatprep.subr.mxu0 %v1755
    %1783 = vmatpush1.msra.mxu0 %v1754
    %1784 = vmatprep.subr.mxu0 %v1757
    %1785 = vmatpush1.msra.mxu0 %v1756
    %1786 = vmatprep.subr.mxu0 %v1759
    %1787 = vmatpush1.msra.mxu0 %v1758
    %1788 = vmatprep.subr.mxu0 %v1761
    %1789 = vmatpush1.msra.mxu0 %v1760
    %1790 = vmatprep.subr.mxu0 %v1763
    %1791 = vmatpush1.msra.mxu0 %v1762
    %1792 = vmatprep.subr.mxu0 %v1765
    %1793 = vmatpush1.msra.mxu0 %v1764
    %1794 = vmatprep.subr.mxu0 %v1767
    %1795 = vmatpush1.msra.mxu0 %v1766
    %1796 = vmatprep.subr.mxu0 0.0
    %1797 = vmatpush1.msra.mxu0 0.0
    %1798 = vmatprep.subr.mxu0 0.0
    %1799 = vmatpush1.msra.mxu0 0.0
    %1800 = vmatprep.subr.mxu0 0.0
    %1801 = vmatpush1.msra.mxu0 0.0
    %1802 = vmatprep.subr.mxu0 0.0
    %1803 = vmatpush1.msra.mxu0 0.0
    %1804 = vmatprep.subr.mxu0 0.0
    %1805 = vmatpush1.msra.mxu0 0.0
    %1806 = vmatprep.subr.mxu0 0.0
    %1807 = vmatpush1.msra.mxu0 0.0
    %1808 = vmatprep.subr.mxu0 0.0
    %1809 = vmatpush1.msra.mxu0 0.0
    %1810 = vmatprep.subr.mxu0 0.0
    %1811 = vmatpush1.msra.mxu0 0.0
    %1812 = vmatprep.subr.mxu0 0.0
    %1813 = vmatpush1.msra.mxu0 0.0
    %1814 = vmatprep.subr.mxu0 0.0
    %1815 = vmatpush1.msra.mxu0 0.0
    %1816 = vmatprep.subr.mxu0 0.0
    %1817 = vmatpush1.msra.mxu0 0.0
    %1818 = vmatprep.subr.mxu0 0.0
    %1819 = vmatpush1.msra.mxu0 0.0
    %1820 = vmatprep.subr.mxu0 0.0
    %1821 = vmatpush1.msra.mxu0 0.0
    %1822 = vmatprep.subr.mxu0 0.0
    %1823 = vmatpush1.msra.mxu0 0.0
    %1824 = vmatprep.subr.mxu0 0.0
    %1825 = vmatpush1.msra.mxu0 0.0
    %1826 = vmatprep.subr.mxu0 0.0
    %1827 = vmatpush1.msra.mxu0 0.0
    %1828 = vmatprep.subr.mxu0 0.0
    %1829 = vmatpush1.msra.mxu0 0.0
    %1830 = vmatprep.subr.mxu0 0.0
    %1831 = vmatpush1.msra.mxu0 0.0
    %1832 = vmatprep.subr.mxu0 0.0
    %1833 = vmatpush1.msra.mxu0 0.0
    %1834 = vmatprep.subr.mxu0 0.0
    %1835 = vmatpush1.msra.mxu0 0.0
    %1836 = vmatprep.subr.mxu0 0.0
    %1837 = vmatpush1.msra.mxu0 0.0
    %1838 = vmatprep.subr.mxu0 0.0
    %1839 = vmatpush1.msra.mxu0 0.0
    %1840 = vmatprep.subr.mxu0 0.0
    %1841 = vmatpush1.msra.mxu0 0.0
    %1842 = vmatprep.subr.mxu0 0.0
    %1843 = vmatpush1.msra.mxu0 0.0
    %1844 = vmatprep.mubr.f32.mxu0 0.0
    %1845 = vmatmul.mubr.f32.gmra.mrb[0].mxu0 %v827
    %v1846 = vpop.f32.mrb[0].mxu0
    %v1847 = vadd.f32 %v1773, %v1846
    %v1848 = vpop.f32.mrb[0].mxu0
    %v1849 = vadd.f32 %v1777, %v1848
    %1850 = vdwg.mxu0
    %v1851 = vadd.f32 %v1742, %v1847
    %v1852 = vxor.u32 %v1851, 2147483648
    %v1853 = vmul.f32 %v1852, 1.442695
    %v1854 = vpow.pop %v1853
    %v1855 = vadd.f32 %v1854, 1.0
    %v1856 = vrcp.pop %v1855
    %v1857 = vmul.f32 1.0, %v1856
    %v1858 = vmul.f32 %v1857, %v1849
    %v1859 = vadd.f32 %v1744, %v1858
    %v1860 = vtanh.pop %v1859
    %v1861 = vsub.f32 1.0, %v1857
    %1863 = vrot.lane.b32.xlu0 %v1860, 64
    %v1864 = vpop.permute.xlu0 %1863
    %v1866 = vmul.f32 %v1861, %v1864
    %v1867 = vmul.f32 %v1857, 0.0
    %v1868 = vadd.f32 %v1866, %v1867
    %1870 = vrot.lane.b32.xlu0 %v1868, 64
    %v1871 = vpop.permute.xlu0 %1870
    %v1872 = vsel %vm551, %v1871, 0
    %1874 = vmatprep.subr.mxu0 %v1753
    %1875 = vmatpush1.msra.mxu0 %v1752
    %1876 = vmatprep.subr.mxu0 %v1755
    %1877 = vmatpush1.msra.mxu0 %v1754
    %1878 = vmatprep.subr.mxu0 %v1757
    %1879 = vmatpush1.msra.mxu0 %v1756
    %1880 = vmatprep.subr.mxu0 %v1759
    %1881 = vmatpush1.msra.mxu0 %v1758
    %1882 = vmatprep.subr.mxu0 %v1761
    %1883 = vmatpush1.msra.mxu0 %v1760
    %1884 = vmatprep.subr.mxu0 %v1763
    %1885 = vmatpush1.msra.mxu0 %v1762
    %1886 = vmatprep.subr.mxu0 %v1765
    %1887 = vmatpush1.msra.mxu0 %v1764
    %1888 = vmatprep.subr.mxu0 %v1767
    %1889 = vmatpush1.msra.mxu0 %v1766
    %1890 = vmatprep.subr.mxu0 0.0
    %1891 = vmatpush1.msra.mxu0 0.0
    %1892 = vmatprep.subr.mxu0 0.0
    %1893 = vmatpush1.msra.mxu0 0.0
    %1894 = vmatprep.subr.mxu0 0.0
    %1895 = vmatpush1.msra.mxu0 0.0
    %1896 = vmatprep.subr.mxu0 0.0
    %1897 = vmatpush1.msra.mxu0 0.0
    %1898 = vmatprep.subr.mxu0 0.0
    %1899 = vmatpush1.msra.mxu0 0.0
    %1900 = vmatprep.subr.mxu0 0.0
    %1901 = vmatpush1.msra.mxu0 0.0
    %1902 = vmatprep.subr.mxu0 0.0
    %1903 = vmatpush1.msra.mxu0 0.0
    %1904 = vmatprep.subr.mxu0 0.0
    %1905 = vmatpush1.msra.mxu0 0.0
    %1906 = vmatprep.subr.mxu0 0.0
    %1907 = vmatpush1.msra.mxu0 0.0
    %1908 = vmatprep.subr.mxu0 0.0
    %1909 = vmatpush1.msra.mxu0 0.0
    %1910 = vmatprep.subr.mxu0 0.0
    %1911 = vmatpush1.msra.mxu0 0.0
    %1912 = vmatprep.subr.mxu0 0.0
    %1913 = vmatpush1.msra.mxu0 0.0
    %1914 = vmatprep.subr.mxu0 0.0
    %1915 = vmatpush1.msra.mxu0 0.0
    %1916 = vmatprep.subr.mxu0 0.0
    %1917 = vmatpush1.msra.mxu0 0.0
    %1918 = vmatprep.subr.mxu0 0.0
    %1919 = vmatpush1.msra.mxu0 0.0
    %1920 = vmatprep.subr.mxu0 0.0
    %1921 = vmatpush1.msra.mxu0 0.0
    %1922 = vmatprep.subr.mxu0 0.0
    %1923 = vmatpush1.msra.mxu0 0.0
    %1924 = vmatprep.subr.mxu0 0.0
    %1925 = vmatpush1.msra.mxu0 0.0
    %1926 = vmatprep.subr.mxu0 0.0
    %1927 = vmatpush1.msra.mxu0 0.0
    %1928 = vmatprep.subr.mxu0 0.0
    %1929 = vmatpush1.msra.mxu0 0.0
    %1930 = vmatprep.subr.mxu0 0.0
    %1931 = vmatpush1.msra.mxu0 0.0
    %1932 = vmatprep.subr.mxu0 0.0
    %1933 = vmatpush1.msra.mxu0 0.0
    %1934 = vmatprep.subr.mxu0 0.0
    %1935 = vmatpush1.msra.mxu0 0.0
    %1936 = vmatprep.subr.mxu0 0.0
    %1937 = vmatpush1.msra.mxu0 0.0
    %1938 = vmatprep.mubr.f32.mxu0 0.0
    %1939 = vmatmul.mubr.f32.gmra.mrb[0].mxu0 %v1872
    %v1940 = vpop.f32.mrb[0].mxu0
    %v1941 = vadd.f32 %v1773, %v1940
    %v1942 = vpop.f32.mrb[0].mxu0
    %v1943 = vadd.f32 %v1777, %v1942
    %1944 = vdwg.mxu0
    %v1946 = vrot.slane %v1941, 6
    %v1948 = vadd.f32 %v1742, %v1946
    %v1949 = vxor.u32 %v1948, 2147483648
    %v1950 = vmul.f32 %v1949, 1.442695
    %v1951 = vpow.pop %v1950
    %v1952 = vadd.f32 %v1951, 1.0
    %v1953 = vrcp.pop %v1952
    %v1954 = vmul.f32 1.0, %v1953
    %v1956 = vrot.slane %v1943, 6
    %v1958 = vmul.f32 %v1954, %v1956
    %v1959 = vadd.f32 %v1744, %v1958
    %v1960 = vtanh.pop %v1959
    %v1961 = vsub.f32 1.0, %v1954
    %1963 = vrot.lane.b32.xlu0 %v1960, 64
    %v1964 = vpop.permute.xlu0 %1963
    %v1966 = vmul.f32 %v1961, %v1964
    %v1967 = vrot.slane %v1868, 6
    %v1969 = vmul.f32 %v1954, %v1967
    %v1970 = vadd.f32 %v1966, %v1969
    %v1972 = vrot.slane %v1970, 2
    %1973 = vrot.lane.b32.xlu0 %v1972, 64
    %v1974 = vpop.permute.xlu0 %1973
    %v1975 = vsel %vm551, %v1974, 0
    %1977 = vmatprep.subr.mxu0 %v1753
    %1978 = vmatpush1.msra.mxu0 %v1752
    %1979 = vmatprep.subr.mxu0 %v1755
    %1980 = vmatpush1.msra.mxu0 %v1754
    %1981 = vmatprep.subr.mxu0 %v1757
    %1982 = vmatpush1.msra.mxu0 %v1756
    %1983 = vmatprep.subr.mxu0 %v1759
    %1984 = vmatpush1.msra.mxu0 %v1758
    %1985 = vmatprep.subr.mxu0 %v1761
    %1986 = vmatpush1.msra.mxu0 %v1760
    %1987 = vmatprep.subr.mxu0 %v1763
    %1988 = vmatpush1.msra.mxu0 %v1762
    %1989 = vmatprep.subr.mxu0 %v1765
    %1990 = vmatpush1.msra.mxu0 %v1764
    %1991 = vmatprep.subr.mxu0 %v1767
    %1992 = vmatpush1.msra.mxu0 %v1766
    %1993 = vmatprep.subr.mxu0 0.0
    %1994 = vmatpush1.msra.mxu0 0.0
    %1995 = vmatprep.subr.mxu0 0.0
    %1996 = vmatpush1.msra.mxu0 0.0
    %1997 = vmatprep.subr.mxu0 0.0
    %1998 = vmatpush1.msra.mxu0 0.0
    %1999 = vmatprep.subr.mxu0 0.0
    %2000 = vmatpush1.msra.mxu0 0.0
    %2001 = vmatprep.subr.mxu0 0.0
    %2002 = vmatpush1.msra.mxu0 0.0
    %2003 = vmatprep.subr.mxu0 0.0
    %2004 = vmatpush1.msra.mxu0 0.0
    %2005 = vmatprep.subr.mxu0 0.0
    %2006 = vmatpush1.msra.mxu0 0.0
    %2007 = vmatprep.subr.mxu0 0.0
    %2008 = vmatpush1.msra.mxu0 0.0
    %2009 = vmatprep.subr.mxu0 0.0
    %2010 = vmatpush1.msra.mxu0 0.0
    %2011 = vmatprep.subr.mxu0 0.0
    %2012 = vmatpush1.msra.mxu0 0.0
    %2013 = vmatprep.subr.mxu0 0.0
    %2014 = vmatpush1.msra.mxu0 0.0
    %2015 = vmatprep.subr.mxu0 0.0
    %2016 = vmatpush1.msra.mxu0 0.0
    %2017 = vmatprep.subr.mxu0 0.0
    %2018 = vmatpush1.msra.mxu0 0.0
    %2019 = vmatprep.subr.mxu0 0.0
    %2020 = vmatpush1.msra.mxu0 0.0
    %2021 = vmatprep.subr.mxu0 0.0
    %2022 = vmatpush1.msra.mxu0 0.0
    %2023 = vmatprep.subr.mxu0 0.0
    %2024 = vmatpush1.msra.mxu0 0.0
    %2025 = vmatprep.subr.mxu0 0.0
    %2026 = vmatpush1.msra.mxu0 0.0
    %2027 = vmatprep.subr.mxu0 0.0
    %2028 = vmatpush1.msra.mxu0 0.0
    %2029 = vmatprep.subr.mxu0 0.0
    %2030 = vmatpush1.msra.mxu0 0.0
    %2031 = vmatprep.subr.mxu0 0.0
    %2032 = vmatpush1.msra.mxu0 0.0
    %2033 = vmatprep.subr.mxu0 0.0
    %2034 = vmatpush1.msra.mxu0 0.0
    %2035 = vmatprep.subr.mxu0 0.0
    %2036 = vmatpush1.msra.mxu0 0.0
    %2037 = vmatprep.subr.mxu0 0.0
    %2038 = vmatpush1.msra.mxu0 0.0
    %2039 = vmatprep.subr.mxu0 0.0
    %2040 = vmatpush1.msra.mxu0 0.0
    %2041 = vmatprep.mubr.f32.mxu0 0.0
    %2042 = vmatmul.mubr.f32.gmra.mrb[0].mxu0 %v1975
    %v2043 = vpop.f32.mrb[0].mxu0
    %v2044 = vadd.f32 %v1773, %v2043
    %v2045 = vpop.f32.mrb[0].mxu0
    %v2046 = vadd.f32 %v1777, %v2045
    %2047 = vdwg.mxu0
    %v2049 = vrot.slane %v2044, 4
    %v2051 = vadd.f32 %v1742, %v2049
    %v2052 = vxor.u32 %v2051, 2147483648
    %v2053 = vmul.f32 %v2052, 1.442695
    %v2054 = vpow.pop %v2053
    %v2055 = vadd.f32 %v2054, 1.0
    %v2056 = vrcp.pop %v2055
    %v2057 = vmul.f32 1.0, %v2056
    %v2059 = vrot.slane %v2046, 4
    %v2061 = vmul.f32 %v2057, %v2059
    %v2062 = vadd.f32 %v1744, %v2061
    %v2063 = vtanh.pop %v2062
    %v2064 = vsub.f32 1.0, %v2057
    %2066 = vrot.lane.b32.xlu0 %v2063, 64
    %v2067 = vpop.permute.xlu0 %2066
    %v2069 = vmul.f32 %v2064, %v2067
    %v2070 = vrot.slane %v1970, 6
    %v2072 = vmul.f32 %v2057, %v2070
    %v2073 = vadd.f32 %v2069, %v2072
    %v2075 = vrot.slane %v2073, 4
    %2076 = vrot.lane.b32.xlu0 %v2075, 64
    %v2077 = vpop.permute.xlu0 %2076
    %v2078 = vsel %vm551, %v2077, 0
    %2080 = vmatprep.subr.mxu0 %v1753
    %2081 = vmatpush1.msra.mxu0 %v1752
    %2082 = vmatprep.subr.mxu0 %v1755
    %2083 = vmatpush1.msra.mxu0 %v1754
    %2084 = vmatprep.subr.mxu0 %v1757
    %2085 = vmatpush1.msra.mxu0 %v1756
    %2086 = vmatprep.subr.mxu0 %v1759
    %2087 = vmatpush1.msra.mxu0 %v1758
    %2088 = vmatprep.subr.mxu0 %v1761
    %2089 = vmatpush1.msra.mxu0 %v1760
    %2090 = vmatprep.subr.mxu0 %v1763
    %2091 = vmatpush1.msra.mxu0 %v1762
    %2092 = vmatprep.subr.mxu0 %v1765
    %2093 = vmatpush1.msra.mxu0 %v1764
    %2094 = vmatprep.subr.mxu0 %v1767
    %2095 = vmatpush1.msra.mxu0 %v1766
    %2096 = vmatprep.subr.mxu0 0.0
    %2097 = vmatpush1.msra.mxu0 0.0
    %2098 = vmatprep.subr.mxu0 0.0
    %2099 = vmatpush1.msra.mxu0 0.0
    %2100 = vmatprep.subr.mxu0 0.0
    %2101 = vmatpush1.msra.mxu0 0.0
    %2102 = vmatprep.subr.mxu0 0.0
    %2103 = vmatpush1.msra.mxu0 0.0
    %2104 = vmatprep.subr.mxu0 0.0
    %2105 = vmatpush1.msra.mxu0 0.0
    %2106 = vmatprep.subr.mxu0 0.0
    %2107 = vmatpush1.msra.mxu0 0.0
    %2108 = vmatprep.subr.mxu0 0.0
    %2109 = vmatpush1.msra.mxu0 0.0
    %2110 = vmatprep.subr.mxu0 0.0
    %2111 = vmatpush1.msra.mxu0 0.0
    %2112 = vmatprep.subr.mxu0 0.0
    %2113 = vmatpush1.msra.mxu0 0.0
    %2114 = vmatprep.subr.mxu0 0.0
    %2115 = vmatpush1.msra.mxu0 0.0
    %2116 = vmatprep.subr.mxu0 0.0
    %2117 = vmatpush1.msra.mxu0 0.0
    %2118 = vmatprep.subr.mxu0 0.0
    %2119 = vmatpush1.msra.mxu0 0.0
    %2120 = vmatprep.subr.mxu0 0.0
    %2121 = vmatpush1.msra.mxu0 0.0
    %2122 = vmatprep.subr.mxu0 0.0
    %2123 = vmatpush1.msra.mxu0 0.0
    %2124 = vmatprep.subr.mxu0 0.0
    %2125 = vmatpush1.msra.mxu0 0.0
    %2126 = vmatprep.subr.mxu0 0.0
    %2127 = vmatpush1.msra.mxu0 0.0
    %2128 = vmatprep.subr.mxu0 0.0
    %2129 = vmatpush1.msra.mxu0 0.0
    %2130 = vmatprep.subr.mxu0 0.0
    %2131 = vmatpush1.msra.mxu0 0.0
    %2132 = vmatprep.subr.mxu0 0.0
    %2133 = vmatpush1.msra.mxu0 0.0
    %2134 = vmatprep.subr.mxu0 0.0
    %2135 = vmatpush1.msra.mxu0 0.0
    %2136 = vmatprep.subr.mxu0 0.0
    %2137 = vmatpush1.msra.mxu0 0.0
    %2138 = vmatprep.subr.mxu0 0.0
    %2139 = vmatpush1.msra.mxu0 0.0
    %2140 = vmatprep.subr.mxu0 0.0
    %2141 = vmatpush1.msra.mxu0 0.0
    %2142 = vmatprep.subr.mxu0 0.0
    %2143 = vmatpush1.msra.mxu0 0.0
    %2144 = vmatprep.mubr.f32.mxu0 0.0
    %2145 = vmatmul.mubr.f32.gmra.mrb[0].mxu0 %v2078
    %v2146 = vpop.f32.mrb[0].mxu0
    %v2147 = vadd.f32 %v1773, %v2146
    %v2148 = vpop.f32.mrb[0].mxu0
    %v2149 = vadd.f32 %v1777, %v2148
    %2150 = vdwg.mxu0
    %v2152 = vrot.slane %v2147, 2
    %v2154 = vadd.f32 %v1742, %v2152
    %v2155 = vxor.u32 %v2154, 2147483648
    %v2156 = vmul.f32 %v2155, 1.442695
    %v2157 = vpow.pop %v2156
    %v2158 = vadd.f32 %v2157, 1.0
    %v2159 = vrcp.pop %v2158
    %v2160 = vmul.f32 1.0, %v2159
    %v2162 = vrot.slane %v2149, 2
    %v2164 = vmul.f32 %v2160, %v2162
    %v2165 = vadd.f32 %v1744, %v2164
    %v2166 = vtanh.pop %v2165
    %v2167 = vsub.f32 1.0, %v2160
    %2169 = vrot.lane.b32.xlu0 %v2166, 64
    %v2170 = vpop.permute.xlu0 %2169
    %v2172 = vmul.f32 %v2167, %v2170
    %v2173 = vrot.slane %v2073, 6
    %v2175 = vmul.f32 %v2160, %v2173
    %v2176 = vadd.f32 %v2172, %v2175
    %v2178 = vrot.slane %v2176, 6
    %2179 = vrot.lane.b32.xlu0 %v2178, 64
    %v2180 = vpop.permute.xlu0 %2179
    %v2181 = vsel %vm551, %v2180, 0
    %2183 = vmatprep.subr.mxu0 %v1753
    %2184 = vmatpush1.msra.mxu0 %v1752
    %2185 = vmatprep.subr.mxu0 %v1755
    %2186 = vmatpush1.msra.mxu0 %v1754
    %2187 = vmatprep.subr.mxu0 %v1757
    %2188 = vmatpush1.msra.mxu0 %v1756
    %2189 = vmatprep.subr.mxu0 %v1759
    %2190 = vmatpush1.msra.mxu0 %v1758
    %2191 = vmatprep.subr.mxu0 %v1761
    %2192 = vmatpush1.msra.mxu0 %v1760
    %2193 = vmatprep.subr.mxu0 %v1763
    %2194 = vmatpush1.msra.mxu0 %v1762
    %2195 = vmatprep.subr.mxu0 %v1765
    %2196 = vmatpush1.msra.mxu0 %v1764
    %2197 = vmatprep.subr.mxu0 %v1767
    %2198 = vmatpush1.msra.mxu0 %v1766
    %2199 = vmatprep.subr.mxu0 0.0
    %2200 = vmatpush1.msra.mxu0 0.0
    %2201 = vmatprep.subr.mxu0 0.0
    %2202 = vmatpush1.msra.mxu0 0.0
    %2203 = vmatprep.subr.mxu0 0.0
    %2204 = vmatpush1.msra.mxu0 0.0
    %2205 = vmatprep.subr.mxu0 0.0
    %2206 = vmatpush1.msra.mxu0 0.0
    %2207 = vmatprep.subr.mxu0 0.0
    %2208 = vmatpush1.msra.mxu0 0.0
    %2209 = vmatprep.subr.mxu0 0.0
    %2210 = vmatpush1.msra.mxu0 0.0
    %2211 = vmatprep.subr.mxu0 0.0
    %2212 = vmatpush1.msra.mxu0 0.0
    %2213 = vmatprep.subr.mxu0 0.0
    %2214 = vmatpush1.msra.mxu0 0.0
    %2215 = vmatprep.subr.mxu0 0.0
    %2216 = vmatpush1.msra.mxu0 0.0
    %2217 = vmatprep.subr.mxu0 0.0
    %2218 = vmatpush1.msra.mxu0 0.0
    %2219 = vmatprep.subr.mxu0 0.0
    %2220 = vmatpush1.msra.mxu0 0.0
    %2221 = vmatprep.subr.mxu0 0.0
    %2222 = vmatpush1.msra.mxu0 0.0
    %2223 = vmatprep.subr.mxu0 0.0
    %2224 = vmatpush1.msra.mxu0 0.0
    %2225 = vmatprep.subr.mxu0 0.0
    %2226 = vmatpush1.msra.mxu0 0.0
    %2227 = vmatprep.subr.mxu0 0.0
    %2228 = vmatpush1.msra.mxu0 0.0
    %2229 = vmatprep.subr.mxu0 0.0
    %2230 = vmatpush1.msra.mxu0 0.0
    %2231 = vmatprep.subr.mxu0 0.0
    %2232 = vmatpush1.msra.mxu0 0.0
    %2233 = vmatprep.subr.mxu0 0.0
    %2234 = vmatpush1.msra.mxu0 0.0
    %2235 = vmatprep.subr.mxu0 0.0
    %2236 = vmatpush1.msra.mxu0 0.0
    %2237 = vmatprep.subr.mxu0 0.0
    %2238 = vmatpush1.msra.mxu0 0.0
    %2239 = vmatprep.subr.mxu0 0.0
    %2240 = vmatpush1.msra.mxu0 0.0
    %2241 = vmatprep.subr.mxu0 0.0
    %2242 = vmatpush1.msra.mxu0 0.0
    %2243 = vmatprep.subr.mxu0 0.0
    %2244 = vmatpush1.msra.mxu0 0.0
    %2245 = vmatprep.subr.mxu0 0.0
    %2246 = vmatpush1.msra.mxu0 0.0
    %2247 = vmatprep.mubr.f32.mxu0 0.0
    %2248 = vmatmul.mubr.f32.gmra.mrb[0].mxu0 %v2181
    %v2249 = vpop.f32.mrb[0].mxu0
    %v2250 = vadd.f32 %v1773, %v2249
    %v2251 = vpop.f32.mrb[0].mxu0
    %v2252 = vadd.f32 %v1777, %v2251
    %2253 = vdwg.mxu0
    %v2254 = vadd.f32 %v1748, %v2250
    %v2255 = vxor.u32 %v2254, 2147483648
    %v2256 = vmul.f32 %v2255, 1.442695
    %v2257 = vpow.pop %v2256
    %v2258 = vadd.f32 %v2257, 1.0
    %v2259 = vrcp.pop %v2258
    %v2260 = vmul.f32 1.0, %v2259
    %v2261 = vmul.f32 %v2260, %v2252
    %v2262 = vadd.f32 %v1750, %v2261
    %v2263 = vtanh.pop %v2262
    %v2264 = vsub.f32 1.0, %v2260
    %2266 = vrot.lane.b32.xlu0 %v2263, 64
    %v2267 = vpop.permute.xlu0 %2266
    %v2269 = vmul.f32 %v2264, %v2267
    %v2271 = vmul.f32 %v2260, %v2178
    %v2272 = vadd.f32 %v2269, %v2271
    %2274 = vrot.lane.b32.xlu0 %v2272, 64
    %v2275 = vpop.permute.xlu0 %2274
    %v2276 = vsel %vm551, %v2275, 0
    %2278 = vmatprep.subr.mxu0 %v1753
    %2279 = vmatpush1.msra.mxu0 %v1752
    %2280 = vmatprep.subr.mxu0 %v1755
    %2281 = vmatpush1.msra.mxu0 %v1754
    %2282 = vmatprep.subr.mxu0 %v1757
    %2283 = vmatpush1.msra.mxu0 %v1756
    %2284 = vmatprep.subr.mxu0 %v1759
    %2285 = vmatpush1.msra.mxu0 %v1758
    %2286 = vmatprep.subr.mxu0 %v1761
    %2287 = vmatpush1.msra.mxu0 %v1760
    %2288 = vmatprep.subr.mxu0 %v1763
    %2289 = vmatpush1.msra.mxu0 %v1762
    %2290 = vmatprep.subr.mxu0 %v1765
    %2291 = vmatpush1.msra.mxu0 %v1764
    %2292 = vmatprep.subr.mxu0 %v1767
    %2293 = vmatpush1.msra.mxu0 %v1766
    %2294 = vmatprep.subr.mxu0 0.0
    %2295 = vmatpush1.msra.mxu0 0.0
    %2296 = vmatprep.subr.mxu0 0.0
    %2297 = vmatpush1.msra.mxu0 0.0
    %2298 = vmatprep.subr.mxu0 0.0
    %2299 = vmatpush1.msra.mxu0 0.0
    %2300 = vmatprep.subr.mxu0 0.0
    %2301 = vmatpush1.msra.mxu0 0.0
    %2302 = vmatprep.subr.mxu0 0.0
    %2303 = vmatpush1.msra.mxu0 0.0
    %2304 = vmatprep.subr.mxu0 0.0
    %2305 = vmatpush1.msra.mxu0 0.0
    %2306 = vmatprep.subr.mxu0 0.0
    %2307 = vmatpush1.msra.mxu0 0.0
    %2308 = vmatprep.subr.mxu0 0.0
    %2309 = vmatpush1.msra.mxu0 0.0
    %2310 = vmatprep.subr.mxu0 0.0
    %2311 = vmatpush1.msra.mxu0 0.0
    %2312 = vmatprep.subr.mxu0 0.0
    %2313 = vmatpush1.msra.mxu0 0.0
    %2314 = vmatprep.subr.mxu0 0.0
    %2315 = vmatpush1.msra.mxu0 0.0
    %2316 = vmatprep.subr.mxu0 0.0
    %2317 = vmatpush1.msra.mxu0 0.0
    %2318 = vmatprep.subr.mxu0 0.0
    %2319 = vmatpush1.msra.mxu0 0.0
    %2320 = vmatprep.subr.mxu0 0.0
    %2321 = vmatpush1.msra.mxu0 0.0
    %2322 = vmatprep.subr.mxu0 0.0
    %2323 = vmatpush1.msra.mxu0 0.0
    %2324 = vmatprep.subr.mxu0 0.0
    %2325 = vmatpush1.msra.mxu0 0.0
    %2326 = vmatprep.subr.mxu0 0.0
    %2327 = vmatpush1.msra.mxu0 0.0
    %2328 = vmatprep.subr.mxu0 0.0
    %2329 = vmatpush1.msra.mxu0 0.0
    %2330 = vmatprep.subr.mxu0 0.0
    %2331 = vmatpush1.msra.mxu0 0.0
    %2332 = vmatprep.subr.mxu0 0.0
    %2333 = vmatpush1.msra.mxu0 0.0
    %2334 = vmatprep.subr.mxu0 0.0
    %2335 = vmatpush1.msra.mxu0 0.0
    %2336 = vmatprep.subr.mxu0 0.0
    %2337 = vmatpush1.msra.mxu0 0.0
    %2338 = vmatprep.subr.mxu0 0.0
    %2339 = vmatpush1.msra.mxu0 0.0
    %2340 = vmatprep.subr.mxu0 0.0
    %2341 = vmatpush1.msra.mxu0 0.0
    %2342 = vmatprep.mubr.f32.mxu0 0.0
    %2343 = vmatmul.mubr.f32.gmra.mrb[0].mxu0 %v2276
    %v2344 = vpop.f32.mrb[0].mxu0
    %v2345 = vadd.f32 %v1773, %v2344
    %v2346 = vpop.f32.mrb[0].mxu0
    %v2347 = vadd.f32 %v1777, %v2346
    %2348 = vdwg.mxu0
    %v2350 = vrot.slane %v2345, 6
    %v2352 = vadd.f32 %v1748, %v2350
    %v2353 = vxor.u32 %v2352, 2147483648
    %v2354 = vmul.f32 %v2353, 1.442695
    %v2355 = vpow.pop %v2354
    %v2356 = vadd.f32 %v2355, 1.0
    %v2357 = vrcp.pop %v2356
    %v2358 = vmul.f32 1.0, %v2357
    %v2360 = vrot.slane %v2347, 6
    %v2362 = vmul.f32 %v2358, %v2360
    %v2363 = vadd.f32 %v1750, %v2362
    %v2364 = vtanh.pop %v2363
    %v2365 = vsub.f32 1.0, %v2358
    %2367 = vrot.lane.b32.xlu0 %v2364, 64
    %v2368 = vpop.permute.xlu0 %2367
    %v2370 = vmul.f32 %v2365, %v2368
    %v2371 = vrot.slane %v2272, 6
    %v2373 = vmul.f32 %v2358, %v2371
    %v2374 = vadd.f32 %v2370, %v2373
    %v2376 = vrot.slane %v2374, 2
    %2377 = vrot.lane.b32.xlu0 %v2376, 64
    %v2378 = vpop.permute.xlu0 %2377
    %v2379 = vsel %vm551, %v2378, 0
    %2381 = vmatprep.subr.mxu0 %v1753
    %2382 = vmatpush1.msra.mxu0 %v1752
    %2383 = vmatprep.subr.mxu0 %v1755
    %2384 = vmatpush1.msra.mxu0 %v1754
    %2385 = vmatprep.subr.mxu0 %v1757
    %2386 = vmatpush1.msra.mxu0 %v1756
    %2387 = vmatprep.subr.mxu0 %v1759
    %2388 = vmatpush1.msra.mxu0 %v1758
    %2389 = vmatprep.subr.mxu0 %v1761
    %2390 = vmatpush1.msra.mxu0 %v1760
    %2391 = vmatprep.subr.mxu0 %v1763
    %2392 = vmatpush1.msra.mxu0 %v1762
    %2393 = vmatprep.subr.mxu0 %v1765
    %2394 = vmatpush1.msra.mxu0 %v1764
    %2395 = vmatprep.subr.mxu0 %v1767
    %2396 = vmatpush1.msra.mxu0 %v1766
    %2397 = vmatprep.subr.mxu0 0.0
    %2398 = vmatpush1.msra.mxu0 0.0
    %2399 = vmatprep.subr.mxu0 0.0
    %2400 = vmatpush1.msra.mxu0 0.0
    %2401 = vmatprep.subr.mxu0 0.0
    %2402 = vmatpush1.msra.mxu0 0.0
    %2403 = vmatprep.subr.mxu0 0.0
    %2404 = vmatpush1.msra.mxu0 0.0
    %2405 = vmatprep.subr.mxu0 0.0
    %2406 = vmatpush1.msra.mxu0 0.0
    %2407 = vmatprep.subr.mxu0 0.0
    %2408 = vmatpush1.msra.mxu0 0.0
    %2409 = vmatprep.subr.mxu0 0.0
    %2410 = vmatpush1.msra.mxu0 0.0
    %2411 = vmatprep.subr.mxu0 0.0
    %2412 = vmatpush1.msra.mxu0 0.0
    %2413 = vmatprep.subr.mxu0 0.0
    %2414 = vmatpush1.msra.mxu0 0.0
    %2415 = vmatprep.subr.mxu0 0.0
    %2416 = vmatpush1.msra.mxu0 0.0
    %2417 = vmatprep.subr.mxu0 0.0
    %2418 = vmatpush1.msra.mxu0 0.0
    %2419 = vmatprep.subr.mxu0 0.0
    %2420 = vmatpush1.msra.mxu0 0.0
    %2421 = vmatprep.subr.mxu0 0.0
    %2422 = vmatpush1.msra.mxu0 0.0
    %2423 = vmatprep.subr.mxu0 0.0
    %2424 = vmatpush1.msra.mxu0 0.0
    %2425 = vmatprep.subr.mxu0 0.0
    %2426 = vmatpush1.msra.mxu0 0.0
    %2427 = vmatprep.subr.mxu0 0.0
    %2428 = vmatpush1.msra.mxu0 0.0
    %2429 = vmatprep.subr.mxu0 0.0
    %2430 = vmatpush1.msra.mxu0 0.0
    %2431 = vmatprep.subr.mxu0 0.0
    %2432 = vmatpush1.msra.mxu0 0.0
    %2433 = vmatprep.subr.mxu0 0.0
    %2434 = vmatpush1.msra.mxu0 0.0
    %2435 = vmatprep.subr.mxu0 0.0
    %2436 = vmatpush1.msra.mxu0 0.0
    %2437 = vmatprep.subr.mxu0 0.0
    %2438 = vmatpush1.msra.mxu0 0.0
    %2439 = vmatprep.subr.mxu0 0.0
    %2440 = vmatpush1.msra.mxu0 0.0
    %2441 = vmatprep.subr.mxu0 0.0
    %2442 = vmatpush1.msra.mxu0 0.0
    %2443 = vmatprep.subr.mxu0 0.0
    %2444 = vmatpush1.msra.mxu0 0.0
    %2445 = vmatprep.mubr.f32.mxu0 0.0
    %2446 = vmatmul.mubr.f32.gmra.mrb[0].mxu0 %v2379
    %v2447 = vpop.f32.mrb[0].mxu0
    %v2448 = vadd.f32 %v1773, %v2447
    %v2449 = vpop.f32.mrb[0].mxu0
    %v2450 = vadd.f32 %v1777, %v2449
    %2451 = vdwg.mxu0
    %v2453 = vrot.slane %v2448, 4
    %v2455 = vadd.f32 %v1748, %v2453
    %v2456 = vxor.u32 %v2455, 2147483648
    %v2457 = vmul.f32 %v2456, 1.442695
    %v2458 = vpow.pop %v2457
    %v2459 = vadd.f32 %v2458, 1.0
    %v2460 = vrcp.pop %v2459
    %v2461 = vmul.f32 1.0, %v2460
    %v2463 = vrot.slane %v2450, 4
    %v2465 = vmul.f32 %v2461, %v2463
    %v2466 = vadd.f32 %v1750, %v2465
    %v2467 = vtanh.pop %v2466
    %v2468 = vsub.f32 1.0, %v2461
    %2470 = vrot.lane.b32.xlu0 %v2467, 64
    %v2471 = vpop.permute.xlu0 %2470
    %v2473 = vmul.f32 %v2468, %v2471
    %v2474 = vrot.slane %v2374, 6
    %v2476 = vmul.f32 %v2461, %v2474
    %v2477 = vadd.f32 %v2473, %v2476
    %v2479 = vrot.slane %v2477, 4
    %2480 = vrot.lane.b32.xlu0 %v2479, 64
    %v2481 = vpop.permute.xlu0 %2480
    %v2482 = vsel %vm551, %v2481, 0
    %2484 = vmatprep.subr.mxu0 %v1753
    %2485 = vmatpush1.msra.mxu0 %v1752
    %2486 = vmatprep.subr.mxu0 %v1755
    %2487 = vmatpush1.msra.mxu0 %v1754
    %2488 = vmatprep.subr.mxu0 %v1757
    %2489 = vmatpush1.msra.mxu0 %v1756
    %2490 = vmatprep.subr.mxu0 %v1759
    %2491 = vmatpush1.msra.mxu0 %v1758
    %2492 = vmatprep.subr.mxu0 %v1761
    %2493 = vmatpush1.msra.mxu0 %v1760
    %2494 = vmatprep.subr.mxu0 %v1763
    %2495 = vmatpush1.msra.mxu0 %v1762
    %2496 = vmatprep.subr.mxu0 %v1765
    %2497 = vmatpush1.msra.mxu0 %v1764
    %2498 = vmatprep.subr.mxu0 %v1767
    %2499 = vmatpush1.msra.mxu0 %v1766
    %2500 = vmatprep.subr.mxu0 0.0
    %2501 = vmatpush1.msra.mxu0 0.0
    %2502 = vmatprep.subr.mxu0 0.0
    %2503 = vmatpush1.msra.mxu0 0.0
    %2504 = vmatprep.subr.mxu0 0.0
    %2505 = vmatpush1.msra.mxu0 0.0
    %2506 = vmatprep.subr.mxu0 0.0
    %2507 = vmatpush1.msra.mxu0 0.0
    %2508 = vmatprep.subr.mxu0 0.0
    %2509 = vmatpush1.msra.mxu0 0.0
    %2510 = vmatprep.subr.mxu0 0.0
    %2511 = vmatpush1.msra.mxu0 0.0
    %2512 = vmatprep.subr.mxu0 0.0
    %2513 = vmatpush1.msra.mxu0 0.0
    %2514 = vmatprep.subr.mxu0 0.0
    %2515 = vmatpush1.msra.mxu0 0.0
    %2516 = vmatprep.subr.mxu0 0.0
    %2517 = vmatpush1.msra.mxu0 0.0
    %2518 = vmatprep.subr.mxu0 0.0
    %2519 = vmatpush1.msra.mxu0 0.0
    %2520 = vmatprep.subr.mxu0 0.0
    %2521 = vmatpush1.msra.mxu0 0.0
    %2522 = vmatprep.subr.mxu0 0.0
    %2523 = vmatpush1.msra.mxu0 0.0
    %2524 = vmatprep.subr.mxu0 0.0
    %2525 = vmatpush1.msra.mxu0 0.0
    %2526 = vmatprep.subr.mxu0 0.0
    %2527 = vmatpush1.msra.mxu0 0.0
    %2528 = vmatprep.subr.mxu0 0.0
    %2529 = vmatpush1.msra.mxu0 0.0
    %2530 = vmatprep.subr.mxu0 0.0
    %2531 = vmatpush1.msra.mxu0 0.0
    %2532 = vmatprep.subr.mxu0 0.0
    %2533 = vmatpush1.msra.mxu0 0.0
    %2534 = vmatprep.subr.mxu0 0.0
    %2535 = vmatpush1.msra.mxu0 0.0
    %2536 = vmatprep.subr.mxu0 0.0
    %2537 = vmatpush1.msra.mxu0 0.0
    %2538 = vmatprep.subr.mxu0 0.0
    %2539 = vmatpush1.msra.mxu0 0.0
    %2540 = vmatprep.subr.mxu0 0.0
    %2541 = vmatpush1.msra.mxu0 0.0
    %2542 = vmatprep.subr.mxu0 0.0
    %2543 = vmatpush1.msra.mxu0 0.0
    %2544 = vmatprep.subr.mxu0 0.0
    %2545 = vmatpush1.msra.mxu0 0.0
    %2546 = vmatprep.subr.mxu0 0.0
    %2547 = vmatpush1.msra.mxu0 0.0
    %2548 = vmatprep.mubr.f32.mxu0 0.0
    %2549 = vmatmul.mubr.f32.gmra.mrb[0].mxu0 %v2482
    %v2550 = vpop.f32.mrb[0].mxu0
    %v2551 = vadd.f32 %v1773, %v2550
    %v2552 = vpop.f32.mrb[0].mxu0
    %v2553 = vadd.f32 %v1777, %v2552
    %2554 = vdwg.mxu0
    %v2556 = vrot.slane %v2551, 2
    %v2558 = vadd.f32 %v1748, %v2556
    %v2559 = vxor.u32 %v2558, 2147483648
    %v2560 = vmul.f32 %v2559, 1.442695
    %v2561 = vpow.pop %v2560
    %v2562 = vadd.f32 %v2561, 1.0
    %v2563 = vrcp.pop %v2562
    %v2564 = vmul.f32 1.0, %v2563
    %v2566 = vrot.slane %v2553, 2
    %v2568 = vmul.f32 %v2564, %v2566
    %v2569 = vadd.f32 %v1750, %v2568
    %v2570 = vtanh.pop %v2569
    %v2571 = vsub.f32 1.0, %v2564
    %2573 = vrot.lane.b32.xlu0 %v2570, 64
    %v2574 = vpop.permute.xlu0 %2573
    %v2576 = vmul.f32 %v2571, %v2574
    %v2577 = vrot.slane %v2477, 6
    %v2579 = vmul.f32 %v2564, %v2577
    %v2580 = vadd.f32 %v2576, %v2579
    %v2581 = vld [vmem:[%s21] sm:$0xff]
    %v2582 = vld [vmem:[%s21 + $0x8] sm:$0xff]
    %v2583 = vld [vmem:[%s21 + $0x10] sm:$0xff]
    %v2584 = vld [vmem:[%s21 + $0x18] sm:$0xff]
    %v2585 = vld [vmem:[%s21 + $0x20] sm:$0xff]
    %v2586 = vld [vmem:[%s21 + $0x28] sm:$0xff]
    %v2587 = vld [vmem:[%s21 + $0x30] sm:$0xff]
    %v2588 = vld [vmem:[%s21 + $0x38] sm:$0xff]
    %v2589 = vld [vmem:[#allocation2] sm:$0x1]
    %v2591 = vlaneseq
    %v2592 = vshrl.u32 %v2591, 7
    %v2593 = vsub.s32 0, %v2592
    %v2594 = vrot.slane %v2589, %v2593
    %2596 = vmatprep.subr.mxu0 0.0
    %2597 = vmatpush1.msra.mxu0 %v2581
    %2598 = vmatprep.subr.mxu0 0.0
    %2599 = vmatpush1.msra.mxu0 %v2582
    %2600 = vmatprep.subr.mxu0 0.0
    %2601 = vmatpush1.msra.mxu0 %v2583
    %2602 = vmatprep.subr.mxu0 0.0
    %2603 = vmatpush1.msra.mxu0 %v2584
    %2604 = vmatprep.subr.mxu0 0.0
    %2605 = vmatpush1.msra.mxu0 %v2585
    %2606 = vmatprep.subr.mxu0 0.0
    %2607 = vmatpush1.msra.mxu0 %v2586
    %2608 = vmatprep.subr.mxu0 0.0
    %2609 = vmatpush1.msra.mxu0 %v2587
    %2610 = vmatprep.subr.mxu0 0.0
    %2611 = vmatpush1.msra.mxu0 %v2588
    %2612 = vmatprep.subr.mxu0 0.0
    %2613 = vmatpush1.msra.mxu0 0.0
    %2614 = vmatprep.subr.mxu0 0.0
    %2615 = vmatpush1.msra.mxu0 0.0
    %2616 = vmatprep.subr.mxu0 0.0
    %2617 = vmatpush1.msra.mxu0 0.0
    %2618 = vmatprep.subr.mxu0 0.0
    %2619 = vmatpush1.msra.mxu0 0.0
    %2620 = vmatprep.subr.mxu0 0.0
    %2621 = vmatpush1.msra.mxu0 0.0
    %2622 = vmatprep.subr.mxu0 0.0
    %2623 = vmatpush1.msra.mxu0 0.0
    %2624 = vmatprep.subr.mxu0 0.0
    %2625 = vmatpush1.msra.mxu0 0.0
    %2626 = vmatprep.subr.mxu0 0.0
    %2627 = vmatpush1.msra.mxu0 0.0
    %2628 = vmatprep.subr.mxu0 0.0
    %2629 = vmatpush1.msra.mxu0 0.0
    %2630 = vmatprep.subr.mxu0 0.0
    %2631 = vmatpush1.msra.mxu0 0.0
    %2632 = vmatprep.subr.mxu0 0.0
    %2633 = vmatpush1.msra.mxu0 0.0
    %2634 = vmatprep.subr.mxu0 0.0
    %2635 = vmatpush1.msra.mxu0 0.0
    %2636 = vmatprep.subr.mxu0 0.0
    %2637 = vmatpush1.msra.mxu0 0.0
    %2638 = vmatprep.subr.mxu0 0.0
    %2639 = vmatpush1.msra.mxu0 0.0
    %2640 = vmatprep.subr.mxu0 0.0
    %2641 = vmatpush1.msra.mxu0 0.0
    %2642 = vmatprep.subr.mxu0 0.0
    %2643 = vmatpush1.msra.mxu0 0.0
    %2644 = vmatprep.subr.mxu0 0.0
    %2645 = vmatpush1.msra.mxu0 0.0
    %2646 = vmatprep.subr.mxu0 0.0
    %2647 = vmatpush1.msra.mxu0 0.0
    %2648 = vmatprep.subr.mxu0 0.0
    %2649 = vmatpush1.msra.mxu0 0.0
    %2650 = vmatprep.subr.mxu0 0.0
    %2651 = vmatpush1.msra.mxu0 0.0
    %2652 = vmatprep.subr.mxu0 0.0
    %2653 = vmatpush1.msra.mxu0 0.0
    %2654 = vmatprep.subr.mxu0 0.0
    %2655 = vmatpush1.msra.mxu0 0.0
    %2656 = vmatprep.subr.mxu0 0.0
    %2657 = vmatpush1.msra.mxu0 0.0
    %2658 = vmatprep.subr.mxu0 0.0
    %2659 = vmatpush1.msra.mxu0 0.0
    %2660 = vmatprep.mubr.f32.mxu0 0.0
    %2661 = vmatmul.mubr.f32.gmra.mrb[0].mxu0 %v1872
    %v2662 = vpop.f32.mrb[0].mxu0
    %v2663 = vadd.f32 %v2594, %v2662
    %v2664 = vpop.f32.mrb[0].mxu0
    %2665 = vdwg.mxu0
    %2666 = vmatprep.subr.mxu0 0.0
    %2667 = vmatpush1.msra.mxu0 %v2581
    %2668 = vmatprep.subr.mxu0 0.0
    %2669 = vmatpush1.msra.mxu0 %v2582
    %2670 = vmatprep.subr.mxu0 0.0
    %2671 = vmatpush1.msra.mxu0 %v2583
    %2672 = vmatprep.subr.mxu0 0.0
    %2673 = vmatpush1.msra.mxu0 %v2584
    %2674 = vmatprep.subr.mxu0 0.0
    %2675 = vmatpush1.msra.mxu0 %v2585
    %2676 = vmatprep.subr.mxu0 0.0
    %2677 = vmatpush1.msra.mxu0 %v2586
    %2678 = vmatprep.subr.mxu0 0.0
    %2679 = vmatpush1.msra.mxu0 %v2587
    %2680 = vmatprep.subr.mxu0 0.0
    %2681 = vmatpush1.msra.mxu0 %v2588
    %2682 = vmatprep.subr.mxu0 0.0
    %2683 = vmatpush1.msra.mxu0 0.0
    %2684 = vmatprep.subr.mxu0 0.0
    %2685 = vmatpush1.msra.mxu0 0.0
    %2686 = vmatprep.subr.mxu0 0.0
    %2687 = vmatpush1.msra.mxu0 0.0
    %2688 = vmatprep.subr.mxu0 0.0
    %2689 = vmatpush1.msra.mxu0 0.0
    %2690 = vmatprep.subr.mxu0 0.0
    %2691 = vmatpush1.msra.mxu0 0.0
    %2692 = vmatprep.subr.mxu0 0.0
    %2693 = vmatpush1.msra.mxu0 0.0
    %2694 = vmatprep.subr.mxu0 0.0
    %2695 = vmatpush1.msra.mxu0 0.0
    %2696 = vmatprep.subr.mxu0 0.0
    %2697 = vmatpush1.msra.mxu0 0.0
    %2698 = vmatprep.subr.mxu0 0.0
    %2699 = vmatpush1.msra.mxu0 0.0
    %2700 = vmatprep.subr.mxu0 0.0
    %2701 = vmatpush1.msra.mxu0 0.0
    %2702 = vmatprep.subr.mxu0 0.0
    %2703 = vmatpush1.msra.mxu0 0.0
    %2704 = vmatprep.subr.mxu0 0.0
    %2705 = vmatpush1.msra.mxu0 0.0
    %2706 = vmatprep.subr.mxu0 0.0
    %2707 = vmatpush1.msra.mxu0 0.0
    %2708 = vmatprep.subr.mxu0 0.0
    %2709 = vmatpush1.msra.mxu0 0.0
    %2710 = vmatprep.subr.mxu0 0.0
    %2711 = vmatpush1.msra.mxu0 0.0
    %2712 = vmatprep.subr.mxu0 0.0
    %2713 = vmatpush1.msra.mxu0 0.0
    %2714 = vmatprep.subr.mxu0 0.0
    %2715 = vmatpush1.msra.mxu0 0.0
    %2716 = vmatprep.subr.mxu0 0.0
    %2717 = vmatpush1.msra.mxu0 0.0
    %2718 = vmatprep.subr.mxu0 0.0
    %2719 = vmatpush1.msra.mxu0 0.0
    %2720 = vmatprep.subr.mxu0 0.0
    %2721 = vmatpush1.msra.mxu0 0.0
    %2722 = vmatprep.subr.mxu0 0.0
    %2723 = vmatpush1.msra.mxu0 0.0
    %2724 = vmatprep.subr.mxu0 0.0
    %2725 = vmatpush1.msra.mxu0 0.0
    %2726 = vmatprep.subr.mxu0 0.0
    %2727 = vmatpush1.msra.mxu0 0.0
    %2728 = vmatprep.subr.mxu0 0.0
    %2729 = vmatpush1.msra.mxu0 0.0
    %2730 = vmatprep.mubr.f32.mxu0 0.0
    %2731 = vmatmul.mubr.f32.gmra.mrb[0].mxu0 %v1975
    %v2732 = vpop.f32.mrb[0].mxu0
    %v2733 = vadd.f32 %v2594, %v2732
    %v2734 = vpop.f32.mrb[0].mxu0
    %2735 = vdwg.mxu0
    %2736 = vmatprep.subr.mxu0 0.0
    %2737 = vmatpush1.msra.mxu0 %v2581
    %2738 = vmatprep.subr.mxu0 0.0
    %2739 = vmatpush1.msra.mxu0 %v2582
    %2740 = vmatprep.subr.mxu0 0.0
    %2741 = vmatpush1.msra.mxu0 %v2583
    %2742 = vmatprep.subr.mxu0 0.0
    %2743 = vmatpush1.msra.mxu0 %v2584
    %2744 = vmatprep.subr.mxu0 0.0
    %2745 = vmatpush1.msra.mxu0 %v2585
    %2746 = vmatprep.subr.mxu0 0.0
    %2747 = vmatpush1.msra.mxu0 %v2586
    %2748 = vmatprep.subr.mxu0 0.0
    %2749 = vmatpush1.msra.mxu0 %v2587
    %2750 = vmatprep.subr.mxu0 0.0
    %2751 = vmatpush1.msra.mxu0 %v2588
    %2752 = vmatprep.subr.mxu0 0.0
    %2753 = vmatpush1.msra.mxu0 0.0
    %2754 = vmatprep.subr.mxu0 0.0
    %2755 = vmatpush1.msra.mxu0 0.0
    %2756 = vmatprep.subr.mxu0 0.0
    %2757 = vmatpush1.msra.mxu0 0.0
    %2758 = vmatprep.subr.mxu0 0.0
    %2759 = vmatpush1.msra.mxu0 0.0
    %2760 = vmatprep.subr.mxu0 0.0
    %2761 = vmatpush1.msra.mxu0 0.0
    %2762 = vmatprep.subr.mxu0 0.0
    %2763 = vmatpush1.msra.mxu0 0.0
    %2764 = vmatprep.subr.mxu0 0.0
    %2765 = vmatpush1.msra.mxu0 0.0
    %2766 = vmatprep.subr.mxu0 0.0
    %2767 = vmatpush1.msra.mxu0 0.0
    %2768 = vmatprep.subr.mxu0 0.0
    %2769 = vmatpush1.msra.mxu0 0.0
    %2770 = vmatprep.subr.mxu0 0.0
    %2771 = vmatpush1.msra.mxu0 0.0
    %2772 = vmatprep.subr.mxu0 0.0
    %2773 = vmatpush1.msra.mxu0 0.0
    %2774 = vmatprep.subr.mxu0 0.0
    %2775 = vmatpush1.msra.mxu0 0.0
    %2776 = vmatprep.subr.mxu0 0.0
    %2777 = vmatpush1.msra.mxu0 0.0
    %2778 = vmatprep.subr.mxu0 0.0
    %2779 = vmatpush1.msra.mxu0 0.0
    %2780 = vmatprep.subr.mxu0 0.0
    %2781 = vmatpush1.msra.mxu0 0.0
    %2782 = vmatprep.subr.mxu0 0.0
    %2783 = vmatpush1.msra.mxu0 0.0
    %2784 = vmatprep.subr.mxu0 0.0
    %2785 = vmatpush1.msra.mxu0 0.0
    %2786 = vmatprep.subr.mxu0 0.0
    %2787 = vmatpush1.msra.mxu0 0.0
    %2788 = vmatprep.subr.mxu0 0.0
    %2789 = vmatpush1.msra.mxu0 0.0
    %2790 = vmatprep.subr.mxu0 0.0
    %2791 = vmatpush1.msra.mxu0 0.0
    %2792 = vmatprep.subr.mxu0 0.0
    %2793 = vmatpush1.msra.mxu0 0.0
    %2794 = vmatprep.subr.mxu0 0.0
    %2795 = vmatpush1.msra.mxu0 0.0
    %2796 = vmatprep.subr.mxu0 0.0
    %2797 = vmatpush1.msra.mxu0 0.0
    %2798 = vmatprep.subr.mxu0 0.0
    %2799 = vmatpush1.msra.mxu0 0.0
    %2800 = vmatprep.mubr.f32.mxu0 0.0
    %2801 = vmatmul.mubr.f32.gmra.mrb[0].mxu0 %v2078
    %v2802 = vpop.f32.mrb[0].mxu0
    %v2803 = vadd.f32 %v2594, %v2802
    %v2804 = vpop.f32.mrb[0].mxu0
    %2805 = vdwg.mxu0
    %2806 = vmatprep.subr.mxu0 0.0
    %2807 = vmatpush1.msra.mxu0 %v2581
    %2808 = vmatprep.subr.mxu0 0.0
    %2809 = vmatpush1.msra.mxu0 %v2582
    %2810 = vmatprep.subr.mxu0 0.0
    %2811 = vmatpush1.msra.mxu0 %v2583
    %2812 = vmatprep.subr.mxu0 0.0
    %2813 = vmatpush1.msra.mxu0 %v2584
    %2814 = vmatprep.subr.mxu0 0.0
    %2815 = vmatpush1.msra.mxu0 %v2585
    %2816 = vmatprep.subr.mxu0 0.0
    %2817 = vmatpush1.msra.mxu0 %v2586
    %2818 = vmatprep.subr.mxu0 0.0
    %2819 = vmatpush1.msra.mxu0 %v2587
    %2820 = vmatprep.subr.mxu0 0.0
    %2821 = vmatpush1.msra.mxu0 %v2588
    %2822 = vmatprep.subr.mxu0 0.0
    %2823 = vmatpush1.msra.mxu0 0.0
    %2824 = vmatprep.subr.mxu0 0.0
    %2825 = vmatpush1.msra.mxu0 0.0
    %2826 = vmatprep.subr.mxu0 0.0
    %2827 = vmatpush1.msra.mxu0 0.0
    %2828 = vmatprep.subr.mxu0 0.0
    %2829 = vmatpush1.msra.mxu0 0.0
    %2830 = vmatprep.subr.mxu0 0.0
    %2831 = vmatpush1.msra.mxu0 0.0
    %2832 = vmatprep.subr.mxu0 0.0
    %2833 = vmatpush1.msra.mxu0 0.0
    %2834 = vmatprep.subr.mxu0 0.0
    %2835 = vmatpush1.msra.mxu0 0.0
    %2836 = vmatprep.subr.mxu0 0.0
    %2837 = vmatpush1.msra.mxu0 0.0
    %2838 = vmatprep.subr.mxu0 0.0
    %2839 = vmatpush1.msra.mxu0 0.0
    %2840 = vmatprep.subr.mxu0 0.0
    %2841 = vmatpush1.msra.mxu0 0.0
    %2842 = vmatprep.subr.mxu0 0.0
    %2843 = vmatpush1.msra.mxu0 0.0
    %2844 = vmatprep.subr.mxu0 0.0
    %2845 = vmatpush1.msra.mxu0 0.0
    %2846 = vmatprep.subr.mxu0 0.0
    %2847 = vmatpush1.msra.mxu0 0.0
    %2848 = vmatprep.subr.mxu0 0.0
    %2849 = vmatpush1.msra.mxu0 0.0
    %2850 = vmatprep.subr.mxu0 0.0
    %2851 = vmatpush1.msra.mxu0 0.0
    %2852 = vmatprep.subr.mxu0 0.0
    %2853 = vmatpush1.msra.mxu0 0.0
    %2854 = vmatprep.subr.mxu0 0.0
    %2855 = vmatpush1.msra.mxu0 0.0
    %2856 = vmatprep.subr.mxu0 0.0
    %2857 = vmatpush1.msra.mxu0 0.0
    %2858 = vmatprep.subr.mxu0 0.0
    %2859 = vmatpush1.msra.mxu0 0.0
    %2860 = vmatprep.subr.mxu0 0.0
    %2861 = vmatpush1.msra.mxu0 0.0
    %2862 = vmatprep.subr.mxu0 0.0
    %2863 = vmatpush1.msra.mxu0 0.0
    %2864 = vmatprep.subr.mxu0 0.0
    %2865 = vmatpush1.msra.mxu0 0.0
    %2866 = vmatprep.subr.mxu0 0.0
    %2867 = vmatpush1.msra.mxu0 0.0
    %2868 = vmatprep.subr.mxu0 0.0
    %2869 = vmatpush1.msra.mxu0 0.0
    %2870 = vmatprep.mubr.f32.mxu0 0.0
    %2871 = vmatmul.mubr.f32.gmra.mrb[0].mxu0 %v2181
    %v2872 = vpop.f32.mrb[0].mxu0
    %v2873 = vadd.f32 %v2594, %v2872
    %v2874 = vpop.f32.mrb[0].mxu0
    %2875 = vdwg.mxu0
    %2876 = vmatprep.subr.mxu0 0.0
    %2877 = vmatpush1.msra.mxu0 %v2581
    %2878 = vmatprep.subr.mxu0 0.0
    %2879 = vmatpush1.msra.mxu0 %v2582
    %2880 = vmatprep.subr.mxu0 0.0
    %2881 = vmatpush1.msra.mxu0 %v2583
    %2882 = vmatprep.subr.mxu0 0.0
    %2883 = vmatpush1.msra.mxu0 %v2584
    %2884 = vmatprep.subr.mxu0 0.0
    %2885 = vmatpush1.msra.mxu0 %v2585
    %2886 = vmatprep.subr.mxu0 0.0
    %2887 = vmatpush1.msra.mxu0 %v2586
    %2888 = vmatprep.subr.mxu0 0.0
    %2889 = vmatpush1.msra.mxu0 %v2587
    %2890 = vmatprep.subr.mxu0 0.0
    %2891 = vmatpush1.msra.mxu0 %v2588
    %2892 = vmatprep.subr.mxu0 0.0
    %2893 = vmatpush1.msra.mxu0 0.0
    %2894 = vmatprep.subr.mxu0 0.0
    %2895 = vmatpush1.msra.mxu0 0.0
    %2896 = vmatprep.subr.mxu0 0.0
    %2897 = vmatpush1.msra.mxu0 0.0
    %2898 = vmatprep.subr.mxu0 0.0
    %2899 = vmatpush1.msra.mxu0 0.0
    %2900 = vmatprep.subr.mxu0 0.0
    %2901 = vmatpush1.msra.mxu0 0.0
    %2902 = vmatprep.subr.mxu0 0.0
    %2903 = vmatpush1.msra.mxu0 0.0
    %2904 = vmatprep.subr.mxu0 0.0
    %2905 = vmatpush1.msra.mxu0 0.0
    %2906 = vmatprep.subr.mxu0 0.0
    %2907 = vmatpush1.msra.mxu0 0.0
    %2908 = vmatprep.subr.mxu0 0.0
    %2909 = vmatpush1.msra.mxu0 0.0
    %2910 = vmatprep.subr.mxu0 0.0
    %2911 = vmatpush1.msra.mxu0 0.0
    %2912 = vmatprep.subr.mxu0 0.0
    %2913 = vmatpush1.msra.mxu0 0.0
    %2914 = vmatprep.subr.mxu0 0.0
    %2915 = vmatpush1.msra.mxu0 0.0
    %2916 = vmatprep.subr.mxu0 0.0
    %2917 = vmatpush1.msra.mxu0 0.0
    %2918 = vmatprep.subr.mxu0 0.0
    %2919 = vmatpush1.msra.mxu0 0.0
    %2920 = vmatprep.subr.mxu0 0.0
    %2921 = vmatpush1.msra.mxu0 0.0
    %2922 = vmatprep.subr.mxu0 0.0
    %2923 = vmatpush1.msra.mxu0 0.0
    %2924 = vmatprep.subr.mxu0 0.0
    %2925 = vmatpush1.msra.mxu0 0.0
    %2926 = vmatprep.subr.mxu0 0.0
    %2927 = vmatpush1.msra.mxu0 0.0
    %2928 = vmatprep.subr.mxu0 0.0
    %2929 = vmatpush1.msra.mxu0 0.0
    %2930 = vmatprep.subr.mxu0 0.0
    %2931 = vmatpush1.msra.mxu0 0.0
    %2932 = vmatprep.subr.mxu0 0.0
    %2933 = vmatpush1.msra.mxu0 0.0
    %2934 = vmatprep.subr.mxu0 0.0
    %2935 = vmatpush1.msra.mxu0 0.0
    %2936 = vmatprep.subr.mxu0 0.0
    %2937 = vmatpush1.msra.mxu0 0.0
    %2938 = vmatprep.subr.mxu0 0.0
    %2939 = vmatpush1.msra.mxu0 0.0
    %2940 = vmatprep.mubr.f32.mxu0 0.0
    %2941 = vmatmul.mubr.f32.gmra.mrb[0].mxu0 %v2276
    %v2942 = vpop.f32.mrb[0].mxu0
    %v2943 = vadd.f32 %v2594, %v2942
    %v2944 = vpop.f32.mrb[0].mxu0
    %2945 = vdwg.mxu0
    %2946 = vmatprep.subr.mxu0 0.0
    %2947 = vmatpush1.msra.mxu0 %v2581
    %2948 = vmatprep.subr.mxu0 0.0
    %2949 = vmatpush1.msra.mxu0 %v2582
    %2950 = vmatprep.subr.mxu0 0.0
    %2951 = vmatpush1.msra.mxu0 %v2583
    %2952 = vmatprep.subr.mxu0 0.0
    %2953 = vmatpush1.msra.mxu0 %v2584
    %2954 = vmatprep.subr.mxu0 0.0
    %2955 = vmatpush1.msra.mxu0 %v2585
    %2956 = vmatprep.subr.mxu0 0.0
    %2957 = vmatpush1.msra.mxu0 %v2586
    %2958 = vmatprep.subr.mxu0 0.0
    %2959 = vmatpush1.msra.mxu0 %v2587
    %2960 = vmatprep.subr.mxu0 0.0
    %2961 = vmatpush1.msra.mxu0 %v2588
    %2962 = vmatprep.subr.mxu0 0.0
    %2963 = vmatpush1.msra.mxu0 0.0
    %2964 = vmatprep.subr.mxu0 0.0
    %2965 = vmatpush1.msra.mxu0 0.0
    %2966 = vmatprep.subr.mxu0 0.0
    %2967 = vmatpush1.msra.mxu0 0.0
    %2968 = vmatprep.subr.mxu0 0.0
    %2969 = vmatpush1.msra.mxu0 0.0
    %2970 = vmatprep.subr.mxu0 0.0
    %2971 = vmatpush1.msra.mxu0 0.0
    %2972 = vmatprep.subr.mxu0 0.0
    %2973 = vmatpush1.msra.mxu0 0.0
    %2974 = vmatprep.subr.mxu0 0.0
    %2975 = vmatpush1.msra.mxu0 0.0
    %2976 = vmatprep.subr.mxu0 0.0
    %2977 = vmatpush1.msra.mxu0 0.0
    %2978 = vmatprep.subr.mxu0 0.0
    %2979 = vmatpush1.msra.mxu0 0.0
    %2980 = vmatprep.subr.mxu0 0.0
    %2981 = vmatpush1.msra.mxu0 0.0
    %2982 = vmatprep.subr.mxu0 0.0
    %2983 = vmatpush1.msra.mxu0 0.0
    %2984 = vmatprep.subr.mxu0 0.0
    %2985 = vmatpush1.msra.mxu0 0.0
    %2986 = vmatprep.subr.mxu0 0.0
    %2987 = vmatpush1.msra.mxu0 0.0
    %2988 = vmatprep.subr.mxu0 0.0
    %2989 = vmatpush1.msra.mxu0 0.0
    %2990 = vmatprep.subr.mxu0 0.0
    %2991 = vmatpush1.msra.mxu0 0.0
    %2992 = vmatprep.subr.mxu0 0.0
    %2993 = vmatpush1.msra.mxu0 0.0
    %2994 = vmatprep.subr.mxu0 0.0
    %2995 = vmatpush1.msra.mxu0 0.0
    %2996 = vmatprep.subr.mxu0 0.0
    %2997 = vmatpush1.msra.mxu0 0.0
    %2998 = vmatprep.subr.mxu0 0.0
    %2999 = vmatpush1.msra.mxu0 0.0
    %3000 = vmatprep.subr.mxu0 0.0
    %3001 = vmatpush1.msra.mxu0 0.0
    %3002 = vmatprep.subr.mxu0 0.0
    %3003 = vmatpush1.msra.mxu0 0.0
    %3004 = vmatprep.subr.mxu0 0.0
    %3005 = vmatpush1.msra.mxu0 0.0
    %3006 = vmatprep.subr.mxu0 0.0
    %3007 = vmatpush1.msra.mxu0 0.0
    %3008 = vmatprep.subr.mxu0 0.0
    %3009 = vmatpush1.msra.mxu0 0.0
    %3010 = vmatprep.mubr.f32.mxu0 0.0
    %3011 = vmatmul.mubr.f32.gmra.mrb[0].mxu0 %v2379
    %v3012 = vpop.f32.mrb[0].mxu0
    %v3013 = vadd.f32 %v2594, %v3012
    %v3014 = vpop.f32.mrb[0].mxu0
    %3015 = vdwg.mxu0
    %3016 = vmatprep.subr.mxu0 0.0
    %3017 = vmatpush1.msra.mxu0 %v2581
    %3018 = vmatprep.subr.mxu0 0.0
    %3019 = vmatpush1.msra.mxu0 %v2582
    %3020 = vmatprep.subr.mxu0 0.0
    %3021 = vmatpush1.msra.mxu0 %v2583
    %3022 = vmatprep.subr.mxu0 0.0
    %3023 = vmatpush1.msra.mxu0 %v2584
    %3024 = vmatprep.subr.mxu0 0.0
    %3025 = vmatpush1.msra.mxu0 %v2585
    %3026 = vmatprep.subr.mxu0 0.0
    %3027 = vmatpush1.msra.mxu0 %v2586
    %3028 = vmatprep.subr.mxu0 0.0
    %3029 = vmatpush1.msra.mxu0 %v2587
    %3030 = vmatprep.subr.mxu0 0.0
    %3031 = vmatpush1.msra.mxu0 %v2588
    %3032 = vmatprep.subr.mxu0 0.0
    %3033 = vmatpush1.msra.mxu0 0.0
    %3034 = vmatprep.subr.mxu0 0.0
    %3035 = vmatpush1.msra.mxu0 0.0
    %3036 = vmatprep.subr.mxu0 0.0
    %3037 = vmatpush1.msra.mxu0 0.0
    %3038 = vmatprep.subr.mxu0 0.0
    %3039 = vmatpush1.msra.mxu0 0.0
    %3040 = vmatprep.subr.mxu0 0.0
    %3041 = vmatpush1.msra.mxu0 0.0
    %3042 = vmatprep.subr.mxu0 0.0
    %3043 = vmatpush1.msra.mxu0 0.0
    %3044 = vmatprep.subr.mxu0 0.0
    %3045 = vmatpush1.msra.mxu0 0.0
    %3046 = vmatprep.subr.mxu0 0.0
    %3047 = vmatpush1.msra.mxu0 0.0
    %3048 = vmatprep.subr.mxu0 0.0
    %3049 = vmatpush1.msra.mxu0 0.0
    %3050 = vmatprep.subr.mxu0 0.0
    %3051 = vmatpush1.msra.mxu0 0.0
    %3052 = vmatprep.subr.mxu0 0.0
    %3053 = vmatpush1.msra.mxu0 0.0
    %3054 = vmatprep.subr.mxu0 0.0
    %3055 = vmatpush1.msra.mxu0 0.0
    %3056 = vmatprep.subr.mxu0 0.0
    %3057 = vmatpush1.msra.mxu0 0.0
    %3058 = vmatprep.subr.mxu0 0.0
    %3059 = vmatpush1.msra.mxu0 0.0
    %3060 = vmatprep.subr.mxu0 0.0
    %3061 = vmatpush1.msra.mxu0 0.0
    %3062 = vmatprep.subr.mxu0 0.0
    %3063 = vmatpush1.msra.mxu0 0.0
    %3064 = vmatprep.subr.mxu0 0.0
    %3065 = vmatpush1.msra.mxu0 0.0
    %3066 = vmatprep.subr.mxu0 0.0
    %3067 = vmatpush1.msra.mxu0 0.0
    %3068 = vmatprep.subr.mxu0 0.0
    %3069 = vmatpush1.msra.mxu0 0.0
    %3070 = vmatprep.subr.mxu0 0.0
    %3071 = vmatpush1.msra.mxu0 0.0
    %3072 = vmatprep.subr.mxu0 0.0
    %3073 = vmatpush1.msra.mxu0 0.0
    %3074 = vmatprep.subr.mxu0 0.0
    %3075 = vmatpush1.msra.mxu0 0.0
    %3076 = vmatprep.subr.mxu0 0.0
    %3077 = vmatpush1.msra.mxu0 0.0
    %3078 = vmatprep.subr.mxu0 0.0
    %3079 = vmatpush1.msra.mxu0 0.0
    %3080 = vmatprep.mubr.f32.mxu0 0.0
    %3081 = vmatmul.mubr.f32.gmra.mrb[0].mxu0 %v2482
    %v3082 = vpop.f32.mrb[0].mxu0
    %v3083 = vadd.f32 %v2594, %v3082
    %v3084 = vpop.f32.mrb[0].mxu0
    %3085 = vdwg.mxu0
    %v3087 = vrot.slane %v2580, 6
    %3088 = vrot.lane.b32.xlu0 %v3087, 64
    %v3089 = vpop.permute.xlu0 %3088
    %v3090 = vsel %vm551, %v3089, 0
    %3092 = vmatprep.subr.mxu0 0.0
    %3093 = vmatpush1.msra.mxu0 %v2581
    %3094 = vmatprep.subr.mxu0 0.0
    %3095 = vmatpush1.msra.mxu0 %v2582
    %3096 = vmatprep.subr.mxu0 0.0
    %3097 = vmatpush1.msra.mxu0 %v2583
    %3098 = vmatprep.subr.mxu0 0.0
    %3099 = vmatpush1.msra.mxu0 %v2584
    %3100 = vmatprep.subr.mxu0 0.0
    %3101 = vmatpush1.msra.mxu0 %v2585
    %3102 = vmatprep.subr.mxu0 0.0
    %3103 = vmatpush1.msra.mxu0 %v2586
    %3104 = vmatprep.subr.mxu0 0.0
    %3105 = vmatpush1.msra.mxu0 %v2587
    %3106 = vmatprep.subr.mxu0 0.0
    %3107 = vmatpush1.msra.mxu0 %v2588
    %3108 = vmatprep.subr.mxu0 0.0
    %3109 = vmatpush1.msra.mxu0 0.0
    %3110 = vmatprep.subr.mxu0 0.0
    %3111 = vmatpush1.msra.mxu0 0.0
    %3112 = vmatprep.subr.mxu0 0.0
    %3113 = vmatpush1.msra.mxu0 0.0
    %3114 = vmatprep.subr.mxu0 0.0
    %3115 = vmatpush1.msra.mxu0 0.0
    %3116 = vmatprep.subr.mxu0 0.0
    %3117 = vmatpush1.msra.mxu0 0.0
    %3118 = vmatprep.subr.mxu0 0.0
    %3119 = vmatpush1.msra.mxu0 0.0
    %3120 = vmatprep.subr.mxu0 0.0
    %3121 = vmatpush1.msra.mxu0 0.0
    %3122 = vmatprep.subr.mxu0 0.0
    %3123 = vmatpush1.msra.mxu0 0.0
    %3124 = vmatprep.subr.mxu0 0.0
    %3125 = vmatpush1.msra.mxu0 0.0
    %3126 = vmatprep.subr.mxu0 0.0
    %3127 = vmatpush1.msra.mxu0 0.0
    %3128 = vmatprep.subr.mxu0 0.0
    %3129 = vmatpush1.msra.mxu0 0.0
    %3130 = vmatprep.subr.mxu0 0.0
    %3131 = vmatpush1.msra.mxu0 0.0
    %3132 = vmatprep.subr.mxu0 0.0
    %3133 = vmatpush1.msra.mxu0 0.0
    %3134 = vmatprep.subr.mxu0 0.0
    %3135 = vmatpush1.msra.mxu0 0.0
    %3136 = vmatprep.subr.mxu0 0.0
    %3137 = vmatpush1.msra.mxu0 0.0
    %3138 = vmatprep.subr.mxu0 0.0
    %3139 = vmatpush1.msra.mxu0 0.0
    %3140 = vmatprep.subr.mxu0 0.0
    %3141 = vmatpush1.msra.mxu0 0.0
    %3142 = vmatprep.subr.mxu0 0.0
    %3143 = vmatpush1.msra.mxu0 0.0
    %3144 = vmatprep.subr.mxu0 0.0
    %3145 = vmatpush1.msra.mxu0 0.0
    %3146 = vmatprep.subr.mxu0 0.0
    %3147 = vmatpush1.msra.mxu0 0.0
    %3148 = vmatprep.subr.mxu0 0.0
    %3149 = vmatpush1.msra.mxu0 0.0
    %3150 = vmatprep.subr.mxu0 0.0
    %3151 = vmatpush1.msra.mxu0 0.0
    %3152 = vmatprep.subr.mxu0 0.0
    %3153 = vmatpush1.msra.mxu0 0.0
    %3154 = vmatprep.subr.mxu0 0.0
    %3155 = vmatpush1.msra.mxu0 0.0
    %3156 = vmatprep.mubr.f32.mxu0 0.0
    %3157 = vmatmul.mubr.f32.gmra.mrb[0].mxu0 %v3090
    %v3158 = vpop.f32.mrb[0].mxu0
    %v3159 = vadd.f32 %v2594, %v3158
    %v3160 = vpop.f32.mrb[0].mxu0
    %3161 = vdwg.mxu0
    %3163 = vrot.lane.b32.xlu0 %v2733, 1
    %v3164 = vpop.permute.xlu0 %3163
    %3167 = vrot.lane.b32.xlu0 %v2803, 2
    %v3168 = vpop.permute.xlu0 %3167
    %3171 = vrot.lane.b32.xlu0 %v2873, 3
    %v3172 = vpop.permute.xlu0 %3171
    %3175 = vrot.lane.b32.xlu0 %v2943, 4
    %v3176 = vpop.permute.xlu0 %3175
    %3179 = vrot.lane.b32.xlu0 %v3013, 5
    %v3180 = vpop.permute.xlu0 %3179
    %3183 = vrot.lane.b32.xlu0 %v3083, 6
    %v3184 = vpop.permute.xlu0 %3183
    %3187 = vrot.lane.b32.xlu0 %v3159, 7
    %v3188 = vpop.permute.xlu0 %3187
    %vm3190 = vcmask 7168
    %v3191 = vsel %vm3190, %v2663, %v3164
    %v3192 = vsel %vm319, %v3191, %v3168
    %vm3193 = vcmask 23552
    %v3194 = vsel %vm3193, %v3192, %v3172
    %vm3195 = vcmask 31744
    %v3196 = vsel %vm3195, %v3194, %v3176
    %vm3197 = vcmask 39936
    %v3198 = vsel %vm3197, %v3196, %v3180
    %vm3199 = vcmask 48128
    %v3200 = vsel %vm3199, %v3198, %v3184
    %vm3201 = vcmask 56320
    %v3202 = vsel %vm3201, %v3200, %v3188
    %vm3203 = vcmask 58368
    %3204 = vst.msk [vmem:[#allocation20] sm:$0x3] %vm3203, %v3202
    // Predicated region
    $region134: #{tpu_custom_call.1} parent=1 // pred_check
      _
    $region135: #{tpu_custom_call.1} parent=1 // pred_check_branch
      %3206 = sbr.rel (0) target = $region137
    $region136: #{tpu_custom_call.1} parent=1 // pred_region
      %s3208 = ssub.s32 32, 32
      %3209 = vsyncadd [#allocation5], %s3208
      %s3211 = sshll.u32 [#allocation20], 4
      %s3212 = int_to_ptr.vmem [resolvable:$true] %s3211
      %3214 = dma.vmem_to_hbm [thread:$0]  %s3212, 32, %s23, [#allocation5]
    $region137: #{tpu_custom_call.1} parent=1 // pred_fallthru
      _
    // Predicated region
    $region138: #{tpu_custom_call.1} parent=1 // pred_check
      _
    $region139: #{tpu_custom_call.1} parent=1 // pred_check_branch
      %3216 = sbr.rel (0) target = $region141
    $region140: #{tpu_custom_call.1} parent=1 // pred_region
      %3217 = dma.done [#allocation5], 32
    $region141: #{tpu_custom_call.1} parent=1 // pred_fallthru
      _
    %3218 = vsyncpa [#allocation4], 1
    %3219 = vsyncpa [#allocation7], 1
    %3220 = vsyncpa [#allocation10], 1
    %3221 = vsyncpa [#allocation13], 1
    %3222 = vsyncpa [#allocation16], 1
    %3223 = vsyncpa [#allocation19], 1
    %3224 = vsyncpa [#allocation5], 1

</llo_original>
